<compile_context>
chip_gen: v7x
topology: tpu7x:2x2x1
jax: 0.10.0
libtpu: 0.0.40
codegen_flags: <defaults>
</compile_context>

<pallas_src>
import functools

import jax
import jax.numpy as jnp
from jax.experimental import pallas as pl
from jax.experimental.pallas import tpu as pltpu


# --------------------------------- small helpers ----------------------------------
def _round_up(x, m):
    return (x + m - 1) // m * m


@functools.lru_cache(maxsize=None)
def _vmem_limit_bytes():
    """Per-generation VMEM budget with headroom (128 MiB v5e/v6e, 64 MiB v7x)."""
    try:
        cap = getattr(pltpu.get_tpu_info(), "vmem_capacity_bytes", None)
        if cap:
            return int(min(int(cap) * 3 // 4, 96 * 1024 * 1024))
    except Exception:
        pass
    return 32 * 1024 * 1024


def _pick_time_block(t):
    for tb in (32, 16, 8, 4, 2, 1):
        if t % tb == 0:
            return tb
    return 1


def _row_tile(n, target=512):
    if n <= target:
        return n
    for t in range(target, 7, -8):
        if n % t == 0:
            return t
    return n


def _sigmoid_eup(x):
    # sigmoid via exp + approximate reciprocal: both land on the EUP slot.
    return pl.reciprocal(1.0 + jnp.exp(-x), approx=True)


# ---------------------- fused bidirectional LSTM layer kernel ----------------------
def _make_bilstm_kernel(hidden, tb, batch, nparts):
    h_sz = hidden

    def kernel(*refs):
        nx = 2 * nparts
        x_refs = refs[:nx]                        # [part0_fwd, part0_bwd, part1_fwd, ...]
        wih_ref, whh_ref, bias_ref = refs[nx:nx + 3]
        out_refs = refs[nx + 3:nx + 5]            # (fwd, bwd), each (tb*B, H) block
        h_ref, c_ref, pg_ref = refs[nx + 5:nx + 8]

        # Both directions' carried state starts at zero at grid step 0 (forward begins
        # at time block 0, backward at block nb-1, both processed at c == 0).
        @pl.when(pl.program_id(0) == 0)
        def _():
            h_ref[...] = jnp.zeros_like(h_ref)
            c_ref[...] = jnp.zeros_like(c_ref)

        for d in range(2):                        # direction: static Python loop
            # ---- hoisted input projection for this time block (one matmul per part) ----
            pg = None
            for p in range(nparts):
                contrib = jnp.dot(x_refs[2 * p + d][...], wih_ref[d, p, :, :],
                                  preferred_element_type=jnp.float32)
                pg = contrib if pg is None else pg + contrib
            pg_ref[...] = pg + bias_ref[d, :, :]              # (tb*B, 4H), bias folded

            # ---- recurrence over the block; backward walks local time in reverse ----
            for j in range(tb):
                t = j if d == 0 else tb - 1 - j               # static index
                rows = slice(t * batch, (t + 1) * batch)
                gates = pg_ref[rows, :] + jnp.dot(
                    h_ref[d, :, :], whh_ref[d, :, :],
                    preferred_element_type=jnp.float32)       # (B, 4H)
                # gate columns packed (i, f, o, g): one sigmoid slice + one tanh slice
                sig = _sigmoid_eup(gates[:, :3 * h_sz])
                gi = sig[:, 0 * h_sz:1 * h_sz]
                gf = sig[:, 1 * h_sz:2 * h_sz]
                go = sig[:, 2 * h_sz:3 * h_sz]
                gg = jnp.tanh(gates[:, 3 * h_sz:])
                c_new = gf * c_ref[d, :, :] + gi * gg
                h_new = go * jnp.tanh(c_new)
                c_ref[d, :, :] = c_new
                h_ref[d, :, :] = h_new
                out_refs[d][rows, :] = h_new.astype(out_refs[d].dtype)

    return kernel


def bilstm_layer(parts, wih_t, whh_t, bias, *, seq_len, batch, tb):
    """One bidirectional LSTM layer.

    parts:  list of (T*B, Din) f32 arrays (time-major rows) summed inside the input
            projection (layer 0: [x]; later layers: [h_fwd, h_bwd] of the previous
            layer -- this is how the inter-layer concat is avoided).
    wih_t:  (2, P, Din, 4H)    whh_t: (2, H, 4H)    bias: (2, 1, 4H)
    Returns (h_fwd, h_bwd), each (T*B, H), in time order.
    """
    n_rows = parts[0].shape[0]
    h_sz, g_sz = whh_t.shape[1], whh_t.shape[2]
    nparts = len(parts)
    nb = seq_len // tb
    blk_rows = tb * batch

    in_specs, operands = [], []
    for p in range(nparts):
        d_in = parts[p].shape[-1]
        # Each part is passed twice: forward-time view and backward-time view.
        in_specs.append(pl.BlockSpec((blk_rows, d_in), lambda c: (c, 0)))
        in_specs.append(pl.BlockSpec((blk_rows, d_in), lambda c, nb=nb: (nb - 1 - c, 0)))
        operands += [parts[p], parts[p]]
    in_specs += [
        pl.BlockSpec((2, nparts, wih_t.shape[2], g_sz), lambda c: (0, 0, 0, 0)),
        pl.BlockSpec((2, h_sz, g_sz), lambda c: (0, 0, 0)),
        pl.BlockSpec((2, 1, g_sz), lambda c: (0, 0, 0)),
    ]
    operands += [wih_t, whh_t, bias]

    kernel = _make_bilstm_kernel(h_sz, tb, batch, nparts)
    return pl.pallas_call(
        kernel,
        out_shape=(jax.ShapeDtypeStruct((n_rows, h_sz), jnp.float32),
                   jax.ShapeDtypeStruct((n_rows, h_sz), jnp.float32)),
        grid_spec=pltpu.PrefetchScalarGridSpec(
            num_scalar_prefetch=0,
            grid=(nb,),
            in_specs=in_specs,
            out_specs=[pl.BlockSpec((blk_rows, h_sz), lambda c: (c, 0)),
                       pl.BlockSpec((blk_rows, h_sz), lambda c, nb=nb: (nb - 1 - c, 0))],
            scratch_shapes=[pltpu.VMEM((2, batch, h_sz), jnp.float32),    # h state
                            pltpu.VMEM((2, batch, h_sz), jnp.float32),    # c state
                            pltpu.VMEM((blk_rows, g_sz), jnp.float32)],   # block pre-gates
        ),
        compiler_params=pltpu.CompilerParams(
            dimension_semantics=("arbitrary",),            # time is the recurrence
            vmem_limit_bytes=_vmem_limit_bytes()),
    )(*operands)


# ------------------------------- FC + sigmoid kernel -------------------------------
def _fc_kernel(xf_ref, xb_ref, w_ref, b_ref, o_ref):
    y = (jnp.dot(xf_ref[...], w_ref[0, :, :], preferred_element_type=jnp.float32)
         + jnp.dot(xb_ref[...], w_ref[1, :, :], preferred_element_type=jnp.float32)
         + b_ref[...])
    o_ref[...] = jax.nn.sigmoid(y).astype(o_ref.dtype)


def fc_sigmoid(h_fwd, h_bwd, w_t, b):
    """h_fwd/h_bwd: (N, H); w_t: (2, H, Opad); b: (1, Opad). Returns (N, Opad)."""
    n_rows, h_sz = h_fwd.shape
    o_pad = w_t.shape[-1]
    tn = _row_tile(n_rows)
    return pl.pallas_call(
        _fc_kernel,
        out_shape=jax.ShapeDtypeStruct((n_rows, o_pad), jnp.float32),
        grid_spec=pltpu.PrefetchScalarGridSpec(
            num_scalar_prefetch=0,
            grid=(n_rows // tn,),
            in_specs=[pl.BlockSpec((tn, h_sz), lambda i: (i, 0)),
                      pl.BlockSpec((tn, h_sz), lambda i: (i, 0)),
                      pl.BlockSpec((2, h_sz, o_pad), lambda i: (0, 0, 0)),
                      pl.BlockSpec((1, o_pad), lambda i: (0, 0))],
            out_specs=pl.BlockSpec((tn, o_pad), lambda i: (i, 0)),
        ),
        compiler_params=pltpu.CompilerParams(
            dimension_semantics=("parallel",),
            vmem_limit_bytes=_vmem_limit_bytes()),
    )(h_fwd, h_bwd, w_t, b)


# ---------------------------------- parameters -------------------------------------
_GATE_PERM = (0, 1, 3, 2)   # PyTorch packs gate rows (i, f, g, o); we pack (i, f, o, g)


def _reorder_gates(w):
    blocks = jnp.split(w, 4, axis=0)
    return jnp.concatenate([blocks[g] for g in _GATE_PERM], axis=0)


def init_params(key, input_size, hidden_size, num_layers, output_size, bidirectional=True):
    assert bidirectional, "this implementation fuses the two directions"
    h = hidden_size
    bound = 1.0 / float(h) ** 0.5
    layers = []
    for layer in range(num_layers):
        nparts = 1 if layer == 0 else 2
        d_in = input_size if layer == 0 else h                 # per-part input width
        wih_d, whh_d, bias_d = [], [], []
        for _ in range(2):                                     # directions
            key, k1, k2, k3, k4 = jax.random.split(key, 5)
            w_ih = jax.random.uniform(k1, (4 * h, nparts * d_in), jnp.float32, -bound, bound)
            w_hh = jax.random.uniform(k2, (4 * h, h), jnp.float32, -bound, bound)
            b_ih = jax.random.uniform(k3, (4 * h,), jnp.float32, -bound, bound)
            b_hh = jax.random.uniform(k4, (4 * h,), jnp.float32, -bound, bound)
            w_ih = _reorder_gates(w_ih)
            w_hh = _reorder_gates(w_hh)
            bias = _reorder_gates(b_ih + b_hh)                 # bias folded
            # split W_ih columns into per-part panels (layer>0: [fwd | bwd] halves)
            wih_d.append(jnp.stack(
                [jnp.transpose(w_ih[:, p * d_in:(p + 1) * d_in]) for p in range(nparts)], 0))
            whh_d.append(jnp.transpose(w_hh))
            bias_d.append(bias[None, :])
        layers.append({"wih_t": jnp.stack(wih_d, 0),           # (2, P, d_in, 4H)
                       "whh_t": jnp.stack(whh_d, 0),           # (2, H, 4H)
                       "bias": jnp.stack(bias_d, 0)})          # (2, 1, 4H)

    f_in = 2 * h
    f_bound = 1.0 / float(f_in) ** 0.5
    key, k1, k2 = jax.random.split(key, 3)
    fc_w = jax.random.uniform(k1, (output_size, f_in), jnp.float32, -f_bound, f_bound)
    fc_b = jax.random.uniform(k2, (output_size,), jnp.float32, -f_bound, f_bound)
    o_pad = _round_up(output_size, 128)                        # lane-dense FC output
    w2 = jnp.stack([jnp.transpose(fc_w[:, :h]), jnp.transpose(fc_w[:, h:])], 0)  # (2,H,O)
    w2 = jnp.pad(w2, ((0, 0), (0, 0), (0, o_pad - output_size)))
    b2 = jnp.pad(fc_b, (0, o_pad - output_size))[None, :]
    return {"lstm": layers, "fc_w": w2, "fc_b": b2, "out_dim": output_size}


# ---------------------------------- forward pass ------------------------------------
def spam_lstm_forward(params, x):
    """x: (B, T, input_size), batch_first like PyTorch. Returns (B, T, output_size)."""
    b, t, _ = x.shape
    bp = _round_up(max(b, 8), 8)                   # pad batch to f32 sublane multiple
    tb = _pick_time_block(t)
    h = jnp.transpose(x, (1, 0, 2)).astype(jnp.float32)        # (T, B, D) time-major
    if bp != b:
        h = jnp.pad(h, ((0, 0), (0, bp - b), (0, 0)))
    parts = [h.reshape(t * bp, -1)]                # everything stays 2-D from here on
    for layer in params["lstm"]:
        hf, hb = bilstm_layer(parts, layer["wih_t"], layer["whh_t"], layer["bias"],
                              seq_len=t, batch=bp, tb=tb)
        parts = [hf, hb]                           # fed as two matmul parts: no concat
    y = fc_sigmoid(parts[0], parts[1], params["fc_w"], params["fc_b"])
    y = y[:, :params["out_dim"]].reshape(t, bp, -1)[:, :b, :]
    return jnp.transpose(y, (1, 0, 2))             # (B, T, O)


# ----------------------------- pure-JAX reference (test) ----------------------------
def _reference_forward(params, x):
    b, t, _ = x.shape
    h_sz = params["lstm"][0]["whh_t"].shape[1]
    parts = [jnp.transpose(x, (1, 0, 2)).astype(jnp.float32)]  # (T, B, D)
    for layer in params["lstm"]:
        wih_t, whh_t, bias = layer["wih_t"], layer["whh_t"], layer["bias"]
        new_parts = []
        for d in range(2):
            pg = sum(jnp.dot(p, wih_t[d, i]) for i, p in enumerate(parts)) + bias[d]
            xs = pg if d == 0 else pg[::-1]

            def step(carry, pg_t, d=d):
                h_prev, c_prev = carry
                gates = pg_t + jnp.dot(h_prev, whh_t[d])
                gi = jax.nn.sigmoid(gates[:, :h_sz])
                gf = jax.nn.sigmoid(gates[:, h_sz:2 * h_sz])
                go = jax.nn.sigmoid(gates[:, 2 * h_sz:3 * h_sz])
                gg = jnp.tanh(gates[:, 3 * h_sz:])
                c = gf * c_prev + gi * gg
                hh = go * jnp.tanh(c)
                return (hh, c), hh

            init = (jnp.zeros((b, h_sz), jnp.float32), jnp.zeros((b, h_sz), jnp.float32))
            _, hs = jax.lax.scan(step, init, xs)
            new_parts.append(hs if d == 0 else hs[::-1])
        parts = new_parts
    o = params["out_dim"]
    feat = jnp.concatenate(parts, axis=-1)                     # (T, B, 2H)
    w = jnp.concatenate([params["fc_w"][0], params["fc_w"][1]], axis=0)[:, :o]
    y = jax.nn.sigmoid(jnp.dot(feat, w) + params["fc_b"][0, :o])
    return jnp.transpose(y, (1, 0, 2))


if __name__ == "__main__":
    input_size = 8
    hidden_size = 32
    num_layers = 2
    output_size = 1
    batch = 2
    seq = 8

    key = jax.random.PRNGKey(0)
    key, pkey, xkey = jax.random.split(key, 3)
    params = init_params(pkey, input_size, hidden_size, num_layers, output_size,
                         bidirectional=True)
    x = jax.random.normal(xkey, (batch, seq, input_size), jnp.float32)

    out = jax.block_until_ready(spam_lstm_forward(params, x))
    assert out.shape == (batch, seq, output_size)
    assert bool(jnp.all((out > -1e-6) & (out < 1.0 + 1e-6)))

    ref = _reference_forward(params, x)
    max_err = float(jnp.max(jnp.abs(out - ref)))
    assert max_err < 2e-2, f"mismatch vs pure-JAX reference: {max_err}"
    print("KERNEL_OK")
</pallas_src>

<mosaic_0001>
module attributes {stable_mosaic.version = 11 : i64} {
  func.func @kernel(%arg0: i32, %arg1: memref<64x8xf32, #tpu.memory_space<vmem>>, %arg2: memref<64x8xf32, #tpu.memory_space<vmem>>, %arg3: memref<2x1x8x128xf32, #tpu.memory_space<vmem>>, %arg4: memref<2x32x128xf32, #tpu.memory_space<vmem>>, %arg5: memref<2x1x128xf32, #tpu.memory_space<vmem>>, %arg6: memref<64x32xf32, #tpu.memory_space<vmem>>, %arg7: memref<64x32xf32, #tpu.memory_space<vmem>>, %arg8: memref<2x8x32xf32, #tpu.memory_space<vmem>>, %arg9: memref<2x8x32xf32, #tpu.memory_space<vmem>>, %arg10: memref<64x128xf32, #tpu.memory_space<vmem>>) attributes {dimension_semantics = [#tpu.dimension_semantics<arbitrary>], iteration_bounds = array<i64: 1>, scalar_prefetch = 0 : i64, scratch_operands = 3 : i64, tpu.core_type = #tpu.core_type<tc>, window_params = [{transform_indices = @transform_0, window_bounds = array<i64: 64, 8>}, {transform_indices = @transform_1, window_bounds = array<i64: 64, 8>}, {pipeline_mode = #tpu.pipeline_mode<synchronous>, transform_indices = @transform_2, window_bounds = array<i64: 2, 1, 8, 128>}, {pipeline_mode = #tpu.pipeline_mode<synchronous>, transform_indices = @transform_3, window_bounds = array<i64: 2, 32, 128>}, {pipeline_mode = #tpu.pipeline_mode<synchronous>, transform_indices = @transform_4, window_bounds = array<i64: 2, 1, 128>}, {transform_indices = @transform_5, window_bounds = array<i64: 64, 32>}, {transform_indices = @transform_6, window_bounds = array<i64: 64, 32>}]} {
    %c0_i32 = arith.constant 0 : i32
    %0 = arith.cmpi eq, %arg0, %c0_i32 : i32
    %1 = arith.extui %0 : i1 to i32
    %c0_i32_0 = arith.constant 0 : i32
    %2 = arith.cmpi ne, %1, %c0_i32_0 : i32
    scf.if %2 {
      %cst_367 = arith.constant 0.000000e+00 : f32
      %549 = vector.broadcast %cst_367 : f32 to vector<2x8x32xf32>
      %c0_368 = arith.constant 0 : index
      %c0_369 = arith.constant 0 : index
      %c0_370 = arith.constant 0 : index
      %550 = vector.load %arg8[%c0_368, %c0_369, %c0_370] : memref<2x8x32xf32, #tpu.memory_space<vmem>>, vector<2x8x32xf32>
      tpu.vector_store %arg8[%c0_368, %c0_369, %c0_370], %549 {strides = array<i32>} : memref<2x8x32xf32, #tpu.memory_space<vmem>>, vector<2x8x32xf32>,
      %cst_371 = arith.constant 0.000000e+00 : f32
      %551 = vector.broadcast %cst_371 : f32 to vector<2x8x32xf32>
      %c0_372 = arith.constant 0 : index
      %c0_373 = arith.constant 0 : index
      %c0_374 = arith.constant 0 : index
      %552 = vector.load %arg9[%c0_372, %c0_373, %c0_374] : memref<2x8x32xf32, #tpu.memory_space<vmem>>, vector<2x8x32xf32>
      tpu.vector_store %arg9[%c0_372, %c0_373, %c0_374], %551 {strides = array<i32>} : memref<2x8x32xf32, #tpu.memory_space<vmem>>, vector<2x8x32xf32>,
    } else {
    }
    %c0 = arith.constant 0 : index
    %c0_1 = arith.constant 0 : index
    %3 = vector.load %arg1[%c0, %c0_1] : memref<64x8xf32, #tpu.memory_space<vmem>>, vector<64x8xf32>
    %c0_2 = arith.constant 0 : index
    %c0_3 = arith.constant 0 : index
    %c0_4 = arith.constant 0 : index
    %c0_5 = arith.constant 0 : index
    %4 = vector.load %arg3[%c0_2, %c0_3, %c0_4, %c0_5] : memref<2x1x8x128xf32, #tpu.memory_space<vmem>>, vector<1x1x8x128xf32>
    %5 = vector.shape_cast %4 : vector<1x1x8x128xf32> to vector<8x128xf32>
    %cst = arith.constant dense<0.000000e+00> : vector<64x128xf32>
    %6 = tpu.matmul %3, %5, %cst {dimension_numbers = #tpu.dot_dimension_numbers<[1], [0], [0], [1], [0, 0, 1, 1], [], []>} : vector<64x8xf32>, vector<8x128xf32>, vector<64x128xf32> -> vector<64x128xf32>
    %c0_6 = arith.constant 0 : index
    %c0_7 = arith.constant 0 : index
    %c0_8 = arith.constant 0 : index
    %7 = vector.load %arg5[%c0_6, %c0_7, %c0_8] : memref<2x1x128xf32, #tpu.memory_space<vmem>>, vector<1x1x128xf32>
    %8 = vector.shape_cast %7 : vector<1x1x128xf32> to vector<1x128xf32>
    %9 = vector.broadcast %8 : vector<1x128xf32> to vector<64x128xf32>
    %10 = arith.addf %6, %9 : vector<64x128xf32>
    %c0_9 = arith.constant 0 : index
    %c0_10 = arith.constant 0 : index
    %11 = vector.load %arg10[%c0_9, %c0_10] : memref<64x128xf32, #tpu.memory_space<vmem>>, vector<64x128xf32>
    tpu.vector_store %arg10[%c0_9, %c0_10], %10 {strides = array<i32>} : memref<64x128xf32, #tpu.memory_space<vmem>>, vector<64x128xf32>,
    %c0_11 = arith.constant 0 : index
    %c0_12 = arith.constant 0 : index
    %12 = vector.load %arg10[%c0_11, %c0_12] : memref<64x128xf32, #tpu.memory_space<vmem>>, vector<8x128xf32>
    %c0_13 = arith.constant 0 : index
    %c0_14 = arith.constant 0 : index
    %c0_15 = arith.constant 0 : index
    %13 = vector.load %arg8[%c0_13, %c0_14, %c0_15] : memref<2x8x32xf32, #tpu.memory_space<vmem>>, vector<1x8x32xf32>
    %14 = vector.shape_cast %13 : vector<1x8x32xf32> to vector<8x32xf32>
    %c0_16 = arith.constant 0 : index
    %c0_17 = arith.constant 0 : index
    %c0_18 = arith.constant 0 : index
    %15 = vector.load %arg4[%c0_16, %c0_17, %c0_18] : memref<2x32x128xf32, #tpu.memory_space<vmem>>, vector<1x32x128xf32>
    %16 = vector.shape_cast %15 : vector<1x32x128xf32> to vector<32x128xf32>
    %cst_19 = arith.constant dense<0.000000e+00> : vector<8x128xf32>
    %17 = tpu.matmul %14, %16, %cst_19 {dimension_numbers = #tpu.dot_dimension_numbers<[1], [0], [0], [1], [0, 0, 1, 1], [], []>} : vector<8x32xf32>, vector<32x128xf32>, vector<8x128xf32> -> vector<8x128xf32>
    %18 = arith.addf %12, %17 : vector<8x128xf32>
    %19 = vector.extract_strided_slice %18 {offsets = [0, 0], sizes = [8, 96], strides = [1, 1]} : vector<8x128xf32> to vector<8x96xf32>
    %cst_20 = arith.constant 0.000000e+00 : f32
    %20 = vector.broadcast %cst_20 : f32 to vector<8x96xf32>
    %21 = arith.subf %20, %19 : vector<8x96xf32>
    %22 = math.exp %21 : vector<8x96xf32>
    %cst_21 = arith.constant 1.000000e+00 : f32
    %23 = vector.broadcast %cst_21 : f32 to vector<8x96xf32>
    %24 = arith.addf %23, %22 : vector<8x96xf32>
    %25 = tpu.reciprocal %24 {approx = true} : vector<8x96xf32> -> vector<8x96xf32>
    %26 = vector.extract_strided_slice %25 {offsets = [0, 0], sizes = [8, 32], strides = [1, 1]} : vector<8x96xf32> to vector<8x32xf32>
    %27 = vector.extract_strided_slice %25 {offsets = [0, 32], sizes = [8, 32], strides = [1, 1]} : vector<8x96xf32> to vector<8x32xf32>
    %28 = vector.extract_strided_slice %25 {offsets = [0, 64], sizes = [8, 32], strides = [1, 1]} : vector<8x96xf32> to vector<8x32xf32>
    %29 = vector.extract_strided_slice %18 {offsets = [0, 96], sizes = [8, 32], strides = [1, 1]} : vector<8x128xf32> to vector<8x32xf32>
    %30 = math.tanh %29 : vector<8x32xf32>
    %c0_22 = arith.constant 0 : index
    %c0_23 = arith.constant 0 : index
    %c0_24 = arith.constant 0 : index
    %31 = vector.load %arg9[%c0_22, %c0_23, %c0_24] : memref<2x8x32xf32, #tpu.memory_space<vmem>>, vector<1x8x32xf32>
    %32 = vector.shape_cast %31 : vector<1x8x32xf32> to vector<8x32xf32>
    %33 = arith.mulf %27, %32 : vector<8x32xf32>
    %34 = arith.mulf %26, %30 : vector<8x32xf32>
    %35 = arith.addf %33, %34 : vector<8x32xf32>
    %36 = math.tanh %35 : vector<8x32xf32>
    %37 = arith.mulf %28, %36 : vector<8x32xf32>
    %c0_25 = arith.constant 0 : index
    %c0_26 = arith.constant 0 : index
    %c0_27 = arith.constant 0 : index
    %38 = vector.load %arg9[%c0_25, %c0_26, %c0_27] : memref<2x8x32xf32, #tpu.memory_space<vmem>>, vector<1x8x32xf32>
    %39 = vector.shape_cast %38 : vector<1x8x32xf32> to vector<8x32xf32>
    %40 = vector.shape_cast %35 : vector<8x32xf32> to vector<1x8x32xf32>
    tpu.vector_store %arg9[%c0_25, %c0_26, %c0_27], %40 {strides = array<i32>} : memref<2x8x32xf32, #tpu.memory_space<vmem>>, vector<1x8x32xf32>,
    %c0_28 = arith.constant 0 : index
    %c0_29 = arith.constant 0 : index
    %c0_30 = arith.constant 0 : index
    %41 = vector.load %arg8[%c0_28, %c0_29, %c0_30] : memref<2x8x32xf32, #tpu.memory_space<vmem>>, vector<1x8x32xf32>
    %42 = vector.shape_cast %41 : vector<1x8x32xf32> to vector<8x32xf32>
    %43 = vector.shape_cast %37 : vector<8x32xf32> to vector<1x8x32xf32>
    tpu.vector_store %arg8[%c0_28, %c0_29, %c0_30], %43 {strides = array<i32>} : memref<2x8x32xf32, #tpu.memory_space<vmem>>, vector<1x8x32xf32>,
    %c0_31 = arith.constant 0 : index
    %c0_32 = arith.constant 0 : index
    %44 = vector.load %arg6[%c0_31, %c0_32] : memref<64x32xf32, #tpu.memory_space<vmem>>, vector<8x32xf32>
    tpu.vector_store %arg6[%c0_31, %c0_32], %37 {strides = array<i32>} : memref<64x32xf32, #tpu.memory_space<vmem>>, vector<8x32xf32>,
    %c8 = arith.constant 8 : index
    %c0_33 = arith.constant 0 : index
    %45 = vector.load %arg10[%c8, %c0_33] : memref<64x128xf32, #tpu.memory_space<vmem>>, vector<8x128xf32>
    %c0_34 = arith.constant 0 : index
    %c0_35 = arith.constant 0 : index
    %c0_36 = arith.constant 0 : index
    %46 = vector.load %arg8[%c0_34, %c0_35, %c0_36] : memref<2x8x32xf32, #tpu.memory_space<vmem>>, vector<1x8x32xf32>
    %47 = vector.shape_cast %46 : vector<1x8x32xf32> to vector<8x32xf32>
    %c0_37 = arith.constant 0 : index
    %c0_38 = arith.constant 0 : index
    %c0_39 = arith.constant 0 : index
    %48 = vector.load %arg4[%c0_37, %c0_38, %c0_39] : memref<2x32x128xf32, #tpu.memory_space<vmem>>, vector<1x32x128xf32>
    %49 = vector.shape_cast %48 : vector<1x32x128xf32> to vector<32x128xf32>
    %cst_40 = arith.constant dense<0.000000e+00> : vector<8x128xf32>
    %50 = tpu.matmul %47, %49, %cst_40 {dimension_numbers = #tpu.dot_dimension_numbers<[1], [0], [0], [1], [0, 0, 1, 1], [], []>} : vector<8x32xf32>, vector<32x128xf32>, vector<8x128xf32> -> vector<8x128xf32>
    %51 = arith.addf %45, %50 : vector<8x128xf32>
    %52 = vector.extract_strided_slice %51 {offsets = [0, 0], sizes = [8, 96], strides = [1, 1]} : vector<8x128xf32> to vector<8x96xf32>
    %cst_41 = arith.constant 0.000000e+00 : f32
    %53 = vector.broadcast %cst_41 : f32 to vector<8x96xf32>
    %54 = arith.subf %53, %52 : vector<8x96xf32>
    %55 = math.exp %54 : vector<8x96xf32>
    %cst_42 = arith.constant 1.000000e+00 : f32
    %56 = vector.broadcast %cst_42 : f32 to vector<8x96xf32>
    %57 = arith.addf %56, %55 : vector<8x96xf32>
    %58 = tpu.reciprocal %57 {approx = true} : vector<8x96xf32> -> vector<8x96xf32>
    %59 = vector.extract_strided_slice %58 {offsets = [0, 0], sizes = [8, 32], strides = [1, 1]} : vector<8x96xf32> to vector<8x32xf32>
    %60 = vector.extract_strided_slice %58 {offsets = [0, 32], sizes = [8, 32], strides = [1, 1]} : vector<8x96xf32> to vector<8x32xf32>
    %61 = vector.extract_strided_slice %58 {offsets = [0, 64], sizes = [8, 32], strides = [1, 1]} : vector<8x96xf32> to vector<8x32xf32>
    %62 = vector.extract_strided_slice %51 {offsets = [0, 96], sizes = [8, 32], strides = [1, 1]} : vector<8x128xf32> to vector<8x32xf32>
    %63 = math.tanh %62 : vector<8x32xf32>
    %c0_43 = arith.constant 0 : index
    %c0_44 = arith.constant 0 : index
    %c0_45 = arith.constant 0 : index
    %64 = vector.load %arg9[%c0_43, %c0_44, %c0_45] : memref<2x8x32xf32, #tpu.memory_space<vmem>>, vector<1x8x32xf32>
    %65 = vector.shape_cast %64 : vector<1x8x32xf32> to vector<8x32xf32>
    %66 = arith.mulf %60, %65 : vector<8x32xf32>
    %67 = arith.mulf %59, %63 : vector<8x32xf32>
    %68 = arith.addf %66, %67 : vector<8x32xf32>
    %69 = math.tanh %68 : vector<8x32xf32>
    %70 = arith.mulf %61, %69 : vector<8x32xf32>
    %c0_46 = arith.constant 0 : index
    %c0_47 = arith.constant 0 : index
    %c0_48 = arith.constant 0 : index
    %71 = vector.load %arg9[%c0_46, %c0_47, %c0_48] : memref<2x8x32xf32, #tpu.memory_space<vmem>>, vector<1x8x32xf32>
    %72 = vector.shape_cast %71 : vector<1x8x32xf32> to vector<8x32xf32>
    %73 = vector.shape_cast %68 : vector<8x32xf32> to vector<1x8x32xf32>
    tpu.vector_store %arg9[%c0_46, %c0_47, %c0_48], %73 {strides = array<i32>} : memref<2x8x32xf32, #tpu.memory_space<vmem>>, vector<1x8x32xf32>,
    %c0_49 = arith.constant 0 : index
    %c0_50 = arith.constant 0 : index
    %c0_51 = arith.constant 0 : index
    %74 = vector.load %arg8[%c0_49, %c0_50, %c0_51] : memref<2x8x32xf32, #tpu.memory_space<vmem>>, vector<1x8x32xf32>
    %75 = vector.shape_cast %74 : vector<1x8x32xf32> to vector<8x32xf32>
    %76 = vector.shape_cast %70 : vector<8x32xf32> to vector<1x8x32xf32>
    tpu.vector_store %arg8[%c0_49, %c0_50, %c0_51], %76 {strides = array<i32>} : memref<2x8x32xf32, #tpu.memory_space<vmem>>, vector<1x8x32xf32>,
    %c8_52 = arith.constant 8 : index
    %c0_53 = arith.constant 0 : index
    %77 = vector.load %arg6[%c8_52, %c0_53] : memref<64x32xf32, #tpu.memory_space<vmem>>, vector<8x32xf32>
    tpu.vector_store %arg6[%c8_52, %c0_53], %70 {strides = array<i32>} : memref<64x32xf32, #tpu.memory_space<vmem>>, vector<8x32xf32>,
    %c16 = arith.constant 16 : index
    %c0_54 = arith.constant 0 : index
    %78 = vector.load %arg10[%c16, %c0_54] : memref<64x128xf32, #tpu.memory_space<vmem>>, vector<8x128xf32>
    %c0_55 = arith.constant 0 : index
    %c0_56 = arith.constant 0 : index
    %c0_57 = arith.constant 0 : index
    %79 = vector.load %arg8[%c0_55, %c0_56, %c0_57] : memref<2x8x32xf32, #tpu.memory_space<vmem>>, vector<1x8x32xf32>
    %80 = vector.shape_cast %79 : vector<1x8x32xf32> to vector<8x32xf32>
    %c0_58 = arith.constant 0 : index
    %c0_59 = arith.constant 0 : index
    %c0_60 = arith.constant 0 : index
    %81 = vector.load %arg4[%c0_58, %c0_59, %c0_60] : memref<2x32x128xf32, #tpu.memory_space<vmem>>, vector<1x32x128xf32>
    %82 = vector.shape_cast %81 : vector<1x32x128xf32> to vector<32x128xf32>
    %cst_61 = arith.constant dense<0.000000e+00> : vector<8x128xf32>
    %83 = tpu.matmul %80, %82, %cst_61 {dimension_numbers = #tpu.dot_dimension_numbers<[1], [0], [0], [1], [0, 0, 1, 1], [], []>} : vector<8x32xf32>, vector<32x128xf32>, vector<8x128xf32> -> vector<8x128xf32>
    %84 = arith.addf %78, %83 : vector<8x128xf32>
    %85 = vector.extract_strided_slice %84 {offsets = [0, 0], sizes = [8, 96], strides = [1, 1]} : vector<8x128xf32> to vector<8x96xf32>
    %cst_62 = arith.constant 0.000000e+00 : f32
    %86 = vector.broadcast %cst_62 : f32 to vector<8x96xf32>
    %87 = arith.subf %86, %85 : vector<8x96xf32>
    %88 = math.exp %87 : vector<8x96xf32>
    %cst_63 = arith.constant 1.000000e+00 : f32
    %89 = vector.broadcast %cst_63 : f32 to vector<8x96xf32>
    %90 = arith.addf %89, %88 : vector<8x96xf32>
    %91 = tpu.reciprocal %90 {approx = true} : vector<8x96xf32> -> vector<8x96xf32>
    %92 = vector.extract_strided_slice %91 {offsets = [0, 0], sizes = [8, 32], strides = [1, 1]} : vector<8x96xf32> to vector<8x32xf32>
    %93 = vector.extract_strided_slice %91 {offsets = [0, 32], sizes = [8, 32], strides = [1, 1]} : vector<8x96xf32> to vector<8x32xf32>
    %94 = vector.extract_strided_slice %91 {offsets = [0, 64], sizes = [8, 32], strides = [1, 1]} : vector<8x96xf32> to vector<8x32xf32>
    %95 = vector.extract_strided_slice %84 {offsets = [0, 96], sizes = [8, 32], strides = [1, 1]} : vector<8x128xf32> to vector<8x32xf32>
    %96 = math.tanh %95 : vector<8x32xf32>
    %c0_64 = arith.constant 0 : index
    %c0_65 = arith.constant 0 : index
    %c0_66 = arith.constant 0 : index
    %97 = vector.load %arg9[%c0_64, %c0_65, %c0_66] : memref<2x8x32xf32, #tpu.memory_space<vmem>>, vector<1x8x32xf32>
    %98 = vector.shape_cast %97 : vector<1x8x32xf32> to vector<8x32xf32>
    %99 = arith.mulf %93, %98 : vector<8x32xf32>
    %100 = arith.mulf %92, %96 : vector<8x32xf32>
    %101 = arith.addf %99, %100 : vector<8x32xf32>
    %102 = math.tanh %101 : vector<8x32xf32>
    %103 = arith.mulf %94, %102 : vector<8x32xf32>
    %c0_67 = arith.constant 0 : index
    %c0_68 = arith.constant 0 : index
    %c0_69 = arith.constant 0 : index
    %104 = vector.load %arg9[%c0_67, %c0_68, %c0_69] : memref<2x8x32xf32, #tpu.memory_space<vmem>>, vector<1x8x32xf32>
    %105 = vector.shape_cast %104 : vector<1x8x32xf32> to vector<8x32xf32>
    %106 = vector.shape_cast %101 : vector<8x32xf32> to vector<1x8x32xf32>
    tpu.vector_store %arg9[%c0_67, %c0_68, %c0_69], %106 {strides = array<i32>} : memref<2x8x32xf32, #tpu.memory_space<vmem>>, vector<1x8x32xf32>,
    %c0_70 = arith.constant 0 : index
    %c0_71 = arith.constant 0 : index
    %c0_72 = arith.constant 0 : index
    %107 = vector.load %arg8[%c0_70, %c0_71, %c0_72] : memref<2x8x32xf32, #tpu.memory_space<vmem>>, vector<1x8x32xf32>
    %108 = vector.shape_cast %107 : vector<1x8x32xf32> to vector<8x32xf32>
    %109 = vector.shape_cast %103 : vector<8x32xf32> to vector<1x8x32xf32>
    tpu.vector_store %arg8[%c0_70, %c0_71, %c0_72], %109 {strides = array<i32>} : memref<2x8x32xf32, #tpu.memory_space<vmem>>, vector<1x8x32xf32>,
    %c16_73 = arith.constant 16 : index
    %c0_74 = arith.constant 0 : index
    %110 = vector.load %arg6[%c16_73, %c0_74] : memref<64x32xf32, #tpu.memory_space<vmem>>, vector<8x32xf32>
    tpu.vector_store %arg6[%c16_73, %c0_74], %103 {strides = array<i32>} : memref<64x32xf32, #tpu.memory_space<vmem>>, vector<8x32xf32>,
    %c24 = arith.constant 24 : index
    %c0_75 = arith.constant 0 : index
    %111 = vector.load %arg10[%c24, %c0_75] : memref<64x128xf32, #tpu.memory_space<vmem>>, vector<8x128xf32>
    %c0_76 = arith.constant 0 : index
    %c0_77 = arith.constant 0 : index
    %c0_78 = arith.constant 0 : index
    %112 = vector.load %arg8[%c0_76, %c0_77, %c0_78] : memref<2x8x32xf32, #tpu.memory_space<vmem>>, vector<1x8x32xf32>
    %113 = vector.shape_cast %112 : vector<1x8x32xf32> to vector<8x32xf32>
    %c0_79 = arith.constant 0 : index
    %c0_80 = arith.constant 0 : index
    %c0_81 = arith.constant 0 : index
    %114 = vector.load %arg4[%c0_79, %c0_80, %c0_81] : memref<2x32x128xf32, #tpu.memory_space<vmem>>, vector<1x32x128xf32>
    %115 = vector.shape_cast %114 : vector<1x32x128xf32> to vector<32x128xf32>
    %cst_82 = arith.constant dense<0.000000e+00> : vector<8x128xf32>
    %116 = tpu.matmul %113, %115, %cst_82 {dimension_numbers = #tpu.dot_dimension_numbers<[1], [0], [0], [1], [0, 0, 1, 1], [], []>} : vector<8x32xf32>, vector<32x128xf32>, vector<8x128xf32> -> vector<8x128xf32>
    %117 = arith.addf %111, %116 : vector<8x128xf32>
    %118 = vector.extract_strided_slice %117 {offsets = [0, 0], sizes = [8, 96], strides = [1, 1]} : vector<8x128xf32> to vector<8x96xf32>
    %cst_83 = arith.constant 0.000000e+00 : f32
    %119 = vector.broadcast %cst_83 : f32 to vector<8x96xf32>
    %120 = arith.subf %119, %118 : vector<8x96xf32>
    %121 = math.exp %120 : vector<8x96xf32>
    %cst_84 = arith.constant 1.000000e+00 : f32
    %122 = vector.broadcast %cst_84 : f32 to vector<8x96xf32>
    %123 = arith.addf %122, %121 : vector<8x96xf32>
    %124 = tpu.reciprocal %123 {approx = true} : vector<8x96xf32> -> vector<8x96xf32>
    %125 = vector.extract_strided_slice %124 {offsets = [0, 0], sizes = [8, 32], strides = [1, 1]} : vector<8x96xf32> to vector<8x32xf32>
    %126 = vector.extract_strided_slice %124 {offsets = [0, 32], sizes = [8, 32], strides = [1, 1]} : vector<8x96xf32> to vector<8x32xf32>
    %127 = vector.extract_strided_slice %124 {offsets = [0, 64], sizes = [8, 32], strides = [1, 1]} : vector<8x96xf32> to vector<8x32xf32>
    %128 = vector.extract_strided_slice %117 {offsets = [0, 96], sizes = [8, 32], strides = [1, 1]} : vector<8x128xf32> to vector<8x32xf32>
    %129 = math.tanh %128 : vector<8x32xf32>
    %c0_85 = arith.constant 0 : index
    %c0_86 = arith.constant 0 : index
    %c0_87 = arith.constant 0 : index
    %130 = vector.load %arg9[%c0_85, %c0_86, %c0_87] : memref<2x8x32xf32, #tpu.memory_space<vmem>>, vector<1x8x32xf32>
    %131 = vector.shape_cast %130 : vector<1x8x32xf32> to vector<8x32xf32>
    %132 = arith.mulf %126, %131 : vector<8x32xf32>
    %133 = arith.mulf %125, %129 : vector<8x32xf32>
    %134 = arith.addf %132, %133 : vector<8x32xf32>
    %135 = math.tanh %134 : vector<8x32xf32>
    %136 = arith.mulf %127, %135 : vector<8x32xf32>
    %c0_88 = arith.constant 0 : index
    %c0_89 = arith.constant 0 : index
    %c0_90 = arith.constant 0 : index
    %137 = vector.load %arg9[%c0_88, %c0_89, %c0_90] : memref<2x8x32xf32, #tpu.memory_space<vmem>>, vector<1x8x32xf32>
    %138 = vector.shape_cast %137 : vector<1x8x32xf32> to vector<8x32xf32>
    %139 = vector.shape_cast %134 : vector<8x32xf32> to vector<1x8x32xf32>
    tpu.vector_store %arg9[%c0_88, %c0_89, %c0_90], %139 {strides = array<i32>} : memref<2x8x32xf32, #tpu.memory_space<vmem>>, vector<1x8x32xf32>,
    %c0_91 = arith.constant 0 : index
    %c0_92 = arith.constant 0 : index
    %c0_93 = arith.constant 0 : index
    %140 = vector.load %arg8[%c0_91, %c0_92, %c0_93] : memref<2x8x32xf32, #tpu.memory_space<vmem>>, vector<1x8x32xf32>
    %141 = vector.shape_cast %140 : vector<1x8x32xf32> to vector<8x32xf32>
    %142 = vector.shape_cast %136 : vector<8x32xf32> to vector<1x8x32xf32>
    tpu.vector_store %arg8[%c0_91, %c0_92, %c0_93], %142 {strides = array<i32>} : memref<2x8x32xf32, #tpu.memory_space<vmem>>, vector<1x8x32xf32>,
    %c24_94 = arith.constant 24 : index
    %c0_95 = arith.constant 0 : index
    %143 = vector.load %arg6[%c24_94, %c0_95] : memref<64x32xf32, #tpu.memory_space<vmem>>, vector<8x32xf32>
    tpu.vector_store %arg6[%c24_94, %c0_95], %136 {strides = array<i32>} : memref<64x32xf32, #tpu.memory_space<vmem>>, vector<8x32xf32>,
    %c32 = arith.constant 32 : index
    %c0_96 = arith.constant 0 : index
    %144 = vector.load %arg10[%c32, %c0_96] : memref<64x128xf32, #tpu.memory_space<vmem>>, vector<8x128xf32>
    %c0_97 = arith.constant 0 : index
    %c0_98 = arith.constant 0 : index
    %c0_99 = arith.constant 0 : index
    %145 = vector.load %arg8[%c0_97, %c0_98, %c0_99] : memref<2x8x32xf32, #tpu.memory_space<vmem>>, vector<1x8x32xf32>
    %146 = vector.shape_cast %145 : vector<1x8x32xf32> to vector<8x32xf32>
    %c0_100 = arith.constant 0 : index
    %c0_101 = arith.constant 0 : index
    %c0_102 = arith.constant 0 : index
    %147 = vector.load %arg4[%c0_100, %c0_101, %c0_102] : memref<2x32x128xf32, #tpu.memory_space<vmem>>, vector<1x32x128xf32>
    %148 = vector.shape_cast %147 : vector<1x32x128xf32> to vector<32x128xf32>
    %cst_103 = arith.constant dense<0.000000e+00> : vector<8x128xf32>
    %149 = tpu.matmul %146, %148, %cst_103 {dimension_numbers = #tpu.dot_dimension_numbers<[1], [0], [0], [1], [0, 0, 1, 1], [], []>} : vector<8x32xf32>, vector<32x128xf32>, vector<8x128xf32> -> vector<8x128xf32>
    %150 = arith.addf %144, %149 : vector<8x128xf32>
    %151 = vector.extract_strided_slice %150 {offsets = [0, 0], sizes = [8, 96], strides = [1, 1]} : vector<8x128xf32> to vector<8x96xf32>
    %cst_104 = arith.constant 0.000000e+00 : f32
    %152 = vector.broadcast %cst_104 : f32 to vector<8x96xf32>
    %153 = arith.subf %152, %151 : vector<8x96xf32>
    %154 = math.exp %153 : vector<8x96xf32>
    %cst_105 = arith.constant 1.000000e+00 : f32
    %155 = vector.broadcast %cst_105 : f32 to vector<8x96xf32>
    %156 = arith.addf %155, %154 : vector<8x96xf32>
    %157 = tpu.reciprocal %156 {approx = true} : vector<8x96xf32> -> vector<8x96xf32>
    %158 = vector.extract_strided_slice %157 {offsets = [0, 0], sizes = [8, 32], strides = [1, 1]} : vector<8x96xf32> to vector<8x32xf32>
    %159 = vector.extract_strided_slice %157 {offsets = [0, 32], sizes = [8, 32], strides = [1, 1]} : vector<8x96xf32> to vector<8x32xf32>
    %160 = vector.extract_strided_slice %157 {offsets = [0, 64], sizes = [8, 32], strides = [1, 1]} : vector<8x96xf32> to vector<8x32xf32>
    %161 = vector.extract_strided_slice %150 {offsets = [0, 96], sizes = [8, 32], strides = [1, 1]} : vector<8x128xf32> to vector<8x32xf32>
    %162 = math.tanh %161 : vector<8x32xf32>
    %c0_106 = arith.constant 0 : index
    %c0_107 = arith.constant 0 : index
    %c0_108 = arith.constant 0 : index
    %163 = vector.load %arg9[%c0_106, %c0_107, %c0_108] : memref<2x8x32xf32, #tpu.memory_space<vmem>>, vector<1x8x32xf32>
    %164 = vector.shape_cast %163 : vector<1x8x32xf32> to vector<8x32xf32>
    %165 = arith.mulf %159, %164 : vector<8x32xf32>
    %166 = arith.mulf %158, %162 : vector<8x32xf32>
    %167 = arith.addf %165, %166 : vector<8x32xf32>
    %168 = math.tanh %167 : vector<8x32xf32>
    %169 = arith.mulf %160, %168 : vector<8x32xf32>
    %c0_109 = arith.constant 0 : index
    %c0_110 = arith.constant 0 : index
    %c0_111 = arith.constant 0 : index
    %170 = vector.load %arg9[%c0_109, %c0_110, %c0_111] : memref<2x8x32xf32, #tpu.memory_space<vmem>>, vector<1x8x32xf32>
    %171 = vector.shape_cast %170 : vector<1x8x32xf32> to vector<8x32xf32>
    %172 = vector.shape_cast %167 : vector<8x32xf32> to vector<1x8x32xf32>
    tpu.vector_store %arg9[%c0_109, %c0_110, %c0_111], %172 {strides = array<i32>} : memref<2x8x32xf32, #tpu.memory_space<vmem>>, vector<1x8x32xf32>,
    %c0_112 = arith.constant 0 : index
    %c0_113 = arith.constant 0 : index
    %c0_114 = arith.constant 0 : index
    %173 = vector.load %arg8[%c0_112, %c0_113, %c0_114] : memref<2x8x32xf32, #tpu.memory_space<vmem>>, vector<1x8x32xf32>
    %174 = vector.shape_cast %173 : vector<1x8x32xf32> to vector<8x32xf32>
    %175 = vector.shape_cast %169 : vector<8x32xf32> to vector<1x8x32xf32>
    tpu.vector_store %arg8[%c0_112, %c0_113, %c0_114], %175 {strides = array<i32>} : memref<2x8x32xf32, #tpu.memory_space<vmem>>, vector<1x8x32xf32>,
    %c32_115 = arith.constant 32 : index
    %c0_116 = arith.constant 0 : index
    %176 = vector.load %arg6[%c32_115, %c0_116] : memref<64x32xf32, #tpu.memory_space<vmem>>, vector<8x32xf32>
    tpu.vector_store %arg6[%c32_115, %c0_116], %169 {strides = array<i32>} : memref<64x32xf32, #tpu.memory_space<vmem>>, vector<8x32xf32>,
    %c40 = arith.constant 40 : index
    %c0_117 = arith.constant 0 : index
    %177 = vector.load %arg10[%c40, %c0_117] : memref<64x128xf32, #tpu.memory_space<vmem>>, vector<8x128xf32>
    %c0_118 = arith.constant 0 : index
    %c0_119 = arith.constant 0 : index
    %c0_120 = arith.constant 0 : index
    %178 = vector.load %arg8[%c0_118, %c0_119, %c0_120] : memref<2x8x32xf32, #tpu.memory_space<vmem>>, vector<1x8x32xf32>
    %179 = vector.shape_cast %178 : vector<1x8x32xf32> to vector<8x32xf32>
    %c0_121 = arith.constant 0 : index
    %c0_122 = arith.constant 0 : index
    %c0_123 = arith.constant 0 : index
    %180 = vector.load %arg4[%c0_121, %c0_122, %c0_123] : memref<2x32x128xf32, #tpu.memory_space<vmem>>, vector<1x32x128xf32>
    %181 = vector.shape_cast %180 : vector<1x32x128xf32> to vector<32x128xf32>
    %cst_124 = arith.constant dense<0.000000e+00> : vector<8x128xf32>
    %182 = tpu.matmul %179, %181, %cst_124 {dimension_numbers = #tpu.dot_dimension_numbers<[1], [0], [0], [1], [0, 0, 1, 1], [], []>} : vector<8x32xf32>, vector<32x128xf32>, vector<8x128xf32> -> vector<8x128xf32>
    %183 = arith.addf %177, %182 : vector<8x128xf32>
    %184 = vector.extract_strided_slice %183 {offsets = [0, 0], sizes = [8, 96], strides = [1, 1]} : vector<8x128xf32> to vector<8x96xf32>
    %cst_125 = arith.constant 0.000000e+00 : f32
    %185 = vector.broadcast %cst_125 : f32 to vector<8x96xf32>
    %186 = arith.subf %185, %184 : vector<8x96xf32>
    %187 = math.exp %186 : vector<8x96xf32>
    %cst_126 = arith.constant 1.000000e+00 : f32
    %188 = vector.broadcast %cst_126 : f32 to vector<8x96xf32>
    %189 = arith.addf %188, %187 : vector<8x96xf32>
    %190 = tpu.reciprocal %189 {approx = true} : vector<8x96xf32> -> vector<8x96xf32>
    %191 = vector.extract_strided_slice %190 {offsets = [0, 0], sizes = [8, 32], strides = [1, 1]} : vector<8x96xf32> to vector<8x32xf32>
    %192 = vector.extract_strided_slice %190 {offsets = [0, 32], sizes = [8, 32], strides = [1, 1]} : vector<8x96xf32> to vector<8x32xf32>
    %193 = vector.extract_strided_slice %190 {offsets = [0, 64], sizes = [8, 32], strides = [1, 1]} : vector<8x96xf32> to vector<8x32xf32>
    %194 = vector.extract_strided_slice %183 {offsets = [0, 96], sizes = [8, 32], strides = [1, 1]} : vector<8x128xf32> to vector<8x32xf32>
    %195 = math.tanh %194 : vector<8x32xf32>
    %c0_127 = arith.constant 0 : index
    %c0_128 = arith.constant 0 : index
    %c0_129 = arith.constant 0 : index
    %196 = vector.load %arg9[%c0_127, %c0_128, %c0_129] : memref<2x8x32xf32, #tpu.memory_space<vmem>>, vector<1x8x32xf32>
    %197 = vector.shape_cast %196 : vector<1x8x32xf32> to vector<8x32xf32>
    %198 = arith.mulf %192, %197 : vector<8x32xf32>
    %199 = arith.mulf %191, %195 : vector<8x32xf32>
    %200 = arith.addf %198, %199 : vector<8x32xf32>
    %201 = math.tanh %200 : vector<8x32xf32>
    %202 = arith.mulf %193, %201 : vector<8x32xf32>
    %c0_130 = arith.constant 0 : index
    %c0_131 = arith.constant 0 : index
    %c0_132 = arith.constant 0 : index
    %203 = vector.load %arg9[%c0_130, %c0_131, %c0_132] : memref<2x8x32xf32, #tpu.memory_space<vmem>>, vector<1x8x32xf32>
    %204 = vector.shape_cast %203 : vector<1x8x32xf32> to vector<8x32xf32>
    %205 = vector.shape_cast %200 : vector<8x32xf32> to vector<1x8x32xf32>
    tpu.vector_store %arg9[%c0_130, %c0_131, %c0_132], %205 {strides = array<i32>} : memref<2x8x32xf32, #tpu.memory_space<vmem>>, vector<1x8x32xf32>,
    %c0_133 = arith.constant 0 : index
    %c0_134 = arith.constant 0 : index
    %c0_135 = arith.constant 0 : index
    %206 = vector.load %arg8[%c0_133, %c0_134, %c0_135] : memref<2x8x32xf32, #tpu.memory_space<vmem>>, vector<1x8x32xf32>
    %207 = vector.shape_cast %206 : vector<1x8x32xf32> to vector<8x32xf32>
    %208 = vector.shape_cast %202 : vector<8x32xf32> to vector<1x8x32xf32>
    tpu.vector_store %arg8[%c0_133, %c0_134, %c0_135], %208 {strides = array<i32>} : memref<2x8x32xf32, #tpu.memory_space<vmem>>, vector<1x8x32xf32>,
    %c40_136 = arith.constant 40 : index
    %c0_137 = arith.constant 0 : index
    %209 = vector.load %arg6[%c40_136, %c0_137] : memref<64x32xf32, #tpu.memory_space<vmem>>, vector<8x32xf32>
    tpu.vector_store %arg6[%c40_136, %c0_137], %202 {strides = array<i32>} : memref<64x32xf32, #tpu.memory_space<vmem>>, vector<8x32xf32>,
    %c48 = arith.constant 48 : index
    %c0_138 = arith.constant 0 : index
    %210 = vector.load %arg10[%c48, %c0_138] : memref<64x128xf32, #tpu.memory_space<vmem>>, vector<8x128xf32>
    %c0_139 = arith.constant 0 : index
    %c0_140 = arith.constant 0 : index
    %c0_141 = arith.constant 0 : index
    %211 = vector.load %arg8[%c0_139, %c0_140, %c0_141] : memref<2x8x32xf32, #tpu.memory_space<vmem>>, vector<1x8x32xf32>
    %212 = vector.shape_cast %211 : vector<1x8x32xf32> to vector<8x32xf32>
    %c0_142 = arith.constant 0 : index
    %c0_143 = arith.constant 0 : index
    %c0_144 = arith.constant 0 : index
    %213 = vector.load %arg4[%c0_142, %c0_143, %c0_144] : memref<2x32x128xf32, #tpu.memory_space<vmem>>, vector<1x32x128xf32>
    %214 = vector.shape_cast %213 : vector<1x32x128xf32> to vector<32x128xf32>
    %cst_145 = arith.constant dense<0.000000e+00> : vector<8x128xf32>
    %215 = tpu.matmul %212, %214, %cst_145 {dimension_numbers = #tpu.dot_dimension_numbers<[1], [0], [0], [1], [0, 0, 1, 1], [], []>} : vector<8x32xf32>, vector<32x128xf32>, vector<8x128xf32> -> vector<8x128xf32>
    %216 = arith.addf %210, %215 : vector<8x128xf32>
    %217 = vector.extract_strided_slice %216 {offsets = [0, 0], sizes = [8, 96], strides = [1, 1]} : vector<8x128xf32> to vector<8x96xf32>
    %cst_146 = arith.constant 0.000000e+00 : f32
    %218 = vector.broadcast %cst_146 : f32 to vector<8x96xf32>
    %219 = arith.subf %218, %217 : vector<8x96xf32>
    %220 = math.exp %219 : vector<8x96xf32>
    %cst_147 = arith.constant 1.000000e+00 : f32
    %221 = vector.broadcast %cst_147 : f32 to vector<8x96xf32>
    %222 = arith.addf %221, %220 : vector<8x96xf32>
    %223 = tpu.reciprocal %222 {approx = true} : vector<8x96xf32> -> vector<8x96xf32>
    %224 = vector.extract_strided_slice %223 {offsets = [0, 0], sizes = [8, 32], strides = [1, 1]} : vector<8x96xf32> to vector<8x32xf32>
    %225 = vector.extract_strided_slice %223 {offsets = [0, 32], sizes = [8, 32], strides = [1, 1]} : vector<8x96xf32> to vector<8x32xf32>
    %226 = vector.extract_strided_slice %223 {offsets = [0, 64], sizes = [8, 32], strides = [1, 1]} : vector<8x96xf32> to vector<8x32xf32>
    %227 = vector.extract_strided_slice %216 {offsets = [0, 96], sizes = [8, 32], strides = [1, 1]} : vector<8x128xf32> to vector<8x32xf32>
    %228 = math.tanh %227 : vector<8x32xf32>
    %c0_148 = arith.constant 0 : index
    %c0_149 = arith.constant 0 : index
    %c0_150 = arith.constant 0 : index
    %229 = vector.load %arg9[%c0_148, %c0_149, %c0_150] : memref<2x8x32xf32, #tpu.memory_space<vmem>>, vector<1x8x32xf32>
    %230 = vector.shape_cast %229 : vector<1x8x32xf32> to vector<8x32xf32>
    %231 = arith.mulf %225, %230 : vector<8x32xf32>
    %232 = arith.mulf %224, %228 : vector<8x32xf32>
    %233 = arith.addf %231, %232 : vector<8x32xf32>
    %234 = math.tanh %233 : vector<8x32xf32>
    %235 = arith.mulf %226, %234 : vector<8x32xf32>
    %c0_151 = arith.constant 0 : index
    %c0_152 = arith.constant 0 : index
    %c0_153 = arith.constant 0 : index
    %236 = vector.load %arg9[%c0_151, %c0_152, %c0_153] : memref<2x8x32xf32, #tpu.memory_space<vmem>>, vector<1x8x32xf32>
    %237 = vector.shape_cast %236 : vector<1x8x32xf32> to vector<8x32xf32>
    %238 = vector.shape_cast %233 : vector<8x32xf32> to vector<1x8x32xf32>
    tpu.vector_store %arg9[%c0_151, %c0_152, %c0_153], %238 {strides = array<i32>} : memref<2x8x32xf32, #tpu.memory_space<vmem>>, vector<1x8x32xf32>,
    %c0_154 = arith.constant 0 : index
    %c0_155 = arith.constant 0 : index
    %c0_156 = arith.constant 0 : index
    %239 = vector.load %arg8[%c0_154, %c0_155, %c0_156] : memref<2x8x32xf32, #tpu.memory_space<vmem>>, vector<1x8x32xf32>
    %240 = vector.shape_cast %239 : vector<1x8x32xf32> to vector<8x32xf32>
    %241 = vector.shape_cast %235 : vector<8x32xf32> to vector<1x8x32xf32>
    tpu.vector_store %arg8[%c0_154, %c0_155, %c0_156], %241 {strides = array<i32>} : memref<2x8x32xf32, #tpu.memory_space<vmem>>, vector<1x8x32xf32>,
    %c48_157 = arith.constant 48 : index
    %c0_158 = arith.constant 0 : index
    %242 = vector.load %arg6[%c48_157, %c0_158] : memref<64x32xf32, #tpu.memory_space<vmem>>, vector<8x32xf32>
    tpu.vector_store %arg6[%c48_157, %c0_158], %235 {strides = array<i32>} : memref<64x32xf32, #tpu.memory_space<vmem>>, vector<8x32xf32>,
    %c56 = arith.constant 56 : index
    %c0_159 = arith.constant 0 : index
    %243 = vector.load %arg10[%c56, %c0_159] : memref<64x128xf32, #tpu.memory_space<vmem>>, vector<8x128xf32>
    %c0_160 = arith.constant 0 : index
    %c0_161 = arith.constant 0 : index
    %c0_162 = arith.constant 0 : index
    %244 = vector.load %arg8[%c0_160, %c0_161, %c0_162] : memref<2x8x32xf32, #tpu.memory_space<vmem>>, vector<1x8x32xf32>
    %245 = vector.shape_cast %244 : vector<1x8x32xf32> to vector<8x32xf32>
    %c0_163 = arith.constant 0 : index
    %c0_164 = arith.constant 0 : index
    %c0_165 = arith.constant 0 : index
    %246 = vector.load %arg4[%c0_163, %c0_164, %c0_165] : memref<2x32x128xf32, #tpu.memory_space<vmem>>, vector<1x32x128xf32>
    %247 = vector.shape_cast %246 : vector<1x32x128xf32> to vector<32x128xf32>
    %cst_166 = arith.constant dense<0.000000e+00> : vector<8x128xf32>
    %248 = tpu.matmul %245, %247, %cst_166 {dimension_numbers = #tpu.dot_dimension_numbers<[1], [0], [0], [1], [0, 0, 1, 1], [], []>} : vector<8x32xf32>, vector<32x128xf32>, vector<8x128xf32> -> vector<8x128xf32>
    %249 = arith.addf %243, %248 : vector<8x128xf32>
    %250 = vector.extract_strided_slice %249 {offsets = [0, 0], sizes = [8, 96], strides = [1, 1]} : vector<8x128xf32> to vector<8x96xf32>
    %cst_167 = arith.constant 0.000000e+00 : f32
    %251 = vector.broadcast %cst_167 : f32 to vector<8x96xf32>
    %252 = arith.subf %251, %250 : vector<8x96xf32>
    %253 = math.exp %252 : vector<8x96xf32>
    %cst_168 = arith.constant 1.000000e+00 : f32
    %254 = vector.broadcast %cst_168 : f32 to vector<8x96xf32>
    %255 = arith.addf %254, %253 : vector<8x96xf32>
    %256 = tpu.reciprocal %255 {approx = true} : vector<8x96xf32> -> vector<8x96xf32>
    %257 = vector.extract_strided_slice %256 {offsets = [0, 0], sizes = [8, 32], strides = [1, 1]} : vector<8x96xf32> to vector<8x32xf32>
    %258 = vector.extract_strided_slice %256 {offsets = [0, 32], sizes = [8, 32], strides = [1, 1]} : vector<8x96xf32> to vector<8x32xf32>
    %259 = vector.extract_strided_slice %256 {offsets = [0, 64], sizes = [8, 32], strides = [1, 1]} : vector<8x96xf32> to vector<8x32xf32>
    %260 = vector.extract_strided_slice %249 {offsets = [0, 96], sizes = [8, 32], strides = [1, 1]} : vector<8x128xf32> to vector<8x32xf32>
    %261 = math.tanh %260 : vector<8x32xf32>
    %c0_169 = arith.constant 0 : index
    %c0_170 = arith.constant 0 : index
    %c0_171 = arith.constant 0 : index
    %262 = vector.load %arg9[%c0_169, %c0_170, %c0_171] : memref<2x8x32xf32, #tpu.memory_space<vmem>>, vector<1x8x32xf32>
    %263 = vector.shape_cast %262 : vector<1x8x32xf32> to vector<8x32xf32>
    %264 = arith.mulf %258, %263 : vector<8x32xf32>
    %265 = arith.mulf %257, %261 : vector<8x32xf32>
    %266 = arith.addf %264, %265 : vector<8x32xf32>
    %267 = math.tanh %266 : vector<8x32xf32>
    %268 = arith.mulf %259, %267 : vector<8x32xf32>
    %c0_172 = arith.constant 0 : index
    %c0_173 = arith.constant 0 : index
    %c0_174 = arith.constant 0 : index
    %269 = vector.load %arg9[%c0_172, %c0_173, %c0_174] : memref<2x8x32xf32, #tpu.memory_space<vmem>>, vector<1x8x32xf32>
    %270 = vector.shape_cast %269 : vector<1x8x32xf32> to vector<8x32xf32>
    %271 = vector.shape_cast %266 : vector<8x32xf32> to vector<1x8x32xf32>
    tpu.vector_store %arg9[%c0_172, %c0_173, %c0_174], %271 {strides = array<i32>} : memref<2x8x32xf32, #tpu.memory_space<vmem>>, vector<1x8x32xf32>,
    %c0_175 = arith.constant 0 : index
    %c0_176 = arith.constant 0 : index
    %c0_177 = arith.constant 0 : index
    %272 = vector.load %arg8[%c0_175, %c0_176, %c0_177] : memref<2x8x32xf32, #tpu.memory_space<vmem>>, vector<1x8x32xf32>
    %273 = vector.shape_cast %272 : vector<1x8x32xf32> to vector<8x32xf32>
    %274 = vector.shape_cast %268 : vector<8x32xf32> to vector<1x8x32xf32>
    tpu.vector_store %arg8[%c0_175, %c0_176, %c0_177], %274 {strides = array<i32>} : memref<2x8x32xf32, #tpu.memory_space<vmem>>, vector<1x8x32xf32>,
    %c56_178 = arith.constant 56 : index
    %c0_179 = arith.constant 0 : index
    %275 = vector.load %arg6[%c56_178, %c0_179] : memref<64x32xf32, #tpu.memory_space<vmem>>, vector<8x32xf32>
    tpu.vector_store %arg6[%c56_178, %c0_179], %268 {strides = array<i32>} : memref<64x32xf32, #tpu.memory_space<vmem>>, vector<8x32xf32>,
    %c0_180 = arith.constant 0 : index
    %c0_181 = arith.constant 0 : index
    %276 = vector.load %arg2[%c0_180, %c0_181] : memref<64x8xf32, #tpu.memory_space<vmem>>, vector<64x8xf32>
    %c1 = arith.constant 1 : index
    %c0_182 = arith.constant 0 : index
    %c0_183 = arith.constant 0 : index
    %c0_184 = arith.constant 0 : index
    %277 = vector.load %arg3[%c1, %c0_182, %c0_183, %c0_184] : memref<2x1x8x128xf32, #tpu.memory_space<vmem>>, vector<1x1x8x128xf32>
    %278 = vector.shape_cast %277 : vector<1x1x8x128xf32> to vector<8x128xf32>
    %cst_185 = arith.constant dense<0.000000e+00> : vector<64x128xf32>
    %279 = tpu.matmul %276, %278, %cst_185 {dimension_numbers = #tpu.dot_dimension_numbers<[1], [0], [0], [1], [0, 0, 1, 1], [], []>} : vector<64x8xf32>, vector<8x128xf32>, vector<64x128xf32> -> vector<64x128xf32>
    %c1_186 = arith.constant 1 : index
    %c0_187 = arith.constant 0 : index
    %c0_188 = arith.constant 0 : index
    %280 = vector.load %arg5[%c1_186, %c0_187, %c0_188] : memref<2x1x128xf32, #tpu.memory_space<vmem>>, vector<1x1x128xf32>
    %281 = vector.shape_cast %280 : vector<1x1x128xf32> to vector<1x128xf32>
    %282 = vector.broadcast %281 : vector<1x128xf32> to vector<64x128xf32>
    %283 = arith.addf %279, %282 : vector<64x128xf32>
    %c0_189 = arith.constant 0 : index
    %c0_190 = arith.constant 0 : index
    %284 = vector.load %arg10[%c0_189, %c0_190] : memref<64x128xf32, #tpu.memory_space<vmem>>, vector<64x128xf32>
    tpu.vector_store %arg10[%c0_189, %c0_190], %283 {strides = array<i32>} : memref<64x128xf32, #tpu.memory_space<vmem>>, vector<64x128xf32>,
    %c56_191 = arith.constant 56 : index
    %c0_192 = arith.constant 0 : index
    %285 = vector.load %arg10[%c56_191, %c0_192] : memref<64x128xf32, #tpu.memory_space<vmem>>, vector<8x128xf32>
    %c1_193 = arith.constant 1 : index
    %c0_194 = arith.constant 0 : index
    %c0_195 = arith.constant 0 : index
    %286 = vector.load %arg8[%c1_193, %c0_194, %c0_195] : memref<2x8x32xf32, #tpu.memory_space<vmem>>, vector<1x8x32xf32>
    %287 = vector.shape_cast %286 : vector<1x8x32xf32> to vector<8x32xf32>
    %c1_196 = arith.constant 1 : index
    %c0_197 = arith.constant 0 : index
    %c0_198 = arith.constant 0 : index
    %288 = vector.load %arg4[%c1_196, %c0_197, %c0_198] : memref<2x32x128xf32, #tpu.memory_space<vmem>>, vector<1x32x128xf32>
    %289 = vector.shape_cast %288 : vector<1x32x128xf32> to vector<32x128xf32>
    %cst_199 = arith.constant dense<0.000000e+00> : vector<8x128xf32>
    %290 = tpu.matmul %287, %289, %cst_199 {dimension_numbers = #tpu.dot_dimension_numbers<[1], [0], [0], [1], [0, 0, 1, 1], [], []>} : vector<8x32xf32>, vector<32x128xf32>, vector<8x128xf32> -> vector<8x128xf32>
    %291 = arith.addf %285, %290 : vector<8x128xf32>
    %292 = vector.extract_strided_slice %291 {offsets = [0, 0], sizes = [8, 96], strides = [1, 1]} : vector<8x128xf32> to vector<8x96xf32>
    %cst_200 = arith.constant 0.000000e+00 : f32
    %293 = vector.broadcast %cst_200 : f32 to vector<8x96xf32>
    %294 = arith.subf %293, %292 : vector<8x96xf32>
    %295 = math.exp %294 : vector<8x96xf32>
    %cst_201 = arith.constant 1.000000e+00 : f32
    %296 = vector.broadcast %cst_201 : f32 to vector<8x96xf32>
    %297 = arith.addf %296, %295 : vector<8x96xf32>
    %298 = tpu.reciprocal %297 {approx = true} : vector<8x96xf32> -> vector<8x96xf32>
    %299 = vector.extract_strided_slice %298 {offsets = [0, 0], sizes = [8, 32], strides = [1, 1]} : vector<8x96xf32> to vector<8x32xf32>
    %300 = vector.extract_strided_slice %298 {offsets = [0, 32], sizes = [8, 32], strides = [1, 1]} : vector<8x96xf32> to vector<8x32xf32>
    %301 = vector.extract_strided_slice %298 {offsets = [0, 64], sizes = [8, 32], strides = [1, 1]} : vector<8x96xf32> to vector<8x32xf32>
    %302 = vector.extract_strided_slice %291 {offsets = [0, 96], sizes = [8, 32], strides = [1, 1]} : vector<8x128xf32> to vector<8x32xf32>
    %303 = math.tanh %302 : vector<8x32xf32>
    %c1_202 = arith.constant 1 : index
    %c0_203 = arith.constant 0 : index
    %c0_204 = arith.constant 0 : index
    %304 = vector.load %arg9[%c1_202, %c0_203, %c0_204] : memref<2x8x32xf32, #tpu.memory_space<vmem>>, vector<1x8x32xf32>
    %305 = vector.shape_cast %304 : vector<1x8x32xf32> to vector<8x32xf32>
    %306 = arith.mulf %300, %305 : vector<8x32xf32>
    %307 = arith.mulf %299, %303 : vector<8x32xf32>
    %308 = arith.addf %306, %307 : vector<8x32xf32>
    %309 = math.tanh %308 : vector<8x32xf32>
    %310 = arith.mulf %301, %309 : vector<8x32xf32>
    %c1_205 = arith.constant 1 : index
    %c0_206 = arith.constant 0 : index
    %c0_207 = arith.constant 0 : index
    %311 = vector.load %arg9[%c1_205, %c0_206, %c0_207] : memref<2x8x32xf32, #tpu.memory_space<vmem>>, vector<1x8x32xf32>
    %312 = vector.shape_cast %311 : vector<1x8x32xf32> to vector<8x32xf32>
    %313 = vector.shape_cast %308 : vector<8x32xf32> to vector<1x8x32xf32>
    tpu.vector_store %arg9[%c1_205, %c0_206, %c0_207], %313 {strides = array<i32>} : memref<2x8x32xf32, #tpu.memory_space<vmem>>, vector<1x8x32xf32>,
    %c1_208 = arith.constant 1 : index
    %c0_209 = arith.constant 0 : index
    %c0_210 = arith.constant 0 : index
    %314 = vector.load %arg8[%c1_208, %c0_209, %c0_210] : memref<2x8x32xf32, #tpu.memory_space<vmem>>, vector<1x8x32xf32>
    %315 = vector.shape_cast %314 : vector<1x8x32xf32> to vector<8x32xf32>
    %316 = vector.shape_cast %310 : vector<8x32xf32> to vector<1x8x32xf32>
    tpu.vector_store %arg8[%c1_208, %c0_209, %c0_210], %316 {strides = array<i32>} : memref<2x8x32xf32, #tpu.memory_space<vmem>>, vector<1x8x32xf32>,
    %c56_211 = arith.constant 56 : index
    %c0_212 = arith.constant 0 : index
    %317 = vector.load %arg7[%c56_211, %c0_212] : memref<64x32xf32, #tpu.memory_space<vmem>>, vector<8x32xf32>
    tpu.vector_store %arg7[%c56_211, %c0_212], %310 {strides = array<i32>} : memref<64x32xf32, #tpu.memory_space<vmem>>, vector<8x32xf32>,
    %c48_213 = arith.constant 48 : index
    %c0_214 = arith.constant 0 : index
    %318 = vector.load %arg10[%c48_213, %c0_214] : memref<64x128xf32, #tpu.memory_space<vmem>>, vector<8x128xf32>
    %c1_215 = arith.constant 1 : index
    %c0_216 = arith.constant 0 : index
    %c0_217 = arith.constant 0 : index
    %319 = vector.load %arg8[%c1_215, %c0_216, %c0_217] : memref<2x8x32xf32, #tpu.memory_space<vmem>>, vector<1x8x32xf32>
    %320 = vector.shape_cast %319 : vector<1x8x32xf32> to vector<8x32xf32>
    %c1_218 = arith.constant 1 : index
    %c0_219 = arith.constant 0 : index
    %c0_220 = arith.constant 0 : index
    %321 = vector.load %arg4[%c1_218, %c0_219, %c0_220] : memref<2x32x128xf32, #tpu.memory_space<vmem>>, vector<1x32x128xf32>
    %322 = vector.shape_cast %321 : vector<1x32x128xf32> to vector<32x128xf32>
    %cst_221 = arith.constant dense<0.000000e+00> : vector<8x128xf32>
    %323 = tpu.matmul %320, %322, %cst_221 {dimension_numbers = #tpu.dot_dimension_numbers<[1], [0], [0], [1], [0, 0, 1, 1], [], []>} : vector<8x32xf32>, vector<32x128xf32>, vector<8x128xf32> -> vector<8x128xf32>
    %324 = arith.addf %318, %323 : vector<8x128xf32>
    %325 = vector.extract_strided_slice %324 {offsets = [0, 0], sizes = [8, 96], strides = [1, 1]} : vector<8x128xf32> to vector<8x96xf32>
    %cst_222 = arith.constant 0.000000e+00 : f32
    %326 = vector.broadcast %cst_222 : f32 to vector<8x96xf32>
    %327 = arith.subf %326, %325 : vector<8x96xf32>
    %328 = math.exp %327 : vector<8x96xf32>
    %cst_223 = arith.constant 1.000000e+00 : f32
    %329 = vector.broadcast %cst_223 : f32 to vector<8x96xf32>
    %330 = arith.addf %329, %328 : vector<8x96xf32>
    %331 = tpu.reciprocal %330 {approx = true} : vector<8x96xf32> -> vector<8x96xf32>
    %332 = vector.extract_strided_slice %331 {offsets = [0, 0], sizes = [8, 32], strides = [1, 1]} : vector<8x96xf32> to vector<8x32xf32>
    %333 = vector.extract_strided_slice %331 {offsets = [0, 32], sizes = [8, 32], strides = [1, 1]} : vector<8x96xf32> to vector<8x32xf32>
    %334 = vector.extract_strided_slice %331 {offsets = [0, 64], sizes = [8, 32], strides = [1, 1]} : vector<8x96xf32> to vector<8x32xf32>
    %335 = vector.extract_strided_slice %324 {offsets = [0, 96], sizes = [8, 32], strides = [1, 1]} : vector<8x128xf32> to vector<8x32xf32>
    %336 = math.tanh %335 : vector<8x32xf32>
    %c1_224 = arith.constant 1 : index
    %c0_225 = arith.constant 0 : index
    %c0_226 = arith.constant 0 : index
    %337 = vector.load %arg9[%c1_224, %c0_225, %c0_226] : memref<2x8x32xf32, #tpu.memory_space<vmem>>, vector<1x8x32xf32>
    %338 = vector.shape_cast %337 : vector<1x8x32xf32> to vector<8x32xf32>
    %339 = arith.mulf %333, %338 : vector<8x32xf32>
    %340 = arith.mulf %332, %336 : vector<8x32xf32>
    %341 = arith.addf %339, %340 : vector<8x32xf32>
    %342 = math.tanh %341 : vector<8x32xf32>
    %343 = arith.mulf %334, %342 : vector<8x32xf32>
    %c1_227 = arith.constant 1 : index
    %c0_228 = arith.constant 0 : index
    %c0_229 = arith.constant 0 : index
    %344 = vector.load %arg9[%c1_227, %c0_228, %c0_229] : memref<2x8x32xf32, #tpu.memory_space<vmem>>, vector<1x8x32xf32>
    %345 = vector.shape_cast %344 : vector<1x8x32xf32> to vector<8x32xf32>
    %346 = vector.shape_cast %341 : vector<8x32xf32> to vector<1x8x32xf32>
    tpu.vector_store %arg9[%c1_227, %c0_228, %c0_229], %346 {strides = array<i32>} : memref<2x8x32xf32, #tpu.memory_space<vmem>>, vector<1x8x32xf32>,
    %c1_230 = arith.constant 1 : index
    %c0_231 = arith.constant 0 : index
    %c0_232 = arith.constant 0 : index
    %347 = vector.load %arg8[%c1_230, %c0_231, %c0_232] : memref<2x8x32xf32, #tpu.memory_space<vmem>>, vector<1x8x32xf32>
    %348 = vector.shape_cast %347 : vector<1x8x32xf32> to vector<8x32xf32>
    %349 = vector.shape_cast %343 : vector<8x32xf32> to vector<1x8x32xf32>
    tpu.vector_store %arg8[%c1_230, %c0_231, %c0_232], %349 {strides = array<i32>} : memref<2x8x32xf32, #tpu.memory_space<vmem>>, vector<1x8x32xf32>,
    %c48_233 = arith.constant 48 : index
    %c0_234 = arith.constant 0 : index
    %350 = vector.load %arg7[%c48_233, %c0_234] : memref<64x32xf32, #tpu.memory_space<vmem>>, vector<8x32xf32>
    tpu.vector_store %arg7[%c48_233, %c0_234], %343 {strides = array<i32>} : memref<64x32xf32, #tpu.memory_space<vmem>>, vector<8x32xf32>,
    %c40_235 = arith.constant 40 : index
    %c0_236 = arith.constant 0 : index
    %351 = vector.load %arg10[%c40_235, %c0_236] : memref<64x128xf32, #tpu.memory_space<vmem>>, vector<8x128xf32>
    %c1_237 = arith.constant 1 : index
    %c0_238 = arith.constant 0 : index
    %c0_239 = arith.constant 0 : index
    %352 = vector.load %arg8[%c1_237, %c0_238, %c0_239] : memref<2x8x32xf32, #tpu.memory_space<vmem>>, vector<1x8x32xf32>
    %353 = vector.shape_cast %352 : vector<1x8x32xf32> to vector<8x32xf32>
    %c1_240 = arith.constant 1 : index
    %c0_241 = arith.constant 0 : index
    %c0_242 = arith.constant 0 : index
    %354 = vector.load %arg4[%c1_240, %c0_241, %c0_242] : memref<2x32x128xf32, #tpu.memory_space<vmem>>, vector<1x32x128xf32>
    %355 = vector.shape_cast %354 : vector<1x32x128xf32> to vector<32x128xf32>
    %cst_243 = arith.constant dense<0.000000e+00> : vector<8x128xf32>
    %356 = tpu.matmul %353, %355, %cst_243 {dimension_numbers = #tpu.dot_dimension_numbers<[1], [0], [0], [1], [0, 0, 1, 1], [], []>} : vector<8x32xf32>, vector<32x128xf32>, vector<8x128xf32> -> vector<8x128xf32>
    %357 = arith.addf %351, %356 : vector<8x128xf32>
    %358 = vector.extract_strided_slice %357 {offsets = [0, 0], sizes = [8, 96], strides = [1, 1]} : vector<8x128xf32> to vector<8x96xf32>
    %cst_244 = arith.constant 0.000000e+00 : f32
    %359 = vector.broadcast %cst_244 : f32 to vector<8x96xf32>
    %360 = arith.subf %359, %358 : vector<8x96xf32>
    %361 = math.exp %360 : vector<8x96xf32>
    %cst_245 = arith.constant 1.000000e+00 : f32
    %362 = vector.broadcast %cst_245 : f32 to vector<8x96xf32>
    %363 = arith.addf %362, %361 : vector<8x96xf32>
    %364 = tpu.reciprocal %363 {approx = true} : vector<8x96xf32> -> vector<8x96xf32>
    %365 = vector.extract_strided_slice %364 {offsets = [0, 0], sizes = [8, 32], strides = [1, 1]} : vector<8x96xf32> to vector<8x32xf32>
    %366 = vector.extract_strided_slice %364 {offsets = [0, 32], sizes = [8, 32], strides = [1, 1]} : vector<8x96xf32> to vector<8x32xf32>
    %367 = vector.extract_strided_slice %364 {offsets = [0, 64], sizes = [8, 32], strides = [1, 1]} : vector<8x96xf32> to vector<8x32xf32>
    %368 = vector.extract_strided_slice %357 {offsets = [0, 96], sizes = [8, 32], strides = [1, 1]} : vector<8x128xf32> to vector<8x32xf32>
    %369 = math.tanh %368 : vector<8x32xf32>
    %c1_246 = arith.constant 1 : index
    %c0_247 = arith.constant 0 : index
    %c0_248 = arith.constant 0 : index
    %370 = vector.load %arg9[%c1_246, %c0_247, %c0_248] : memref<2x8x32xf32, #tpu.memory_space<vmem>>, vector<1x8x32xf32>
    %371 = vector.shape_cast %370 : vector<1x8x32xf32> to vector<8x32xf32>
    %372 = arith.mulf %366, %371 : vector<8x32xf32>
    %373 = arith.mulf %365, %369 : vector<8x32xf32>
    %374 = arith.addf %372, %373 : vector<8x32xf32>
    %375 = math.tanh %374 : vector<8x32xf32>
    %376 = arith.mulf %367, %375 : vector<8x32xf32>
    %c1_249 = arith.constant 1 : index
    %c0_250 = arith.constant 0 : index
    %c0_251 = arith.constant 0 : index
    %377 = vector.load %arg9[%c1_249, %c0_250, %c0_251] : memref<2x8x32xf32, #tpu.memory_space<vmem>>, vector<1x8x32xf32>
    %378 = vector.shape_cast %377 : vector<1x8x32xf32> to vector<8x32xf32>
    %379 = vector.shape_cast %374 : vector<8x32xf32> to vector<1x8x32xf32>
    tpu.vector_store %arg9[%c1_249, %c0_250, %c0_251], %379 {strides = array<i32>} : memref<2x8x32xf32, #tpu.memory_space<vmem>>, vector<1x8x32xf32>,
    %c1_252 = arith.constant 1 : index
    %c0_253 = arith.constant 0 : index
    %c0_254 = arith.constant 0 : index
    %380 = vector.load %arg8[%c1_252, %c0_253, %c0_254] : memref<2x8x32xf32, #tpu.memory_space<vmem>>, vector<1x8x32xf32>
    %381 = vector.shape_cast %380 : vector<1x8x32xf32> to vector<8x32xf32>
    %382 = vector.shape_cast %376 : vector<8x32xf32> to vector<1x8x32xf32>
    tpu.vector_store %arg8[%c1_252, %c0_253, %c0_254], %382 {strides = array<i32>} : memref<2x8x32xf32, #tpu.memory_space<vmem>>, vector<1x8x32xf32>,
    %c40_255 = arith.constant 40 : index
    %c0_256 = arith.constant 0 : index
    %383 = vector.load %arg7[%c40_255, %c0_256] : memref<64x32xf32, #tpu.memory_space<vmem>>, vector<8x32xf32>
    tpu.vector_store %arg7[%c40_255, %c0_256], %376 {strides = array<i32>} : memref<64x32xf32, #tpu.memory_space<vmem>>, vector<8x32xf32>,
    %c32_257 = arith.constant 32 : index
    %c0_258 = arith.constant 0 : index
    %384 = vector.load %arg10[%c32_257, %c0_258] : memref<64x128xf32, #tpu.memory_space<vmem>>, vector<8x128xf32>
    %c1_259 = arith.constant 1 : index
    %c0_260 = arith.constant 0 : index
    %c0_261 = arith.constant 0 : index
    %385 = vector.load %arg8[%c1_259, %c0_260, %c0_261] : memref<2x8x32xf32, #tpu.memory_space<vmem>>, vector<1x8x32xf32>
    %386 = vector.shape_cast %385 : vector<1x8x32xf32> to vector<8x32xf32>
    %c1_262 = arith.constant 1 : index
    %c0_263 = arith.constant 0 : index
    %c0_264 = arith.constant 0 : index
    %387 = vector.load %arg4[%c1_262, %c0_263, %c0_264] : memref<2x32x128xf32, #tpu.memory_space<vmem>>, vector<1x32x128xf32>
    %388 = vector.shape_cast %387 : vector<1x32x128xf32> to vector<32x128xf32>
    %cst_265 = arith.constant dense<0.000000e+00> : vector<8x128xf32>
    %389 = tpu.matmul %386, %388, %cst_265 {dimension_numbers = #tpu.dot_dimension_numbers<[1], [0], [0], [1], [0, 0, 1, 1], [], []>} : vector<8x32xf32>, vector<32x128xf32>, vector<8x128xf32> -> vector<8x128xf32>
    %390 = arith.addf %384, %389 : vector<8x128xf32>
    %391 = vector.extract_strided_slice %390 {offsets = [0, 0], sizes = [8, 96], strides = [1, 1]} : vector<8x128xf32> to vector<8x96xf32>
    %cst_266 = arith.constant 0.000000e+00 : f32
    %392 = vector.broadcast %cst_266 : f32 to vector<8x96xf32>
    %393 = arith.subf %392, %391 : vector<8x96xf32>
    %394 = math.exp %393 : vector<8x96xf32>
    %cst_267 = arith.constant 1.000000e+00 : f32
    %395 = vector.broadcast %cst_267 : f32 to vector<8x96xf32>
    %396 = arith.addf %395, %394 : vector<8x96xf32>
    %397 = tpu.reciprocal %396 {approx = true} : vector<8x96xf32> -> vector<8x96xf32>
    %398 = vector.extract_strided_slice %397 {offsets = [0, 0], sizes = [8, 32], strides = [1, 1]} : vector<8x96xf32> to vector<8x32xf32>
    %399 = vector.extract_strided_slice %397 {offsets = [0, 32], sizes = [8, 32], strides = [1, 1]} : vector<8x96xf32> to vector<8x32xf32>
    %400 = vector.extract_strided_slice %397 {offsets = [0, 64], sizes = [8, 32], strides = [1, 1]} : vector<8x96xf32> to vector<8x32xf32>
    %401 = vector.extract_strided_slice %390 {offsets = [0, 96], sizes = [8, 32], strides = [1, 1]} : vector<8x128xf32> to vector<8x32xf32>
    %402 = math.tanh %401 : vector<8x32xf32>
    %c1_268 = arith.constant 1 : index
    %c0_269 = arith.constant 0 : index
    %c0_270 = arith.constant 0 : index
    %403 = vector.load %arg9[%c1_268, %c0_269, %c0_270] : memref<2x8x32xf32, #tpu.memory_space<vmem>>, vector<1x8x32xf32>
    %404 = vector.shape_cast %403 : vector<1x8x32xf32> to vector<8x32xf32>
    %405 = arith.mulf %399, %404 : vector<8x32xf32>
    %406 = arith.mulf %398, %402 : vector<8x32xf32>
    %407 = arith.addf %405, %406 : vector<8x32xf32>
    %408 = math.tanh %407 : vector<8x32xf32>
    %409 = arith.mulf %400, %408 : vector<8x32xf32>
    %c1_271 = arith.constant 1 : index
    %c0_272 = arith.constant 0 : index
    %c0_273 = arith.constant 0 : index
    %410 = vector.load %arg9[%c1_271, %c0_272, %c0_273] : memref<2x8x32xf32, #tpu.memory_space<vmem>>, vector<1x8x32xf32>
    %411 = vector.shape_cast %410 : vector<1x8x32xf32> to vector<8x32xf32>
    %412 = vector.shape_cast %407 : vector<8x32xf32> to vector<1x8x32xf32>
    tpu.vector_store %arg9[%c1_271, %c0_272, %c0_273], %412 {strides = array<i32>} : memref<2x8x32xf32, #tpu.memory_space<vmem>>, vector<1x8x32xf32>,
    %c1_274 = arith.constant 1 : index
    %c0_275 = arith.constant 0 : index
    %c0_276 = arith.constant 0 : index
    %413 = vector.load %arg8[%c1_274, %c0_275, %c0_276] : memref<2x8x32xf32, #tpu.memory_space<vmem>>, vector<1x8x32xf32>
    %414 = vector.shape_cast %413 : vector<1x8x32xf32> to vector<8x32xf32>
    %415 = vector.shape_cast %409 : vector<8x32xf32> to vector<1x8x32xf32>
    tpu.vector_store %arg8[%c1_274, %c0_275, %c0_276], %415 {strides = array<i32>} : memref<2x8x32xf32, #tpu.memory_space<vmem>>, vector<1x8x32xf32>,
    %c32_277 = arith.constant 32 : index
    %c0_278 = arith.constant 0 : index
    %416 = vector.load %arg7[%c32_277, %c0_278] : memref<64x32xf32, #tpu.memory_space<vmem>>, vector<8x32xf32>
    tpu.vector_store %arg7[%c32_277, %c0_278], %409 {strides = array<i32>} : memref<64x32xf32, #tpu.memory_space<vmem>>, vector<8x32xf32>,
    %c24_279 = arith.constant 24 : index
    %c0_280 = arith.constant 0 : index
    %417 = vector.load %arg10[%c24_279, %c0_280] : memref<64x128xf32, #tpu.memory_space<vmem>>, vector<8x128xf32>
    %c1_281 = arith.constant 1 : index
    %c0_282 = arith.constant 0 : index
    %c0_283 = arith.constant 0 : index
    %418 = vector.load %arg8[%c1_281, %c0_282, %c0_283] : memref<2x8x32xf32, #tpu.memory_space<vmem>>, vector<1x8x32xf32>
    %419 = vector.shape_cast %418 : vector<1x8x32xf32> to vector<8x32xf32>
    %c1_284 = arith.constant 1 : index
    %c0_285 = arith.constant 0 : index
    %c0_286 = arith.constant 0 : index
    %420 = vector.load %arg4[%c1_284, %c0_285, %c0_286] : memref<2x32x128xf32, #tpu.memory_space<vmem>>, vector<1x32x128xf32>
    %421 = vector.shape_cast %420 : vector<1x32x128xf32> to vector<32x128xf32>
    %cst_287 = arith.constant dense<0.000000e+00> : vector<8x128xf32>
    %422 = tpu.matmul %419, %421, %cst_287 {dimension_numbers = #tpu.dot_dimension_numbers<[1], [0], [0], [1], [0, 0, 1, 1], [], []>} : vector<8x32xf32>, vector<32x128xf32>, vector<8x128xf32> -> vector<8x128xf32>
    %423 = arith.addf %417, %422 : vector<8x128xf32>
    %424 = vector.extract_strided_slice %423 {offsets = [0, 0], sizes = [8, 96], strides = [1, 1]} : vector<8x128xf32> to vector<8x96xf32>
    %cst_288 = arith.constant 0.000000e+00 : f32
    %425 = vector.broadcast %cst_288 : f32 to vector<8x96xf32>
    %426 = arith.subf %425, %424 : vector<8x96xf32>
    %427 = math.exp %426 : vector<8x96xf32>
    %cst_289 = arith.constant 1.000000e+00 : f32
    %428 = vector.broadcast %cst_289 : f32 to vector<8x96xf32>
    %429 = arith.addf %428, %427 : vector<8x96xf32>
    %430 = tpu.reciprocal %429 {approx = true} : vector<8x96xf32> -> vector<8x96xf32>
    %431 = vector.extract_strided_slice %430 {offsets = [0, 0], sizes = [8, 32], strides = [1, 1]} : vector<8x96xf32> to vector<8x32xf32>
    %432 = vector.extract_strided_slice %430 {offsets = [0, 32], sizes = [8, 32], strides = [1, 1]} : vector<8x96xf32> to vector<8x32xf32>
    %433 = vector.extract_strided_slice %430 {offsets = [0, 64], sizes = [8, 32], strides = [1, 1]} : vector<8x96xf32> to vector<8x32xf32>
    %434 = vector.extract_strided_slice %423 {offsets = [0, 96], sizes = [8, 32], strides = [1, 1]} : vector<8x128xf32> to vector<8x32xf32>
    %435 = math.tanh %434 : vector<8x32xf32>
    %c1_290 = arith.constant 1 : index
    %c0_291 = arith.constant 0 : index
    %c0_292 = arith.constant 0 : index
    %436 = vector.load %arg9[%c1_290, %c0_291, %c0_292] : memref<2x8x32xf32, #tpu.memory_space<vmem>>, vector<1x8x32xf32>
    %437 = vector.shape_cast %436 : vector<1x8x32xf32> to vector<8x32xf32>
    %438 = arith.mulf %432, %437 : vector<8x32xf32>
    %439 = arith.mulf %431, %435 : vector<8x32xf32>
    %440 = arith.addf %438, %439 : vector<8x32xf32>
    %441 = math.tanh %440 : vector<8x32xf32>
    %442 = arith.mulf %433, %441 : vector<8x32xf32>
    %c1_293 = arith.constant 1 : index
    %c0_294 = arith.constant 0 : index
    %c0_295 = arith.constant 0 : index
    %443 = vector.load %arg9[%c1_293, %c0_294, %c0_295] : memref<2x8x32xf32, #tpu.memory_space<vmem>>, vector<1x8x32xf32>
    %444 = vector.shape_cast %443 : vector<1x8x32xf32> to vector<8x32xf32>
    %445 = vector.shape_cast %440 : vector<8x32xf32> to vector<1x8x32xf32>
    tpu.vector_store %arg9[%c1_293, %c0_294, %c0_295], %445 {strides = array<i32>} : memref<2x8x32xf32, #tpu.memory_space<vmem>>, vector<1x8x32xf32>,
    %c1_296 = arith.constant 1 : index
    %c0_297 = arith.constant 0 : index
    %c0_298 = arith.constant 0 : index
    %446 = vector.load %arg8[%c1_296, %c0_297, %c0_298] : memref<2x8x32xf32, #tpu.memory_space<vmem>>, vector<1x8x32xf32>
    %447 = vector.shape_cast %446 : vector<1x8x32xf32> to vector<8x32xf32>
    %448 = vector.shape_cast %442 : vector<8x32xf32> to vector<1x8x32xf32>
    tpu.vector_store %arg8[%c1_296, %c0_297, %c0_298], %448 {strides = array<i32>} : memref<2x8x32xf32, #tpu.memory_space<vmem>>, vector<1x8x32xf32>,
    %c24_299 = arith.constant 24 : index
    %c0_300 = arith.constant 0 : index
    %449 = vector.load %arg7[%c24_299, %c0_300] : memref<64x32xf32, #tpu.memory_space<vmem>>, vector<8x32xf32>
    tpu.vector_store %arg7[%c24_299, %c0_300], %442 {strides = array<i32>} : memref<64x32xf32, #tpu.memory_space<vmem>>, vector<8x32xf32>,
    %c16_301 = arith.constant 16 : index
    %c0_302 = arith.constant 0 : index
    %450 = vector.load %arg10[%c16_301, %c0_302] : memref<64x128xf32, #tpu.memory_space<vmem>>, vector<8x128xf32>
    %c1_303 = arith.constant 1 : index
    %c0_304 = arith.constant 0 : index
    %c0_305 = arith.constant 0 : index
    %451 = vector.load %arg8[%c1_303, %c0_304, %c0_305] : memref<2x8x32xf32, #tpu.memory_space<vmem>>, vector<1x8x32xf32>
    %452 = vector.shape_cast %451 : vector<1x8x32xf32> to vector<8x32xf32>
    %c1_306 = arith.constant 1 : index
    %c0_307 = arith.constant 0 : index
    %c0_308 = arith.constant 0 : index
    %453 = vector.load %arg4[%c1_306, %c0_307, %c0_308] : memref<2x32x128xf32, #tpu.memory_space<vmem>>, vector<1x32x128xf32>
    %454 = vector.shape_cast %453 : vector<1x32x128xf32> to vector<32x128xf32>
    %cst_309 = arith.constant dense<0.000000e+00> : vector<8x128xf32>
    %455 = tpu.matmul %452, %454, %cst_309 {dimension_numbers = #tpu.dot_dimension_numbers<[1], [0], [0], [1], [0, 0, 1, 1], [], []>} : vector<8x32xf32>, vector<32x128xf32>, vector<8x128xf32> -> vector<8x128xf32>
    %456 = arith.addf %450, %455 : vector<8x128xf32>
    %457 = vector.extract_strided_slice %456 {offsets = [0, 0], sizes = [8, 96], strides = [1, 1]} : vector<8x128xf32> to vector<8x96xf32>
    %cst_310 = arith.constant 0.000000e+00 : f32
    %458 = vector.broadcast %cst_310 : f32 to vector<8x96xf32>
    %459 = arith.subf %458, %457 : vector<8x96xf32>
    %460 = math.exp %459 : vector<8x96xf32>
    %cst_311 = arith.constant 1.000000e+00 : f32
    %461 = vector.broadcast %cst_311 : f32 to vector<8x96xf32>
    %462 = arith.addf %461, %460 : vector<8x96xf32>
    %463 = tpu.reciprocal %462 {approx = true} : vector<8x96xf32> -> vector<8x96xf32>
    %464 = vector.extract_strided_slice %463 {offsets = [0, 0], sizes = [8, 32], strides = [1, 1]} : vector<8x96xf32> to vector<8x32xf32>
    %465 = vector.extract_strided_slice %463 {offsets = [0, 32], sizes = [8, 32], strides = [1, 1]} : vector<8x96xf32> to vector<8x32xf32>
    %466 = vector.extract_strided_slice %463 {offsets = [0, 64], sizes = [8, 32], strides = [1, 1]} : vector<8x96xf32> to vector<8x32xf32>
    %467 = vector.extract_strided_slice %456 {offsets = [0, 96], sizes = [8, 32], strides = [1, 1]} : vector<8x128xf32> to vector<8x32xf32>
    %468 = math.tanh %467 : vector<8x32xf32>
    %c1_312 = arith.constant 1 : index
    %c0_313 = arith.constant 0 : index
    %c0_314 = arith.constant 0 : index
    %469 = vector.load %arg9[%c1_312, %c0_313, %c0_314] : memref<2x8x32xf32, #tpu.memory_space<vmem>>, vector<1x8x32xf32>
    %470 = vector.shape_cast %469 : vector<1x8x32xf32> to vector<8x32xf32>
    %471 = arith.mulf %465, %470 : vector<8x32xf32>
    %472 = arith.mulf %464, %468 : vector<8x32xf32>
    %473 = arith.addf %471, %472 : vector<8x32xf32>
    %474 = math.tanh %473 : vector<8x32xf32>
    %475 = arith.mulf %466, %474 : vector<8x32xf32>
    %c1_315 = arith.constant 1 : index
    %c0_316 = arith.constant 0 : index
    %c0_317 = arith.constant 0 : index
    %476 = vector.load %arg9[%c1_315, %c0_316, %c0_317] : memref<2x8x32xf32, #tpu.memory_space<vmem>>, vector<1x8x32xf32>
    %477 = vector.shape_cast %476 : vector<1x8x32xf32> to vector<8x32xf32>
    %478 = vector.shape_cast %473 : vector<8x32xf32> to vector<1x8x32xf32>
    tpu.vector_store %arg9[%c1_315, %c0_316, %c0_317], %478 {strides = array<i32>} : memref<2x8x32xf32, #tpu.memory_space<vmem>>, vector<1x8x32xf32>,
    %c1_318 = arith.constant 1 : index
    %c0_319 = arith.constant 0 : index
    %c0_320 = arith.constant 0 : index
    %479 = vector.load %arg8[%c1_318, %c0_319, %c0_320] : memref<2x8x32xf32, #tpu.memory_space<vmem>>, vector<1x8x32xf32>
    %480 = vector.shape_cast %479 : vector<1x8x32xf32> to vector<8x32xf32>
    %481 = vector.shape_cast %475 : vector<8x32xf32> to vector<1x8x32xf32>
    tpu.vector_store %arg8[%c1_318, %c0_319, %c0_320], %481 {strides = array<i32>} : memref<2x8x32xf32, #tpu.memory_space<vmem>>, vector<1x8x32xf32>,
    %c16_321 = arith.constant 16 : index
    %c0_322 = arith.constant 0 : index
    %482 = vector.load %arg7[%c16_321, %c0_322] : memref<64x32xf32, #tpu.memory_space<vmem>>, vector<8x32xf32>
    tpu.vector_store %arg7[%c16_321, %c0_322], %475 {strides = array<i32>} : memref<64x32xf32, #tpu.memory_space<vmem>>, vector<8x32xf32>,
    %c8_323 = arith.constant 8 : index
    %c0_324 = arith.constant 0 : index
    %483 = vector.load %arg10[%c8_323, %c0_324] : memref<64x128xf32, #tpu.memory_space<vmem>>, vector<8x128xf32>
    %c1_325 = arith.constant 1 : index
    %c0_326 = arith.constant 0 : index
    %c0_327 = arith.constant 0 : index
    %484 = vector.load %arg8[%c1_325, %c0_326, %c0_327] : memref<2x8x32xf32, #tpu.memory_space<vmem>>, vector<1x8x32xf32>
    %485 = vector.shape_cast %484 : vector<1x8x32xf32> to vector<8x32xf32>
    %c1_328 = arith.constant 1 : index
    %c0_329 = arith.constant 0 : index
    %c0_330 = arith.constant 0 : index
    %486 = vector.load %arg4[%c1_328, %c0_329, %c0_330] : memref<2x32x128xf32, #tpu.memory_space<vmem>>, vector<1x32x128xf32>
    %487 = vector.shape_cast %486 : vector<1x32x128xf32> to vector<32x128xf32>
    %cst_331 = arith.constant dense<0.000000e+00> : vector<8x128xf32>
    %488 = tpu.matmul %485, %487, %cst_331 {dimension_numbers = #tpu.dot_dimension_numbers<[1], [0], [0], [1], [0, 0, 1, 1], [], []>} : vector<8x32xf32>, vector<32x128xf32>, vector<8x128xf32> -> vector<8x128xf32>
    %489 = arith.addf %483, %488 : vector<8x128xf32>
    %490 = vector.extract_strided_slice %489 {offsets = [0, 0], sizes = [8, 96], strides = [1, 1]} : vector<8x128xf32> to vector<8x96xf32>
    %cst_332 = arith.constant 0.000000e+00 : f32
    %491 = vector.broadcast %cst_332 : f32 to vector<8x96xf32>
    %492 = arith.subf %491, %490 : vector<8x96xf32>
    %493 = math.exp %492 : vector<8x96xf32>
    %cst_333 = arith.constant 1.000000e+00 : f32
    %494 = vector.broadcast %cst_333 : f32 to vector<8x96xf32>
    %495 = arith.addf %494, %493 : vector<8x96xf32>
    %496 = tpu.reciprocal %495 {approx = true} : vector<8x96xf32> -> vector<8x96xf32>
    %497 = vector.extract_strided_slice %496 {offsets = [0, 0], sizes = [8, 32], strides = [1, 1]} : vector<8x96xf32> to vector<8x32xf32>
    %498 = vector.extract_strided_slice %496 {offsets = [0, 32], sizes = [8, 32], strides = [1, 1]} : vector<8x96xf32> to vector<8x32xf32>
    %499 = vector.extract_strided_slice %496 {offsets = [0, 64], sizes = [8, 32], strides = [1, 1]} : vector<8x96xf32> to vector<8x32xf32>
    %500 = vector.extract_strided_slice %489 {offsets = [0, 96], sizes = [8, 32], strides = [1, 1]} : vector<8x128xf32> to vector<8x32xf32>
    %501 = math.tanh %500 : vector<8x32xf32>
    %c1_334 = arith.constant 1 : index
    %c0_335 = arith.constant 0 : index
    %c0_336 = arith.constant 0 : index
    %502 = vector.load %arg9[%c1_334, %c0_335, %c0_336] : memref<2x8x32xf32, #tpu.memory_space<vmem>>, vector<1x8x32xf32>
    %503 = vector.shape_cast %502 : vector<1x8x32xf32> to vector<8x32xf32>
    %504 = arith.mulf %498, %503 : vector<8x32xf32>
    %505 = arith.mulf %497, %501 : vector<8x32xf32>
    %506 = arith.addf %504, %505 : vector<8x32xf32>
    %507 = math.tanh %506 : vector<8x32xf32>
    %508 = arith.mulf %499, %507 : vector<8x32xf32>
    %c1_337 = arith.constant 1 : index
    %c0_338 = arith.constant 0 : index
    %c0_339 = arith.constant 0 : index
    %509 = vector.load %arg9[%c1_337, %c0_338, %c0_339] : memref<2x8x32xf32, #tpu.memory_space<vmem>>, vector<1x8x32xf32>
    %510 = vector.shape_cast %509 : vector<1x8x32xf32> to vector<8x32xf32>
    %511 = vector.shape_cast %506 : vector<8x32xf32> to vector<1x8x32xf32>
    tpu.vector_store %arg9[%c1_337, %c0_338, %c0_339], %511 {strides = array<i32>} : memref<2x8x32xf32, #tpu.memory_space<vmem>>, vector<1x8x32xf32>,
    %c1_340 = arith.constant 1 : index
    %c0_341 = arith.constant 0 : index
    %c0_342 = arith.constant 0 : index
    %512 = vector.load %arg8[%c1_340, %c0_341, %c0_342] : memref<2x8x32xf32, #tpu.memory_space<vmem>>, vector<1x8x32xf32>
    %513 = vector.shape_cast %512 : vector<1x8x32xf32> to vector<8x32xf32>
    %514 = vector.shape_cast %508 : vector<8x32xf32> to vector<1x8x32xf32>
    tpu.vector_store %arg8[%c1_340, %c0_341, %c0_342], %514 {strides = array<i32>} : memref<2x8x32xf32, #tpu.memory_space<vmem>>, vector<1x8x32xf32>,
    %c8_343 = arith.constant 8 : index
    %c0_344 = arith.constant 0 : index
    %515 = vector.load %arg7[%c8_343, %c0_344] : memref<64x32xf32, #tpu.memory_space<vmem>>, vector<8x32xf32>
    tpu.vector_store %arg7[%c8_343, %c0_344], %508 {strides = array<i32>} : memref<64x32xf32, #tpu.memory_space<vmem>>, vector<8x32xf32>,
    %c0_345 = arith.constant 0 : index
    %c0_346 = arith.constant 0 : index
    %516 = vector.load %arg10[%c0_345, %c0_346] : memref<64x128xf32, #tpu.memory_space<vmem>>, vector<8x128xf32>
    %c1_347 = arith.constant 1 : index
    %c0_348 = arith.constant 0 : index
    %c0_349 = arith.constant 0 : index
    %517 = vector.load %arg8[%c1_347, %c0_348, %c0_349] : memref<2x8x32xf32, #tpu.memory_space<vmem>>, vector<1x8x32xf32>
    %518 = vector.shape_cast %517 : vector<1x8x32xf32> to vector<8x32xf32>
    %c1_350 = arith.constant 1 : index
    %c0_351 = arith.constant 0 : index
    %c0_352 = arith.constant 0 : index
    %519 = vector.load %arg4[%c1_350, %c0_351, %c0_352] : memref<2x32x128xf32, #tpu.memory_space<vmem>>, vector<1x32x128xf32>
    %520 = vector.shape_cast %519 : vector<1x32x128xf32> to vector<32x128xf32>
    %cst_353 = arith.constant dense<0.000000e+00> : vector<8x128xf32>
    %521 = tpu.matmul %518, %520, %cst_353 {dimension_numbers = #tpu.dot_dimension_numbers<[1], [0], [0], [1], [0, 0, 1, 1], [], []>} : vector<8x32xf32>, vector<32x128xf32>, vector<8x128xf32> -> vector<8x128xf32>
    %522 = arith.addf %516, %521 : vector<8x128xf32>
    %523 = vector.extract_strided_slice %522 {offsets = [0, 0], sizes = [8, 96], strides = [1, 1]} : vector<8x128xf32> to vector<8x96xf32>
    %cst_354 = arith.constant 0.000000e+00 : f32
    %524 = vector.broadcast %cst_354 : f32 to vector<8x96xf32>
    %525 = arith.subf %524, %523 : vector<8x96xf32>
    %526 = math.exp %525 : vector<8x96xf32>
    %cst_355 = arith.constant 1.000000e+00 : f32
    %527 = vector.broadcast %cst_355 : f32 to vector<8x96xf32>
    %528 = arith.addf %527, %526 : vector<8x96xf32>
    %529 = tpu.reciprocal %528 {approx = true} : vector<8x96xf32> -> vector<8x96xf32>
    %530 = vector.extract_strided_slice %529 {offsets = [0, 0], sizes = [8, 32], strides = [1, 1]} : vector<8x96xf32> to vector<8x32xf32>
    %531 = vector.extract_strided_slice %529 {offsets = [0, 32], sizes = [8, 32], strides = [1, 1]} : vector<8x96xf32> to vector<8x32xf32>
    %532 = vector.extract_strided_slice %529 {offsets = [0, 64], sizes = [8, 32], strides = [1, 1]} : vector<8x96xf32> to vector<8x32xf32>
    %533 = vector.extract_strided_slice %522 {offsets = [0, 96], sizes = [8, 32], strides = [1, 1]} : vector<8x128xf32> to vector<8x32xf32>
    %534 = math.tanh %533 : vector<8x32xf32>
    %c1_356 = arith.constant 1 : index
    %c0_357 = arith.constant 0 : index
    %c0_358 = arith.constant 0 : index
    %535 = vector.load %arg9[%c1_356, %c0_357, %c0_358] : memref<2x8x32xf32, #tpu.memory_space<vmem>>, vector<1x8x32xf32>
    %536 = vector.shape_cast %535 : vector<1x8x32xf32> to vector<8x32xf32>
    %537 = arith.mulf %531, %536 : vector<8x32xf32>
    %538 = arith.mulf %530, %534 : vector<8x32xf32>
    %539 = arith.addf %537, %538 : vector<8x32xf32>
    %540 = math.tanh %539 : vector<8x32xf32>
    %541 = arith.mulf %532, %540 : vector<8x32xf32>
    %c1_359 = arith.constant 1 : index
    %c0_360 = arith.constant 0 : index
    %c0_361 = arith.constant 0 : index
    %542 = vector.load %arg9[%c1_359, %c0_360, %c0_361] : memref<2x8x32xf32, #tpu.memory_space<vmem>>, vector<1x8x32xf32>
    %543 = vector.shape_cast %542 : vector<1x8x32xf32> to vector<8x32xf32>
    %544 = vector.shape_cast %539 : vector<8x32xf32> to vector<1x8x32xf32>
    tpu.vector_store %arg9[%c1_359, %c0_360, %c0_361], %544 {strides = array<i32>} : memref<2x8x32xf32, #tpu.memory_space<vmem>>, vector<1x8x32xf32>,
    %c1_362 = arith.constant 1 : index
    %c0_363 = arith.constant 0 : index
    %c0_364 = arith.constant 0 : index
    %545 = vector.load %arg8[%c1_362, %c0_363, %c0_364] : memref<2x8x32xf32, #tpu.memory_space<vmem>>, vector<1x8x32xf32>
    %546 = vector.shape_cast %545 : vector<1x8x32xf32> to vector<8x32xf32>
    %547 = vector.shape_cast %541 : vector<8x32xf32> to vector<1x8x32xf32>
    tpu.vector_store %arg8[%c1_362, %c0_363, %c0_364], %547 {strides = array<i32>} : memref<2x8x32xf32, #tpu.memory_space<vmem>>, vector<1x8x32xf32>,
    %c0_365 = arith.constant 0 : index
    %c0_366 = arith.constant 0 : index
    %548 = vector.load %arg7[%c0_365, %c0_366] : memref<64x32xf32, #tpu.memory_space<vmem>>, vector<8x32xf32>
    tpu.vector_store %arg7[%c0_365, %c0_366], %541 {strides = array<i32>} : memref<64x32xf32, #tpu.memory_space<vmem>>, vector<8x32xf32>,
    return
  }
  func.func @transform_0(%arg0: i32) -> (i32, i32) {
    %c0_i32 = arith.constant 0 : i32
    %c0_i32_0 = arith.constant 0 : i32
    return %arg0, %c0_i32 : i32, i32
  }
  func.func @transform_1(%arg0: i32) -> (i32, i32) {
    %c0_i32 = arith.constant 0 : i32
    %0 = arith.subi %c0_i32, %arg0 : i32
    %c0_i32_0 = arith.constant 0 : i32
    %c0_i32_1 = arith.constant 0 : i32
    return %0, %c0_i32_0 : i32, i32
  }
  func.func @transform_2(%arg0: i32) -> (i32, i32, i32, i32) {
    %c0_i32 = arith.constant 0 : i32
    %c0_i32_0 = arith.constant 0 : i32
    %c0_i32_1 = arith.constant 0 : i32
    %c0_i32_2 = arith.constant 0 : i32
    %c0_i32_3 = arith.constant 0 : i32
    return %c0_i32, %c0_i32_0, %c0_i32_1, %c0_i32_2 : i32, i32, i32, i32
  }
  func.func @transform_3(%arg0: i32) -> (i32, i32, i32) {
    %c0_i32 = arith.constant 0 : i32
    %c0_i32_0 = arith.constant 0 : i32
    %c0_i32_1 = arith.constant 0 : i32
    %c0_i32_2 = arith.constant 0 : i32
    return %c0_i32, %c0_i32_0, %c0_i32_1 : i32, i32, i32
  }
  func.func @transform_4(%arg0: i32) -> (i32, i32, i32) {
    %c0_i32 = arith.constant 0 : i32
    %c0_i32_0 = arith.constant 0 : i32
    %c0_i32_1 = arith.constant 0 : i32
    %c0_i32_2 = arith.constant 0 : i32
    return %c0_i32, %c0_i32_0, %c0_i32_1 : i32, i32, i32
  }
  func.func @transform_5(%arg0: i32) -> (i32, i32) {
    %c0_i32 = arith.constant 0 : i32
    %c0_i32_0 = arith.constant 0 : i32
    return %arg0, %c0_i32 : i32, i32
  }
  func.func @transform_6(%arg0: i32) -> (i32, i32) {
    %c0_i32 = arith.constant 0 : i32
    %0 = arith.subi %c0_i32, %arg0 : i32
    %c0_i32_0 = arith.constant 0 : i32
    %c0_i32_1 = arith.constant 0 : i32
    return %0, %c0_i32_0 : i32, i32
  }
}

</mosaic_0001>

<llo_original>
// kernel: tpu_custom_call.1
$region0: #{tpu_custom_call.1}
  #allocation0 [shape = 'u32[]', space=smem, size = 0x4, offset = 0x4, fixed_abs, tag = 'smem constant byte address 0x4 - core index']
  #allocation1 [shape = 'u32[144,128]{1,0:T(1,128)}', space=vmem, size = 0x12000, scoped, tag = 'internal scratch']
  #allocation2 [shape = 'f32[2,8,32]{2,1,0:T(8,128)}', space=vmem, size = 0x2000, scoped, tag = 'scratch operand']
  #allocation3 [shape = 'f32[2,8,32]{2,1,0:T(8,128)}', space=vmem, size = 0x2000, scoped, tag = 'scratch operand']
  #allocation4 [shape = 'f32[64,128]{1,0:T(8,128)}', space=vmem, size = 0x8000, scoped, tag = 'scratch operand']
  %s0 = inlined_call_operand.vmem [shape: f32[64,8], index: 0, kind: input, shape index: {}]
  %s1 = inlined_call_operand.vmem [shape: f32[64,8], index: 1, kind: input, shape index: {}]
  %s2 = inlined_call_operand.vmem [shape: f32[2,1,8,128], index: 2, kind: input, shape index: {}]
  %s3 = inlined_call_operand.vmem [shape: f32[2,32,128], index: 3, kind: input, shape index: {}]
  %s4 = inlined_call_operand.vmem [shape: f32[2,1,128], index: 4, kind: input, shape index: {}]
  %s5 = inlined_call_operand.vmem [shape: f32[64,32], index: 5, kind: output, shape index: {0}]
  %s6 = inlined_call_operand.vmem [shape: f32[64,32], index: 6, kind: output, shape index: {1}]
  %7 = xla_tuple %s5, %s6
  %s8 = sld [smem:[#allocation0]]
  $region42: #{tpu_custom_call.1} parent=0
    _
  %s10 = ssub.s32 1, %s8
  %s11 = scalar_select 0, %s10, %s8
  // Predicated region
  $region2: #{tpu_custom_call.1} parent=0 // pred_check
    _
  $region3: #{tpu_custom_call.1} parent=0 // pred_check_branch
    %13 = sbr.rel (0) target = $region5
  $region4: #{tpu_custom_call.1} parent=0 // pred_region
    _
  $region5: #{tpu_custom_call.1} parent=0 // pred_fallthru
    _
  // Predicated region
  $region6: #{tpu_custom_call.1} parent=0 // pred_check
    _
  $region7: #{tpu_custom_call.1} parent=0 // pred_check_branch
    %15 = sbr.rel (0) target = $region9
  $region8: #{tpu_custom_call.1} parent=0 // pred_region
    %s16 = ssub.s32 0, 0
    %s17 = smul.u32 8, %s16
    %p18 = scmp.lt.s32.totalorder %s17, 7
    %s19 = scalar_select %p18, %s17, 7
    %s20 = smul.addr %s19, 8
    %s21 = scalar_lea.vmem %s1, %s20
    %s22 = ssub.s32 0, 0
    %s23 = smul.u32 8, %s22
  $region9: #{tpu_custom_call.1} parent=0 // pred_fallthru
    _
  // Predicated region
  $region10: #{tpu_custom_call.1} parent=0 // pred_check
    _
  $region11: #{tpu_custom_call.1} parent=0 // pred_check_branch
    %25 = sbr.rel (0) target = $region13
  $region12: #{tpu_custom_call.1} parent=0 // pred_region
    _
  $region13: #{tpu_custom_call.1} parent=0 // pred_fallthru
    _
  // Predicated region
  $region14: #{tpu_custom_call.1} parent=0 // pred_check
    _
  $region15: #{tpu_custom_call.1} parent=0 // pred_check_branch
    %27 = sbr.rel (0) target = $region17
  $region16: #{tpu_custom_call.1} parent=0 // pred_region
    _
  $region17: #{tpu_custom_call.1} parent=0 // pred_fallthru
    _
  // Predicated region
  $region18: #{tpu_custom_call.1} parent=0 // pred_check
    _
  $region19: #{tpu_custom_call.1} parent=0 // pred_check_branch
    %29 = sbr.rel (0) target = $region21
  $region20: #{tpu_custom_call.1} parent=0 // pred_region
    _
  $region21: #{tpu_custom_call.1} parent=0 // pred_fallthru
    _
  %s30 = ssub.s32 0, 0
  %s31 = smul.u32 8, %s30
  %p32 = scmp.lt.s32.totalorder %s31, 7
  %s33 = scalar_select %p32, %s31, 7
  %s34 = smul.addr %s33, 8
  %s35 = scalar_lea.vmem %s1, %s34
  %s36 = ssub.s32 0, 0
  %s37 = smul.u32 8, %s36
  %p38 = scmp.lt.s32.totalorder %s37, 7
  %s39 = scalar_select %p38, %s37, 7
  %s40 = smul.addr %s39, 8
  %s41 = scalar_lea.vmem %s6, %s40
  %s42 = ssub.s32 0, 0
  %s43 = smul.u32 8, %s42
  %p44 = scmp.lt.s32.totalorder %s43, 7
  %s45 = scalar_select %p44, %s43, 7
  %s46 = smul.addr %s45, 8
  %s47 = scalar_lea.vmem %s1, %s46
  %s48 = ssub.s32 0, 0
  %s49 = smul.u32 8, %s48
  %s50 = ssub.s32 0, 0
  %s51 = smul.u32 8, %s50
  %p52 = scmp.lt.s32.totalorder %s51, 7
  %s53 = scalar_select %p52, %s51, 7
  %s54 = smul.addr %s53, 8
  %s55 = scalar_lea.vmem %s6, %s54
  %s56 = ssub.s32 0, 0
  %s57 = smul.u32 8, %s56
  %p58 = scmp.eq.s32.totalorder 0, 0
  // Predicated region
  $region22: #{tpu_custom_call.1} parent=0 // pred_check
    %p59 = pneg %p58
  $region23: #{tpu_custom_call.1} parent=0 // pred_check_branch
    %61 = sbr.rel (%p59) target = $region25
  $region24: #{tpu_custom_call.1} parent=0 // pred_region
    %vm62 = vcmask 261120
    %63 = vst.msk [vmem:[#allocation2] sm:$0xff] %vm62, 0.0
    %64 = vst.msk [vmem:[#allocation2 + $0x8] sm:$0xff] %vm62, 0.0
    %65 = vst.msk [vmem:[#allocation3] sm:$0xff] %vm62, 0.0
    %66 = vst.msk [vmem:[#allocation3 + $0x8] sm:$0xff] %vm62, 0.0
  $region25: #{tpu_custom_call.1} parent=0 // pred_fallthru
    _
  %v67 = vld [vmem:[%s0] sm:$0xff]
  %v68 = vld [vmem:[%s0 + $0x8] sm:$0xff]
  %v69 = vld [vmem:[%s0 + $0x10] sm:$0xff]
  %v70 = vld [vmem:[%s0 + $0x18] sm:$0xff]
  %v71 = vld [vmem:[%s0 + $0x20] sm:$0xff]
  %v72 = vld [vmem:[%s0 + $0x28] sm:$0xff]
  %v73 = vld [vmem:[%s0 + $0x30] sm:$0xff]
  %v74 = vld [vmem:[%s0 + $0x38] sm:$0xff]
  %v75 = vld [vmem:[%s2] sm:$0xff]
  %v76 = vld [vmem:[%s4] sm:$0x1]
  %v78 = vlaneseq
  %v79 = vshrl.u32 %v78, 7
  %v80 = vsub.s32 0, %v79
  %v81 = vrot.slane %v76, %v80
  %vm83 = vcmask 64512
  %v85 = vsel %vm83, %v67, 0
  %v88 = vsel %vm83, %v68, 0
  %v91 = vsel %vm83, %v69, 0
  %v94 = vsel %vm83, %v70, 0
  %v97 = vsel %vm83, %v71, 0
  %v100 = vsel %vm83, %v72, 0
  %v103 = vsel %vm83, %v73, 0
  %v106 = vsel %vm83, %v74, 0
  %108 = vmatprep.subr.mxu0 0.0
  %109 = vmatpush1.msra.mxu0 %v75
  %110 = vmatprep.subr.mxu0 0.0
  %111 = vmatpush1.msra.mxu0 0.0
  %112 = vmatprep.subr.mxu0 0.0
  %113 = vmatpush1.msra.mxu0 0.0
  %114 = vmatprep.subr.mxu0 0.0
  %115 = vmatpush1.msra.mxu0 0.0
  %116 = vmatprep.subr.mxu0 0.0
  %117 = vmatpush1.msra.mxu0 0.0
  %118 = vmatprep.subr.mxu0 0.0
  %119 = vmatpush1.msra.mxu0 0.0
  %120 = vmatprep.subr.mxu0 0.0
  %121 = vmatpush1.msra.mxu0 0.0
  %122 = vmatprep.subr.mxu0 0.0
  %123 = vmatpush1.msra.mxu0 0.0
  %124 = vmatprep.subr.mxu0 0.0
  %125 = vmatpush1.msra.mxu0 0.0
  %126 = vmatprep.subr.mxu0 0.0
  %127 = vmatpush1.msra.mxu0 0.0
  %128 = vmatprep.subr.mxu0 0.0
  %129 = vmatpush1.msra.mxu0 0.0
  %130 = vmatprep.subr.mxu0 0.0
  %131 = vmatpush1.msra.mxu0 0.0
  %132 = vmatprep.subr.mxu0 0.0
  %133 = vmatpush1.msra.mxu0 0.0
  %134 = vmatprep.subr.mxu0 0.0
  %135 = vmatpush1.msra.mxu0 0.0
  %136 = vmatprep.subr.mxu0 0.0
  %137 = vmatpush1.msra.mxu0 0.0
  %138 = vmatprep.subr.mxu0 0.0
  %139 = vmatpush1.msra.mxu0 0.0
  %140 = vmatprep.subr.mxu0 0.0
  %141 = vmatpush1.msra.mxu0 0.0
  %142 = vmatprep.subr.mxu0 0.0
  %143 = vmatpush1.msra.mxu0 0.0
  %144 = vmatprep.subr.mxu0 0.0
  %145 = vmatpush1.msra.mxu0 0.0
  %146 = vmatprep.subr.mxu0 0.0
  %147 = vmatpush1.msra.mxu0 0.0
  %148 = vmatprep.subr.mxu0 0.0
  %149 = vmatpush1.msra.mxu0 0.0
  %150 = vmatprep.subr.mxu0 0.0
  %151 = vmatpush1.msra.mxu0 0.0
  %152 = vmatprep.subr.mxu0 0.0
  %153 = vmatpush1.msra.mxu0 0.0
  %154 = vmatprep.subr.mxu0 0.0
  %155 = vmatpush1.msra.mxu0 0.0
  %156 = vmatprep.subr.mxu0 0.0
  %157 = vmatpush1.msra.mxu0 0.0
  %158 = vmatprep.subr.mxu0 0.0
  %159 = vmatpush1.msra.mxu0 0.0
  %160 = vmatprep.subr.mxu0 0.0
  %161 = vmatpush1.msra.mxu0 0.0
  %162 = vmatprep.subr.mxu0 0.0
  %163 = vmatpush1.msra.mxu0 0.0
  %164 = vmatprep.subr.mxu0 0.0
  %165 = vmatpush1.msra.mxu0 0.0
  %166 = vmatprep.subr.mxu0 0.0
  %167 = vmatpush1.msra.mxu0 0.0
  %168 = vmatprep.subr.mxu0 0.0
  %169 = vmatpush1.msra.mxu0 0.0
  %170 = vmatprep.subr.mxu0 0.0
  %171 = vmatpush1.msra.mxu0 0.0
  %172 = vmatprep.mubr.f32.mxu0 0.0
  %173 = vmatmul.mubr.f32.gmra.mrb[0].mxu0 %v85
  %v174 = vpop.f32.mrb[0].mxu0
  %v175 = vadd.f32 %v81, %v174
  %v176 = vpop.f32.mrb[0].mxu0
  %177 = vmatprep.mubr.f32.mxu0 0.0
  %178 = vmatmul.mubr.f32.gmra.mrb[0].mxu0 %v88
  %v179 = vpop.f32.mrb[0].mxu0
  %v180 = vadd.f32 %v81, %v179
  %v181 = vpop.f32.mrb[0].mxu0
  %182 = vmatprep.mubr.f32.mxu0 0.0
  %183 = vmatmul.mubr.f32.gmra.mrb[0].mxu0 %v91
  %v184 = vpop.f32.mrb[0].mxu0
  %v185 = vadd.f32 %v81, %v184
  %v186 = vpop.f32.mrb[0].mxu0
  %187 = vmatprep.mubr.f32.mxu0 0.0
  %188 = vmatmul.mubr.f32.gmra.mrb[0].mxu0 %v94
  %v189 = vpop.f32.mrb[0].mxu0
  %v190 = vadd.f32 %v81, %v189
  %v191 = vpop.f32.mrb[0].mxu0
  %192 = vmatprep.mubr.f32.mxu0 0.0
  %193 = vmatmul.mubr.f32.gmra.mrb[0].mxu0 %v97
  %v194 = vpop.f32.mrb[0].mxu0
  %v195 = vadd.f32 %v81, %v194
  %v196 = vpop.f32.mrb[0].mxu0
  %197 = vmatprep.mubr.f32.mxu0 0.0
  %198 = vmatmul.mubr.f32.gmra.mrb[0].mxu0 %v100
  %v199 = vpop.f32.mrb[0].mxu0
  %v200 = vadd.f32 %v81, %v199
  %v201 = vpop.f32.mrb[0].mxu0
  %202 = vmatprep.mubr.f32.mxu0 0.0
  %203 = vmatmul.mubr.f32.gmra.mrb[0].mxu0 %v103
  %v204 = vpop.f32.mrb[0].mxu0
  %v205 = vadd.f32 %v81, %v204
  %v206 = vpop.f32.mrb[0].mxu0
  %207 = vmatprep.mubr.f32.mxu0 0.0
  %208 = vmatmul.mubr.f32.gmra.mrb[0].mxu0 %v106
  %v209 = vpop.f32.mrb[0].mxu0
  %v210 = vadd.f32 %v81, %v209
  %v211 = vpop.f32.mrb[0].mxu0
  %212 = vdwg.mxu0
  %213 = vst [vmem:[#allocation4] sm:$0xff] %v175
  %214 = vst [vmem:[#allocation4 + $0x8] sm:$0xff] %v180
  %215 = vst [vmem:[#allocation4 + $0x10] sm:$0xff] %v185
  %216 = vst [vmem:[#allocation4 + $0x18] sm:$0xff] %v190
  %217 = vst [vmem:[#allocation4 + $0x20] sm:$0xff] %v195
  %218 = vst [vmem:[#allocation4 + $0x28] sm:$0xff] %v200
  %219 = vst [vmem:[#allocation4 + $0x30] sm:$0xff] %v205
  %220 = vst [vmem:[#allocation4 + $0x38] sm:$0xff] %v210
  %v221 = vld [vmem:[#allocation4] sm:$0xff]
  %v222 = vld [vmem:[#allocation2] sm:$0xff]
  %v223 = vld [vmem:[%s3] sm:$0xff]
  %v224 = vld [vmem:[%s3 + $0x8] sm:$0xff]
  %v225 = vld [vmem:[%s3 + $0x10] sm:$0xff]
  %v226 = vld [vmem:[%s3 + $0x18] sm:$0xff]
  %vm227 = vcmask 261120
  %v229 = vsel %vm227, %v222, 0
  %231 = vmatprep.subr.mxu0 0.0
  %232 = vmatpush1.msra.mxu0 %v223
  %233 = vmatprep.subr.mxu0 0.0
  %234 = vmatpush1.msra.mxu0 %v224
  %235 = vmatprep.subr.mxu0 0.0
  %236 = vmatpush1.msra.mxu0 %v225
  %237 = vmatprep.subr.mxu0 0.0
  %238 = vmatpush1.msra.mxu0 %v226
  %239 = vmatprep.subr.mxu0 0.0
  %240 = vmatpush1.msra.mxu0 0.0
  %241 = vmatprep.subr.mxu0 0.0
  %242 = vmatpush1.msra.mxu0 0.0
  %243 = vmatprep.subr.mxu0 0.0
  %244 = vmatpush1.msra.mxu0 0.0
  %245 = vmatprep.subr.mxu0 0.0
  %246 = vmatpush1.msra.mxu0 0.0
  %247 = vmatprep.subr.mxu0 0.0
  %248 = vmatpush1.msra.mxu0 0.0
  %249 = vmatprep.subr.mxu0 0.0
  %250 = vmatpush1.msra.mxu0 0.0
  %251 = vmatprep.subr.mxu0 0.0
  %252 = vmatpush1.msra.mxu0 0.0
  %253 = vmatprep.subr.mxu0 0.0
  %254 = vmatpush1.msra.mxu0 0.0
  %255 = vmatprep.subr.mxu0 0.0
  %256 = vmatpush1.msra.mxu0 0.0
  %257 = vmatprep.subr.mxu0 0.0
  %258 = vmatpush1.msra.mxu0 0.0
  %259 = vmatprep.subr.mxu0 0.0
  %260 = vmatpush1.msra.mxu0 0.0
  %261 = vmatprep.subr.mxu0 0.0
  %262 = vmatpush1.msra.mxu0 0.0
  %263 = vmatprep.subr.mxu0 0.0
  %264 = vmatpush1.msra.mxu0 0.0
  %265 = vmatprep.subr.mxu0 0.0
  %266 = vmatpush1.msra.mxu0 0.0
  %267 = vmatprep.subr.mxu0 0.0
  %268 = vmatpush1.msra.mxu0 0.0
  %269 = vmatprep.subr.mxu0 0.0
  %270 = vmatpush1.msra.mxu0 0.0
  %271 = vmatprep.subr.mxu0 0.0
  %272 = vmatpush1.msra.mxu0 0.0
  %273 = vmatprep.subr.mxu0 0.0
  %274 = vmatpush1.msra.mxu0 0.0
  %275 = vmatprep.subr.mxu0 0.0
  %276 = vmatpush1.msra.mxu0 0.0
  %277 = vmatprep.subr.mxu0 0.0
  %278 = vmatpush1.msra.mxu0 0.0
  %279 = vmatprep.subr.mxu0 0.0
  %280 = vmatpush1.msra.mxu0 0.0
  %281 = vmatprep.subr.mxu0 0.0
  %282 = vmatpush1.msra.mxu0 0.0
  %283 = vmatprep.subr.mxu0 0.0
  %284 = vmatpush1.msra.mxu0 0.0
  %285 = vmatprep.subr.mxu0 0.0
  %286 = vmatpush1.msra.mxu0 0.0
  %287 = vmatprep.subr.mxu0 0.0
  %288 = vmatpush1.msra.mxu0 0.0
  %289 = vmatprep.subr.mxu0 0.0
  %290 = vmatpush1.msra.mxu0 0.0
  %291 = vmatprep.subr.mxu0 0.0
  %292 = vmatpush1.msra.mxu0 0.0
  %293 = vmatprep.subr.mxu0 0.0
  %294 = vmatpush1.msra.mxu0 0.0
  %295 = vmatprep.mubr.f32.mxu0 0.0
  %296 = vmatmul.mubr.f32.gmra.mrb[0].mxu0 %v229
  %v297 = vpop.f32.mrb[0].mxu0
  %v298 = vadd.f32 0.0, %v297
  %v299 = vpop.f32.mrb[0].mxu0
  %300 = vdwg.mxu0
  %v301 = vadd.f32 %v221, %v298
  %v302 = vsub.f32 0.0, %v301
  %v303 = vmul.f32 %v302, 1.442695
  %v304 = vpow.pop %v303
  %v305 = vadd.f32 %v304, 1.0
  %v306 = vrcp.pop %v305
  %v307 = vtanh.pop %v301
  %v308 = vld [vmem:[#allocation3] sm:$0xff]
  %310 = vrot.lane.b32.xlu0 %v308, 32
  %v311 = vpop.permute.xlu0 %310
  %v313 = vmul.f32 %v306, %v311
  %315 = vrot.lane.b32.xlu0 %v307, 32
  %v316 = vpop.permute.xlu0 %315
  %v318 = vmul.f32 %v306, %v316
  %320 = vrot.lane.b32.xlu0 %v318, 32
  %v321 = vpop.permute.xlu0 %320
  %v323 = vadd.f32 %v313, %v321
  %v324 = vtanh.pop %v323
  %326 = vrot.lane.b32.xlu0 %v324, 32
  %v327 = vpop.permute.xlu0 %326
  %v329 = vmul.f32 %v306, %v327
  %331 = vrot.lane.b32.xlu0 %v323, 96
  %v332 = vpop.permute.xlu0 %331
  %334 = vst.msk [vmem:[#allocation3] sm:$0xff] %vm227, %v332
  %336 = vrot.lane.b32.xlu0 %v329, 64
  %v337 = vpop.permute.xlu0 %336
  %339 = vst.msk [vmem:[#allocation2] sm:$0xff] %vm227, %v337
  %340 = vst.msk [vmem:[%s5] sm:$0xff] %vm227, %v337
  %v341 = vld [vmem:[#allocation4 + $0x8] sm:$0xff]
  %v342 = vld [vmem:[#allocation2] sm:$0xff]
  %v343 = vld [vmem:[%s3] sm:$0xff]
  %v344 = vld [vmem:[%s3 + $0x8] sm:$0xff]
  %v345 = vld [vmem:[%s3 + $0x10] sm:$0xff]
  %v346 = vld [vmem:[%s3 + $0x18] sm:$0xff]
  %v348 = vsel %vm227, %v342, 0
  %350 = vmatprep.subr.mxu0 0.0
  %351 = vmatpush1.msra.mxu0 %v343
  %352 = vmatprep.subr.mxu0 0.0
  %353 = vmatpush1.msra.mxu0 %v344
  %354 = vmatprep.subr.mxu0 0.0
  %355 = vmatpush1.msra.mxu0 %v345
  %356 = vmatprep.subr.mxu0 0.0
  %357 = vmatpush1.msra.mxu0 %v346
  %358 = vmatprep.subr.mxu0 0.0
  %359 = vmatpush1.msra.mxu0 0.0
  %360 = vmatprep.subr.mxu0 0.0
  %361 = vmatpush1.msra.mxu0 0.0
  %362 = vmatprep.subr.mxu0 0.0
  %363 = vmatpush1.msra.mxu0 0.0
  %364 = vmatprep.subr.mxu0 0.0
  %365 = vmatpush1.msra.mxu0 0.0
  %366 = vmatprep.subr.mxu0 0.0
  %367 = vmatpush1.msra.mxu0 0.0
  %368 = vmatprep.subr.mxu0 0.0
  %369 = vmatpush1.msra.mxu0 0.0
  %370 = vmatprep.subr.mxu0 0.0
  %371 = vmatpush1.msra.mxu0 0.0
  %372 = vmatprep.subr.mxu0 0.0
  %373 = vmatpush1.msra.mxu0 0.0
  %374 = vmatprep.subr.mxu0 0.0
  %375 = vmatpush1.msra.mxu0 0.0
  %376 = vmatprep.subr.mxu0 0.0
  %377 = vmatpush1.msra.mxu0 0.0
  %378 = vmatprep.subr.mxu0 0.0
  %379 = vmatpush1.msra.mxu0 0.0
  %380 = vmatprep.subr.mxu0 0.0
  %381 = vmatpush1.msra.mxu0 0.0
  %382 = vmatprep.subr.mxu0 0.0
  %383 = vmatpush1.msra.mxu0 0.0
  %384 = vmatprep.subr.mxu0 0.0
  %385 = vmatpush1.msra.mxu0 0.0
  %386 = vmatprep.subr.mxu0 0.0
  %387 = vmatpush1.msra.mxu0 0.0
  %388 = vmatprep.subr.mxu0 0.0
  %389 = vmatpush1.msra.mxu0 0.0
  %390 = vmatprep.subr.mxu0 0.0
  %391 = vmatpush1.msra.mxu0 0.0
  %392 = vmatprep.subr.mxu0 0.0
  %393 = vmatpush1.msra.mxu0 0.0
  %394 = vmatprep.subr.mxu0 0.0
  %395 = vmatpush1.msra.mxu0 0.0
  %396 = vmatprep.subr.mxu0 0.0
  %397 = vmatpush1.msra.mxu0 0.0
  %398 = vmatprep.subr.mxu0 0.0
  %399 = vmatpush1.msra.mxu0 0.0
  %400 = vmatprep.subr.mxu0 0.0
  %401 = vmatpush1.msra.mxu0 0.0
  %402 = vmatprep.subr.mxu0 0.0
  %403 = vmatpush1.msra.mxu0 0.0
  %404 = vmatprep.subr.mxu0 0.0
  %405 = vmatpush1.msra.mxu0 0.0
  %406 = vmatprep.subr.mxu0 0.0
  %407 = vmatpush1.msra.mxu0 0.0
  %408 = vmatprep.subr.mxu0 0.0
  %409 = vmatpush1.msra.mxu0 0.0
  %410 = vmatprep.subr.mxu0 0.0
  %411 = vmatpush1.msra.mxu0 0.0
  %412 = vmatprep.subr.mxu0 0.0
  %413 = vmatpush1.msra.mxu0 0.0
  %414 = vmatprep.mubr.f32.mxu0 0.0
  %415 = vmatmul.mubr.f32.gmra.mrb[0].mxu0 %v348
  %v416 = vpop.f32.mrb[0].mxu0
  %v417 = vadd.f32 0.0, %v416
  %v418 = vpop.f32.mrb[0].mxu0
  %419 = vdwg.mxu0
  %v420 = vadd.f32 %v341, %v417
  %v421 = vsub.f32 0.0, %v420
  %v422 = vmul.f32 %v421, 1.442695
  %v423 = vpow.pop %v422
  %v424 = vadd.f32 %v423, 1.0
  %v425 = vrcp.pop %v424
  %v426 = vtanh.pop %v420
  %v427 = vld [vmem:[#allocation3] sm:$0xff]
  %429 = vrot.lane.b32.xlu0 %v427, 32
  %v430 = vpop.permute.xlu0 %429
  %v432 = vmul.f32 %v425, %v430
  %434 = vrot.lane.b32.xlu0 %v426, 32
  %v435 = vpop.permute.xlu0 %434
  %v437 = vmul.f32 %v425, %v435
  %439 = vrot.lane.b32.xlu0 %v437, 32
  %v440 = vpop.permute.xlu0 %439
  %v442 = vadd.f32 %v432, %v440
  %v443 = vtanh.pop %v442
  %445 = vrot.lane.b32.xlu0 %v443, 32
  %v446 = vpop.permute.xlu0 %445
  %v448 = vmul.f32 %v425, %v446
  %450 = vrot.lane.b32.xlu0 %v442, 96
  %v451 = vpop.permute.xlu0 %450
  %453 = vst.msk [vmem:[#allocation3] sm:$0xff] %vm227, %v451
  %455 = vrot.lane.b32.xlu0 %v448, 64
  %v456 = vpop.permute.xlu0 %455
  %458 = vst.msk [vmem:[#allocation2] sm:$0xff] %vm227, %v456
  %459 = vst.msk [vmem:[%s5 + $0x8] sm:$0xff] %vm227, %v456
  %v460 = vld [vmem:[#allocation4 + $0x10] sm:$0xff]
  %v461 = vld [vmem:[#allocation2] sm:$0xff]
  %v462 = vld [vmem:[%s3] sm:$0xff]
  %v463 = vld [vmem:[%s3 + $0x8] sm:$0xff]
  %v464 = vld [vmem:[%s3 + $0x10] sm:$0xff]
  %v465 = vld [vmem:[%s3 + $0x18] sm:$0xff]
  %v467 = vsel %vm227, %v461, 0
  %469 = vmatprep.subr.mxu0 0.0
  %470 = vmatpush1.msra.mxu0 %v462
  %471 = vmatprep.subr.mxu0 0.0
  %472 = vmatpush1.msra.mxu0 %v463
  %473 = vmatprep.subr.mxu0 0.0
  %474 = vmatpush1.msra.mxu0 %v464
  %475 = vmatprep.subr.mxu0 0.0
  %476 = vmatpush1.msra.mxu0 %v465
  %477 = vmatprep.subr.mxu0 0.0
  %478 = vmatpush1.msra.mxu0 0.0
  %479 = vmatprep.subr.mxu0 0.0
  %480 = vmatpush1.msra.mxu0 0.0
  %481 = vmatprep.subr.mxu0 0.0
  %482 = vmatpush1.msra.mxu0 0.0
  %483 = vmatprep.subr.mxu0 0.0
  %484 = vmatpush1.msra.mxu0 0.0
  %485 = vmatprep.subr.mxu0 0.0
  %486 = vmatpush1.msra.mxu0 0.0
  %487 = vmatprep.subr.mxu0 0.0
  %488 = vmatpush1.msra.mxu0 0.0
  %489 = vmatprep.subr.mxu0 0.0
  %490 = vmatpush1.msra.mxu0 0.0
  %491 = vmatprep.subr.mxu0 0.0
  %492 = vmatpush1.msra.mxu0 0.0
  %493 = vmatprep.subr.mxu0 0.0
  %494 = vmatpush1.msra.mxu0 0.0
  %495 = vmatprep.subr.mxu0 0.0
  %496 = vmatpush1.msra.mxu0 0.0
  %497 = vmatprep.subr.mxu0 0.0
  %498 = vmatpush1.msra.mxu0 0.0
  %499 = vmatprep.subr.mxu0 0.0
  %500 = vmatpush1.msra.mxu0 0.0
  %501 = vmatprep.subr.mxu0 0.0
  %502 = vmatpush1.msra.mxu0 0.0
  %503 = vmatprep.subr.mxu0 0.0
  %504 = vmatpush1.msra.mxu0 0.0
  %505 = vmatprep.subr.mxu0 0.0
  %506 = vmatpush1.msra.mxu0 0.0
  %507 = vmatprep.subr.mxu0 0.0
  %508 = vmatpush1.msra.mxu0 0.0
  %509 = vmatprep.subr.mxu0 0.0
  %510 = vmatpush1.msra.mxu0 0.0
  %511 = vmatprep.subr.mxu0 0.0
  %512 = vmatpush1.msra.mxu0 0.0
  %513 = vmatprep.subr.mxu0 0.0
  %514 = vmatpush1.msra.mxu0 0.0
  %515 = vmatprep.subr.mxu0 0.0
  %516 = vmatpush1.msra.mxu0 0.0
  %517 = vmatprep.subr.mxu0 0.0
  %518 = vmatpush1.msra.mxu0 0.0
  %519 = vmatprep.subr.mxu0 0.0
  %520 = vmatpush1.msra.mxu0 0.0
  %521 = vmatprep.subr.mxu0 0.0
  %522 = vmatpush1.msra.mxu0 0.0
  %523 = vmatprep.subr.mxu0 0.0
  %524 = vmatpush1.msra.mxu0 0.0
  %525 = vmatprep.subr.mxu0 0.0
  %526 = vmatpush1.msra.mxu0 0.0
  %527 = vmatprep.subr.mxu0 0.0
  %528 = vmatpush1.msra.mxu0 0.0
  %529 = vmatprep.subr.mxu0 0.0
  %530 = vmatpush1.msra.mxu0 0.0
  %531 = vmatprep.subr.mxu0 0.0
  %532 = vmatpush1.msra.mxu0 0.0
  %533 = vmatprep.mubr.f32.mxu0 0.0
  %534 = vmatmul.mubr.f32.gmra.mrb[0].mxu0 %v467
  %v535 = vpop.f32.mrb[0].mxu0
  %v536 = vadd.f32 0.0, %v535
  %v537 = vpop.f32.mrb[0].mxu0
  %538 = vdwg.mxu0
  %v539 = vadd.f32 %v460, %v536
  %v540 = vsub.f32 0.0, %v539
  %v541 = vmul.f32 %v540, 1.442695
  %v542 = vpow.pop %v541
  %v543 = vadd.f32 %v542, 1.0
  %v544 = vrcp.pop %v543
  %v545 = vtanh.pop %v539
  %v546 = vld [vmem:[#allocation3] sm:$0xff]
  %548 = vrot.lane.b32.xlu0 %v546, 32
  %v549 = vpop.permute.xlu0 %548
  %v551 = vmul.f32 %v544, %v549
  %553 = vrot.lane.b32.xlu0 %v545, 32
  %v554 = vpop.permute.xlu0 %553
  %v556 = vmul.f32 %v544, %v554
  %558 = vrot.lane.b32.xlu0 %v556, 32
  %v559 = vpop.permute.xlu0 %558
  %v561 = vadd.f32 %v551, %v559
  %v562 = vtanh.pop %v561
  %564 = vrot.lane.b32.xlu0 %v562, 32
  %v565 = vpop.permute.xlu0 %564
  %v567 = vmul.f32 %v544, %v565
  %569 = vrot.lane.b32.xlu0 %v561, 96
  %v570 = vpop.permute.xlu0 %569
  %572 = vst.msk [vmem:[#allocation3] sm:$0xff] %vm227, %v570
  %574 = vrot.lane.b32.xlu0 %v567, 64
  %v575 = vpop.permute.xlu0 %574
  %577 = vst.msk [vmem:[#allocation2] sm:$0xff] %vm227, %v575
  %578 = vst.msk [vmem:[%s5 + $0x10] sm:$0xff] %vm227, %v575
  %v579 = vld [vmem:[#allocation4 + $0x18] sm:$0xff]
  %v580 = vld [vmem:[#allocation2] sm:$0xff]
  %v581 = vld [vmem:[%s3] sm:$0xff]
  %v582 = vld [vmem:[%s3 + $0x8] sm:$0xff]
  %v583 = vld [vmem:[%s3 + $0x10] sm:$0xff]
  %v584 = vld [vmem:[%s3 + $0x18] sm:$0xff]
  %v586 = vsel %vm227, %v580, 0
  %588 = vmatprep.subr.mxu0 0.0
  %589 = vmatpush1.msra.mxu0 %v581
  %590 = vmatprep.subr.mxu0 0.0
  %591 = vmatpush1.msra.mxu0 %v582
  %592 = vmatprep.subr.mxu0 0.0
  %593 = vmatpush1.msra.mxu0 %v583
  %594 = vmatprep.subr.mxu0 0.0
  %595 = vmatpush1.msra.mxu0 %v584
  %596 = vmatprep.subr.mxu0 0.0
  %597 = vmatpush1.msra.mxu0 0.0
  %598 = vmatprep.subr.mxu0 0.0
  %599 = vmatpush1.msra.mxu0 0.0
  %600 = vmatprep.subr.mxu0 0.0
  %601 = vmatpush1.msra.mxu0 0.0
  %602 = vmatprep.subr.mxu0 0.0
  %603 = vmatpush1.msra.mxu0 0.0
  %604 = vmatprep.subr.mxu0 0.0
  %605 = vmatpush1.msra.mxu0 0.0
  %606 = vmatprep.subr.mxu0 0.0
  %607 = vmatpush1.msra.mxu0 0.0
  %608 = vmatprep.subr.mxu0 0.0
  %609 = vmatpush1.msra.mxu0 0.0
  %610 = vmatprep.subr.mxu0 0.0
  %611 = vmatpush1.msra.mxu0 0.0
  %612 = vmatprep.subr.mxu0 0.0
  %613 = vmatpush1.msra.mxu0 0.0
  %614 = vmatprep.subr.mxu0 0.0
  %615 = vmatpush1.msra.mxu0 0.0
  %616 = vmatprep.subr.mxu0 0.0
  %617 = vmatpush1.msra.mxu0 0.0
  %618 = vmatprep.subr.mxu0 0.0
  %619 = vmatpush1.msra.mxu0 0.0
  %620 = vmatprep.subr.mxu0 0.0
  %621 = vmatpush1.msra.mxu0 0.0
  %622 = vmatprep.subr.mxu0 0.0
  %623 = vmatpush1.msra.mxu0 0.0
  %624 = vmatprep.subr.mxu0 0.0
  %625 = vmatpush1.msra.mxu0 0.0
  %626 = vmatprep.subr.mxu0 0.0
  %627 = vmatpush1.msra.mxu0 0.0
  %628 = vmatprep.subr.mxu0 0.0
  %629 = vmatpush1.msra.mxu0 0.0
  %630 = vmatprep.subr.mxu0 0.0
  %631 = vmatpush1.msra.mxu0 0.0
  %632 = vmatprep.subr.mxu0 0.0
  %633 = vmatpush1.msra.mxu0 0.0
  %634 = vmatprep.subr.mxu0 0.0
  %635 = vmatpush1.msra.mxu0 0.0
  %636 = vmatprep.subr.mxu0 0.0
  %637 = vmatpush1.msra.mxu0 0.0
  %638 = vmatprep.subr.mxu0 0.0
  %639 = vmatpush1.msra.mxu0 0.0
  %640 = vmatprep.subr.mxu0 0.0
  %641 = vmatpush1.msra.mxu0 0.0
  %642 = vmatprep.subr.mxu0 0.0
  %643 = vmatpush1.msra.mxu0 0.0
  %644 = vmatprep.subr.mxu0 0.0
  %645 = vmatpush1.msra.mxu0 0.0
  %646 = vmatprep.subr.mxu0 0.0
  %647 = vmatpush1.msra.mxu0 0.0
  %648 = vmatprep.subr.mxu0 0.0
  %649 = vmatpush1.msra.mxu0 0.0
  %650 = vmatprep.subr.mxu0 0.0
  %651 = vmatpush1.msra.mxu0 0.0
  %652 = vmatprep.mubr.f32.mxu0 0.0
  %653 = vmatmul.mubr.f32.gmra.mrb[0].mxu0 %v586
  %v654 = vpop.f32.mrb[0].mxu0
  %v655 = vadd.f32 0.0, %v654
  %v656 = vpop.f32.mrb[0].mxu0
  %657 = vdwg.mxu0
  %v658 = vadd.f32 %v579, %v655
  %v659 = vsub.f32 0.0, %v658
  %v660 = vmul.f32 %v659, 1.442695
  %v661 = vpow.pop %v660
  %v662 = vadd.f32 %v661, 1.0
  %v663 = vrcp.pop %v662
  %v664 = vtanh.pop %v658
  %v665 = vld [vmem:[#allocation3] sm:$0xff]
  %667 = vrot.lane.b32.xlu0 %v665, 32
  %v668 = vpop.permute.xlu0 %667
  %v670 = vmul.f32 %v663, %v668
  %672 = vrot.lane.b32.xlu0 %v664, 32
  %v673 = vpop.permute.xlu0 %672
  %v675 = vmul.f32 %v663, %v673
  %677 = vrot.lane.b32.xlu0 %v675, 32
  %v678 = vpop.permute.xlu0 %677
  %v680 = vadd.f32 %v670, %v678
  %v681 = vtanh.pop %v680
  %683 = vrot.lane.b32.xlu0 %v681, 32
  %v684 = vpop.permute.xlu0 %683
  %v686 = vmul.f32 %v663, %v684
  %688 = vrot.lane.b32.xlu0 %v680, 96
  %v689 = vpop.permute.xlu0 %688
  %691 = vst.msk [vmem:[#allocation3] sm:$0xff] %vm227, %v689
  %693 = vrot.lane.b32.xlu0 %v686, 64
  %v694 = vpop.permute.xlu0 %693
  %696 = vst.msk [vmem:[#allocation2] sm:$0xff] %vm227, %v694
  %697 = vst.msk [vmem:[%s5 + $0x18] sm:$0xff] %vm227, %v694
  %v698 = vld [vmem:[#allocation4 + $0x20] sm:$0xff]
  %v699 = vld [vmem:[#allocation2] sm:$0xff]
  %v700 = vld [vmem:[%s3] sm:$0xff]
  %v701 = vld [vmem:[%s3 + $0x8] sm:$0xff]
  %v702 = vld [vmem:[%s3 + $0x10] sm:$0xff]
  %v703 = vld [vmem:[%s3 + $0x18] sm:$0xff]
  %v705 = vsel %vm227, %v699, 0
  %707 = vmatprep.subr.mxu0 0.0
  %708 = vmatpush1.msra.mxu0 %v700
  %709 = vmatprep.subr.mxu0 0.0
  %710 = vmatpush1.msra.mxu0 %v701
  %711 = vmatprep.subr.mxu0 0.0
  %712 = vmatpush1.msra.mxu0 %v702
  %713 = vmatprep.subr.mxu0 0.0
  %714 = vmatpush1.msra.mxu0 %v703
  %715 = vmatprep.subr.mxu0 0.0
  %716 = vmatpush1.msra.mxu0 0.0
  %717 = vmatprep.subr.mxu0 0.0
  %718 = vmatpush1.msra.mxu0 0.0
  %719 = vmatprep.subr.mxu0 0.0
  %720 = vmatpush1.msra.mxu0 0.0
  %721 = vmatprep.subr.mxu0 0.0
  %722 = vmatpush1.msra.mxu0 0.0
  %723 = vmatprep.subr.mxu0 0.0
  %724 = vmatpush1.msra.mxu0 0.0
  %725 = vmatprep.subr.mxu0 0.0
  %726 = vmatpush1.msra.mxu0 0.0
  %727 = vmatprep.subr.mxu0 0.0
  %728 = vmatpush1.msra.mxu0 0.0
  %729 = vmatprep.subr.mxu0 0.0
  %730 = vmatpush1.msra.mxu0 0.0
  %731 = vmatprep.subr.mxu0 0.0
  %732 = vmatpush1.msra.mxu0 0.0
  %733 = vmatprep.subr.mxu0 0.0
  %734 = vmatpush1.msra.mxu0 0.0
  %735 = vmatprep.subr.mxu0 0.0
  %736 = vmatpush1.msra.mxu0 0.0
  %737 = vmatprep.subr.mxu0 0.0
  %738 = vmatpush1.msra.mxu0 0.0
  %739 = vmatprep.subr.mxu0 0.0
  %740 = vmatpush1.msra.mxu0 0.0
  %741 = vmatprep.subr.mxu0 0.0
  %742 = vmatpush1.msra.mxu0 0.0
  %743 = vmatprep.subr.mxu0 0.0
  %744 = vmatpush1.msra.mxu0 0.0
  %745 = vmatprep.subr.mxu0 0.0
  %746 = vmatpush1.msra.mxu0 0.0
  %747 = vmatprep.subr.mxu0 0.0
  %748 = vmatpush1.msra.mxu0 0.0
  %749 = vmatprep.subr.mxu0 0.0
  %750 = vmatpush1.msra.mxu0 0.0
  %751 = vmatprep.subr.mxu0 0.0
  %752 = vmatpush1.msra.mxu0 0.0
  %753 = vmatprep.subr.mxu0 0.0
  %754 = vmatpush1.msra.mxu0 0.0
  %755 = vmatprep.subr.mxu0 0.0
  %756 = vmatpush1.msra.mxu0 0.0
  %757 = vmatprep.subr.mxu0 0.0
  %758 = vmatpush1.msra.mxu0 0.0
  %759 = vmatprep.subr.mxu0 0.0
  %760 = vmatpush1.msra.mxu0 0.0
  %761 = vmatprep.subr.mxu0 0.0
  %762 = vmatpush1.msra.mxu0 0.0
  %763 = vmatprep.subr.mxu0 0.0
  %764 = vmatpush1.msra.mxu0 0.0
  %765 = vmatprep.subr.mxu0 0.0
  %766 = vmatpush1.msra.mxu0 0.0
  %767 = vmatprep.subr.mxu0 0.0
  %768 = vmatpush1.msra.mxu0 0.0
  %769 = vmatprep.subr.mxu0 0.0
  %770 = vmatpush1.msra.mxu0 0.0
  %771 = vmatprep.mubr.f32.mxu0 0.0
  %772 = vmatmul.mubr.f32.gmra.mrb[0].mxu0 %v705
  %v773 = vpop.f32.mrb[0].mxu0
  %v774 = vadd.f32 0.0, %v773
  %v775 = vpop.f32.mrb[0].mxu0
  %776 = vdwg.mxu0
  %v777 = vadd.f32 %v698, %v774
  %v778 = vsub.f32 0.0, %v777
  %v779 = vmul.f32 %v778, 1.442695
  %v780 = vpow.pop %v779
  %v781 = vadd.f32 %v780, 1.0
  %v782 = vrcp.pop %v781
  %v783 = vtanh.pop %v777
  %v784 = vld [vmem:[#allocation3] sm:$0xff]
  %786 = vrot.lane.b32.xlu0 %v784, 32
  %v787 = vpop.permute.xlu0 %786
  %v789 = vmul.f32 %v782, %v787
  %791 = vrot.lane.b32.xlu0 %v783, 32
  %v792 = vpop.permute.xlu0 %791
  %v794 = vmul.f32 %v782, %v792
  %796 = vrot.lane.b32.xlu0 %v794, 32
  %v797 = vpop.permute.xlu0 %796
  %v799 = vadd.f32 %v789, %v797
  %v800 = vtanh.pop %v799
  %802 = vrot.lane.b32.xlu0 %v800, 32
  %v803 = vpop.permute.xlu0 %802
  %v805 = vmul.f32 %v782, %v803
  %807 = vrot.lane.b32.xlu0 %v799, 96
  %v808 = vpop.permute.xlu0 %807
  %810 = vst.msk [vmem:[#allocation3] sm:$0xff] %vm227, %v808
  %812 = vrot.lane.b32.xlu0 %v805, 64
  %v813 = vpop.permute.xlu0 %812
  %815 = vst.msk [vmem:[#allocation2] sm:$0xff] %vm227, %v813
  %816 = vst.msk [vmem:[%s5 + $0x20] sm:$0xff] %vm227, %v813
  %v817 = vld [vmem:[#allocation4 + $0x28] sm:$0xff]
  %v818 = vld [vmem:[#allocation2] sm:$0xff]
  %v819 = vld [vmem:[%s3] sm:$0xff]
  %v820 = vld [vmem:[%s3 + $0x8] sm:$0xff]
  %v821 = vld [vmem:[%s3 + $0x10] sm:$0xff]
  %v822 = vld [vmem:[%s3 + $0x18] sm:$0xff]
  %v824 = vsel %vm227, %v818, 0
  %826 = vmatprep.subr.mxu0 0.0
  %827 = vmatpush1.msra.mxu0 %v819
  %828 = vmatprep.subr.mxu0 0.0
  %829 = vmatpush1.msra.mxu0 %v820
  %830 = vmatprep.subr.mxu0 0.0
  %831 = vmatpush1.msra.mxu0 %v821
  %832 = vmatprep.subr.mxu0 0.0
  %833 = vmatpush1.msra.mxu0 %v822
  %834 = vmatprep.subr.mxu0 0.0
  %835 = vmatpush1.msra.mxu0 0.0
  %836 = vmatprep.subr.mxu0 0.0
  %837 = vmatpush1.msra.mxu0 0.0
  %838 = vmatprep.subr.mxu0 0.0
  %839 = vmatpush1.msra.mxu0 0.0
  %840 = vmatprep.subr.mxu0 0.0
  %841 = vmatpush1.msra.mxu0 0.0
  %842 = vmatprep.subr.mxu0 0.0
  %843 = vmatpush1.msra.mxu0 0.0
  %844 = vmatprep.subr.mxu0 0.0
  %845 = vmatpush1.msra.mxu0 0.0
  %846 = vmatprep.subr.mxu0 0.0
  %847 = vmatpush1.msra.mxu0 0.0
  %848 = vmatprep.subr.mxu0 0.0
  %849 = vmatpush1.msra.mxu0 0.0
  %850 = vmatprep.subr.mxu0 0.0
  %851 = vmatpush1.msra.mxu0 0.0
  %852 = vmatprep.subr.mxu0 0.0
  %853 = vmatpush1.msra.mxu0 0.0
  %854 = vmatprep.subr.mxu0 0.0
  %855 = vmatpush1.msra.mxu0 0.0
  %856 = vmatprep.subr.mxu0 0.0
  %857 = vmatpush1.msra.mxu0 0.0
  %858 = vmatprep.subr.mxu0 0.0
  %859 = vmatpush1.msra.mxu0 0.0
  %860 = vmatprep.subr.mxu0 0.0
  %861 = vmatpush1.msra.mxu0 0.0
  %862 = vmatprep.subr.mxu0 0.0
  %863 = vmatpush1.msra.mxu0 0.0
  %864 = vmatprep.subr.mxu0 0.0
  %865 = vmatpush1.msra.mxu0 0.0
  %866 = vmatprep.subr.mxu0 0.0
  %867 = vmatpush1.msra.mxu0 0.0
  %868 = vmatprep.subr.mxu0 0.0
  %869 = vmatpush1.msra.mxu0 0.0
  %870 = vmatprep.subr.mxu0 0.0
  %871 = vmatpush1.msra.mxu0 0.0
  %872 = vmatprep.subr.mxu0 0.0
  %873 = vmatpush1.msra.mxu0 0.0
  %874 = vmatprep.subr.mxu0 0.0
  %875 = vmatpush1.msra.mxu0 0.0
  %876 = vmatprep.subr.mxu0 0.0
  %877 = vmatpush1.msra.mxu0 0.0
  %878 = vmatprep.subr.mxu0 0.0
  %879 = vmatpush1.msra.mxu0 0.0
  %880 = vmatprep.subr.mxu0 0.0
  %881 = vmatpush1.msra.mxu0 0.0
  %882 = vmatprep.subr.mxu0 0.0
  %883 = vmatpush1.msra.mxu0 0.0
  %884 = vmatprep.subr.mxu0 0.0
  %885 = vmatpush1.msra.mxu0 0.0
  %886 = vmatprep.subr.mxu0 0.0
  %887 = vmatpush1.msra.mxu0 0.0
  %888 = vmatprep.subr.mxu0 0.0
  %889 = vmatpush1.msra.mxu0 0.0
  %890 = vmatprep.mubr.f32.mxu0 0.0
  %891 = vmatmul.mubr.f32.gmra.mrb[0].mxu0 %v824
  %v892 = vpop.f32.mrb[0].mxu0
  %v893 = vadd.f32 0.0, %v892
  %v894 = vpop.f32.mrb[0].mxu0
  %895 = vdwg.mxu0
  %v896 = vadd.f32 %v817, %v893
  %v897 = vsub.f32 0.0, %v896
  %v898 = vmul.f32 %v897, 1.442695
  %v899 = vpow.pop %v898
  %v900 = vadd.f32 %v899, 1.0
  %v901 = vrcp.pop %v900
  %v902 = vtanh.pop %v896
  %v903 = vld [vmem:[#allocation3] sm:$0xff]
  %905 = vrot.lane.b32.xlu0 %v903, 32
  %v906 = vpop.permute.xlu0 %905
  %v908 = vmul.f32 %v901, %v906
  %910 = vrot.lane.b32.xlu0 %v902, 32
  %v911 = vpop.permute.xlu0 %910
  %v913 = vmul.f32 %v901, %v911
  %915 = vrot.lane.b32.xlu0 %v913, 32
  %v916 = vpop.permute.xlu0 %915
  %v918 = vadd.f32 %v908, %v916
  %v919 = vtanh.pop %v918
  %921 = vrot.lane.b32.xlu0 %v919, 32
  %v922 = vpop.permute.xlu0 %921
  %v924 = vmul.f32 %v901, %v922
  %926 = vrot.lane.b32.xlu0 %v918, 96
  %v927 = vpop.permute.xlu0 %926
  %929 = vst.msk [vmem:[#allocation3] sm:$0xff] %vm227, %v927
  %931 = vrot.lane.b32.xlu0 %v924, 64
  %v932 = vpop.permute.xlu0 %931
  %934 = vst.msk [vmem:[#allocation2] sm:$0xff] %vm227, %v932
  %935 = vst.msk [vmem:[%s5 + $0x28] sm:$0xff] %vm227, %v932
  %v936 = vld [vmem:[#allocation4 + $0x30] sm:$0xff]
  %v937 = vld [vmem:[#allocation2] sm:$0xff]
  %v938 = vld [vmem:[%s3] sm:$0xff]
  %v939 = vld [vmem:[%s3 + $0x8] sm:$0xff]
  %v940 = vld [vmem:[%s3 + $0x10] sm:$0xff]
  %v941 = vld [vmem:[%s3 + $0x18] sm:$0xff]
  %v943 = vsel %vm227, %v937, 0
  %945 = vmatprep.subr.mxu0 0.0
  %946 = vmatpush1.msra.mxu0 %v938
  %947 = vmatprep.subr.mxu0 0.0
  %948 = vmatpush1.msra.mxu0 %v939
  %949 = vmatprep.subr.mxu0 0.0
  %950 = vmatpush1.msra.mxu0 %v940
  %951 = vmatprep.subr.mxu0 0.0
  %952 = vmatpush1.msra.mxu0 %v941
  %953 = vmatprep.subr.mxu0 0.0
  %954 = vmatpush1.msra.mxu0 0.0
  %955 = vmatprep.subr.mxu0 0.0
  %956 = vmatpush1.msra.mxu0 0.0
  %957 = vmatprep.subr.mxu0 0.0
  %958 = vmatpush1.msra.mxu0 0.0
  %959 = vmatprep.subr.mxu0 0.0
  %960 = vmatpush1.msra.mxu0 0.0
  %961 = vmatprep.subr.mxu0 0.0
  %962 = vmatpush1.msra.mxu0 0.0
  %963 = vmatprep.subr.mxu0 0.0
  %964 = vmatpush1.msra.mxu0 0.0
  %965 = vmatprep.subr.mxu0 0.0
  %966 = vmatpush1.msra.mxu0 0.0
  %967 = vmatprep.subr.mxu0 0.0
  %968 = vmatpush1.msra.mxu0 0.0
  %969 = vmatprep.subr.mxu0 0.0
  %970 = vmatpush1.msra.mxu0 0.0
  %971 = vmatprep.subr.mxu0 0.0
  %972 = vmatpush1.msra.mxu0 0.0
  %973 = vmatprep.subr.mxu0 0.0
  %974 = vmatpush1.msra.mxu0 0.0
  %975 = vmatprep.subr.mxu0 0.0
  %976 = vmatpush1.msra.mxu0 0.0
  %977 = vmatprep.subr.mxu0 0.0
  %978 = vmatpush1.msra.mxu0 0.0
  %979 = vmatprep.subr.mxu0 0.0
  %980 = vmatpush1.msra.mxu0 0.0
  %981 = vmatprep.subr.mxu0 0.0
  %982 = vmatpush1.msra.mxu0 0.0
  %983 = vmatprep.subr.mxu0 0.0
  %984 = vmatpush1.msra.mxu0 0.0
  %985 = vmatprep.subr.mxu0 0.0
  %986 = vmatpush1.msra.mxu0 0.0
  %987 = vmatprep.subr.mxu0 0.0
  %988 = vmatpush1.msra.mxu0 0.0
  %989 = vmatprep.subr.mxu0 0.0
  %990 = vmatpush1.msra.mxu0 0.0
  %991 = vmatprep.subr.mxu0 0.0
  %992 = vmatpush1.msra.mxu0 0.0
  %993 = vmatprep.subr.mxu0 0.0
  %994 = vmatpush1.msra.mxu0 0.0
  %995 = vmatprep.subr.mxu0 0.0
  %996 = vmatpush1.msra.mxu0 0.0
  %997 = vmatprep.subr.mxu0 0.0
  %998 = vmatpush1.msra.mxu0 0.0
  %999 = vmatprep.subr.mxu0 0.0
  %1000 = vmatpush1.msra.mxu0 0.0
  %1001 = vmatprep.subr.mxu0 0.0
  %1002 = vmatpush1.msra.mxu0 0.0
  %1003 = vmatprep.subr.mxu0 0.0
  %1004 = vmatpush1.msra.mxu0 0.0
  %1005 = vmatprep.subr.mxu0 0.0
  %1006 = vmatpush1.msra.mxu0 0.0
  %1007 = vmatprep.subr.mxu0 0.0
  %1008 = vmatpush1.msra.mxu0 0.0
  %1009 = vmatprep.mubr.f32.mxu0 0.0
  %1010 = vmatmul.mubr.f32.gmra.mrb[0].mxu0 %v943
  %v1011 = vpop.f32.mrb[0].mxu0
  %v1012 = vadd.f32 0.0, %v1011
  %v1013 = vpop.f32.mrb[0].mxu0
  %1014 = vdwg.mxu0
  %v1015 = vadd.f32 %v936, %v1012
  %v1016 = vsub.f32 0.0, %v1015
  %v1017 = vmul.f32 %v1016, 1.442695
  %v1018 = vpow.pop %v1017
  %v1019 = vadd.f32 %v1018, 1.0
  %v1020 = vrcp.pop %v1019
  %v1021 = vtanh.pop %v1015
  %v1022 = vld [vmem:[#allocation3] sm:$0xff]
  %1024 = vrot.lane.b32.xlu0 %v1022, 32
  %v1025 = vpop.permute.xlu0 %1024
  %v1027 = vmul.f32 %v1020, %v1025
  %1029 = vrot.lane.b32.xlu0 %v1021, 32
  %v1030 = vpop.permute.xlu0 %1029
  %v1032 = vmul.f32 %v1020, %v1030
  %1034 = vrot.lane.b32.xlu0 %v1032, 32
  %v1035 = vpop.permute.xlu0 %1034
  %v1037 = vadd.f32 %v1027, %v1035
  %v1038 = vtanh.pop %v1037
  %1040 = vrot.lane.b32.xlu0 %v1038, 32
  %v1041 = vpop.permute.xlu0 %1040
  %v1043 = vmul.f32 %v1020, %v1041
  %1045 = vrot.lane.b32.xlu0 %v1037, 96
  %v1046 = vpop.permute.xlu0 %1045
  %1048 = vst.msk [vmem:[#allocation3] sm:$0xff] %vm227, %v1046
  %1050 = vrot.lane.b32.xlu0 %v1043, 64
  %v1051 = vpop.permute.xlu0 %1050
  %1053 = vst.msk [vmem:[#allocation2] sm:$0xff] %vm227, %v1051
  %1054 = vst.msk [vmem:[%s5 + $0x30] sm:$0xff] %vm227, %v1051
  %v1055 = vld [vmem:[#allocation4 + $0x38] sm:$0xff]
  %v1056 = vld [vmem:[#allocation2] sm:$0xff]
  %v1057 = vld [vmem:[%s3] sm:$0xff]
  %v1058 = vld [vmem:[%s3 + $0x8] sm:$0xff]
  %v1059 = vld [vmem:[%s3 + $0x10] sm:$0xff]
  %v1060 = vld [vmem:[%s3 + $0x18] sm:$0xff]
  %v1062 = vsel %vm227, %v1056, 0
  %1064 = vmatprep.subr.mxu0 0.0
  %1065 = vmatpush1.msra.mxu0 %v1057
  %1066 = vmatprep.subr.mxu0 0.0
  %1067 = vmatpush1.msra.mxu0 %v1058
  %1068 = vmatprep.subr.mxu0 0.0
  %1069 = vmatpush1.msra.mxu0 %v1059
  %1070 = vmatprep.subr.mxu0 0.0
  %1071 = vmatpush1.msra.mxu0 %v1060
  %1072 = vmatprep.subr.mxu0 0.0
  %1073 = vmatpush1.msra.mxu0 0.0
  %1074 = vmatprep.subr.mxu0 0.0
  %1075 = vmatpush1.msra.mxu0 0.0
  %1076 = vmatprep.subr.mxu0 0.0
  %1077 = vmatpush1.msra.mxu0 0.0
  %1078 = vmatprep.subr.mxu0 0.0
  %1079 = vmatpush1.msra.mxu0 0.0
  %1080 = vmatprep.subr.mxu0 0.0
  %1081 = vmatpush1.msra.mxu0 0.0
  %1082 = vmatprep.subr.mxu0 0.0
  %1083 = vmatpush1.msra.mxu0 0.0
  %1084 = vmatprep.subr.mxu0 0.0
  %1085 = vmatpush1.msra.mxu0 0.0
  %1086 = vmatprep.subr.mxu0 0.0
  %1087 = vmatpush1.msra.mxu0 0.0
  %1088 = vmatprep.subr.mxu0 0.0
  %1089 = vmatpush1.msra.mxu0 0.0
  %1090 = vmatprep.subr.mxu0 0.0
  %1091 = vmatpush1.msra.mxu0 0.0
  %1092 = vmatprep.subr.mxu0 0.0
  %1093 = vmatpush1.msra.mxu0 0.0
  %1094 = vmatprep.subr.mxu0 0.0
  %1095 = vmatpush1.msra.mxu0 0.0
  %1096 = vmatprep.subr.mxu0 0.0
  %1097 = vmatpush1.msra.mxu0 0.0
  %1098 = vmatprep.subr.mxu0 0.0
  %1099 = vmatpush1.msra.mxu0 0.0
  %1100 = vmatprep.subr.mxu0 0.0
  %1101 = vmatpush1.msra.mxu0 0.0
  %1102 = vmatprep.subr.mxu0 0.0
  %1103 = vmatpush1.msra.mxu0 0.0
  %1104 = vmatprep.subr.mxu0 0.0
  %1105 = vmatpush1.msra.mxu0 0.0
  %1106 = vmatprep.subr.mxu0 0.0
  %1107 = vmatpush1.msra.mxu0 0.0
  %1108 = vmatprep.subr.mxu0 0.0
  %1109 = vmatpush1.msra.mxu0 0.0
  %1110 = vmatprep.subr.mxu0 0.0
  %1111 = vmatpush1.msra.mxu0 0.0
  %1112 = vmatprep.subr.mxu0 0.0
  %1113 = vmatpush1.msra.mxu0 0.0
  %1114 = vmatprep.subr.mxu0 0.0
  %1115 = vmatpush1.msra.mxu0 0.0
  %1116 = vmatprep.subr.mxu0 0.0
  %1117 = vmatpush1.msra.mxu0 0.0
  %1118 = vmatprep.subr.mxu0 0.0
  %1119 = vmatpush1.msra.mxu0 0.0
  %1120 = vmatprep.subr.mxu0 0.0
  %1121 = vmatpush1.msra.mxu0 0.0
  %1122 = vmatprep.subr.mxu0 0.0
  %1123 = vmatpush1.msra.mxu0 0.0
  %1124 = vmatprep.subr.mxu0 0.0
  %1125 = vmatpush1.msra.mxu0 0.0
  %1126 = vmatprep.subr.mxu0 0.0
  %1127 = vmatpush1.msra.mxu0 0.0
  %1128 = vmatprep.mubr.f32.mxu0 0.0
  %1129 = vmatmul.mubr.f32.gmra.mrb[0].mxu0 %v1062
  %v1130 = vpop.f32.mrb[0].mxu0
  %v1131 = vadd.f32 0.0, %v1130
  %v1132 = vpop.f32.mrb[0].mxu0
  %1133 = vdwg.mxu0
  %v1134 = vadd.f32 %v1055, %v1131
  %v1135 = vsub.f32 0.0, %v1134
  %v1136 = vmul.f32 %v1135, 1.442695
  %v1137 = vpow.pop %v1136
  %v1138 = vadd.f32 %v1137, 1.0
  %v1139 = vrcp.pop %v1138
  %v1140 = vtanh.pop %v1134
  %v1141 = vld [vmem:[#allocation3] sm:$0xff]
  %1143 = vrot.lane.b32.xlu0 %v1141, 32
  %v1144 = vpop.permute.xlu0 %1143
  %v1146 = vmul.f32 %v1139, %v1144
  %1148 = vrot.lane.b32.xlu0 %v1140, 32
  %v1149 = vpop.permute.xlu0 %1148
  %v1151 = vmul.f32 %v1139, %v1149
  %1153 = vrot.lane.b32.xlu0 %v1151, 32
  %v1154 = vpop.permute.xlu0 %1153
  %v1156 = vadd.f32 %v1146, %v1154
  %v1157 = vtanh.pop %v1156
  %1159 = vrot.lane.b32.xlu0 %v1157, 32
  %v1160 = vpop.permute.xlu0 %1159
  %v1162 = vmul.f32 %v1139, %v1160
  %1164 = vrot.lane.b32.xlu0 %v1156, 96
  %v1165 = vpop.permute.xlu0 %1164
  %1167 = vst.msk [vmem:[#allocation3] sm:$0xff] %vm227, %v1165
  %1169 = vrot.lane.b32.xlu0 %v1162, 64
  %v1170 = vpop.permute.xlu0 %1169
  %1172 = vst.msk [vmem:[#allocation2] sm:$0xff] %vm227, %v1170
  %1173 = vst.msk [vmem:[%s5 + $0x38] sm:$0xff] %vm227, %v1170
  %v1174 = vld [vmem:[%s47] sm:$0xff]
  %v1175 = vld [vmem:[%s47 + $0x8] sm:$0xff]
  %v1176 = vld [vmem:[%s47 + $0x10] sm:$0xff]
  %v1177 = vld [vmem:[%s47 + $0x18] sm:$0xff]
  %v1178 = vld [vmem:[%s47 + $0x20] sm:$0xff]
  %v1179 = vld [vmem:[%s47 + $0x28] sm:$0xff]
  %v1180 = vld [vmem:[%s47 + $0x30] sm:$0xff]
  %v1181 = vld [vmem:[%s47 + $0x38] sm:$0xff]
  %s1182 = scalar_lea.vmem %s2, 8
  %v1183 = vld [vmem:[%s1182] sm:$0xff]
  %s1184 = scalar_lea.vmem %s4, 1
  %v1185 = vld [vmem:[%s1184] sm:$0x1]
  %v1187 = vlaneseq
  %v1188 = vshrl.u32 %v1187, 7
  %v1189 = vsub.s32 0, %v1188
  %v1190 = vrot.slane %v1185, %v1189
  %v1193 = vsel %vm83, %v1174, 0
  %v1196 = vsel %vm83, %v1175, 0
  %v1199 = vsel %vm83, %v1176, 0
  %v1202 = vsel %vm83, %v1177, 0
  %v1205 = vsel %vm83, %v1178, 0
  %v1208 = vsel %vm83, %v1179, 0
  %v1211 = vsel %vm83, %v1180, 0
  %v1214 = vsel %vm83, %v1181, 0
  %1216 = vmatprep.subr.mxu0 0.0
  %1217 = vmatpush1.msra.mxu0 %v1183
  %1218 = vmatprep.subr.mxu0 0.0
  %1219 = vmatpush1.msra.mxu0 0.0
  %1220 = vmatprep.subr.mxu0 0.0
  %1221 = vmatpush1.msra.mxu0 0.0
  %1222 = vmatprep.subr.mxu0 0.0
  %1223 = vmatpush1.msra.mxu0 0.0
  %1224 = vmatprep.subr.mxu0 0.0
  %1225 = vmatpush1.msra.mxu0 0.0
  %1226 = vmatprep.subr.mxu0 0.0
  %1227 = vmatpush1.msra.mxu0 0.0
  %1228 = vmatprep.subr.mxu0 0.0
  %1229 = vmatpush1.msra.mxu0 0.0
  %1230 = vmatprep.subr.mxu0 0.0
  %1231 = vmatpush1.msra.mxu0 0.0
  %1232 = vmatprep.subr.mxu0 0.0
  %1233 = vmatpush1.msra.mxu0 0.0
  %1234 = vmatprep.subr.mxu0 0.0
  %1235 = vmatpush1.msra.mxu0 0.0
  %1236 = vmatprep.subr.mxu0 0.0
  %1237 = vmatpush1.msra.mxu0 0.0
  %1238 = vmatprep.subr.mxu0 0.0
  %1239 = vmatpush1.msra.mxu0 0.0
  %1240 = vmatprep.subr.mxu0 0.0
  %1241 = vmatpush1.msra.mxu0 0.0
  %1242 = vmatprep.subr.mxu0 0.0
  %1243 = vmatpush1.msra.mxu0 0.0
  %1244 = vmatprep.subr.mxu0 0.0
  %1245 = vmatpush1.msra.mxu0 0.0
  %1246 = vmatprep.subr.mxu0 0.0
  %1247 = vmatpush1.msra.mxu0 0.0
  %1248 = vmatprep.subr.mxu0 0.0
  %1249 = vmatpush1.msra.mxu0 0.0
  %1250 = vmatprep.subr.mxu0 0.0
  %1251 = vmatpush1.msra.mxu0 0.0
  %1252 = vmatprep.subr.mxu0 0.0
  %1253 = vmatpush1.msra.mxu0 0.0
  %1254 = vmatprep.subr.mxu0 0.0
  %1255 = vmatpush1.msra.mxu0 0.0
  %1256 = vmatprep.subr.mxu0 0.0
  %1257 = vmatpush1.msra.mxu0 0.0
  %1258 = vmatprep.subr.mxu0 0.0
  %1259 = vmatpush1.msra.mxu0 0.0
  %1260 = vmatprep.subr.mxu0 0.0
  %1261 = vmatpush1.msra.mxu0 0.0
  %1262 = vmatprep.subr.mxu0 0.0
  %1263 = vmatpush1.msra.mxu0 0.0
  %1264 = vmatprep.subr.mxu0 0.0
  %1265 = vmatpush1.msra.mxu0 0.0
  %1266 = vmatprep.subr.mxu0 0.0
  %1267 = vmatpush1.msra.mxu0 0.0
  %1268 = vmatprep.subr.mxu0 0.0
  %1269 = vmatpush1.msra.mxu0 0.0
  %1270 = vmatprep.subr.mxu0 0.0
  %1271 = vmatpush1.msra.mxu0 0.0
  %1272 = vmatprep.subr.mxu0 0.0
  %1273 = vmatpush1.msra.mxu0 0.0
  %1274 = vmatprep.subr.mxu0 0.0
  %1275 = vmatpush1.msra.mxu0 0.0
  %1276 = vmatprep.subr.mxu0 0.0
  %1277 = vmatpush1.msra.mxu0 0.0
  %1278 = vmatprep.subr.mxu0 0.0
  %1279 = vmatpush1.msra.mxu0 0.0
  %1280 = vmatprep.mubr.f32.mxu0 0.0
  %1281 = vmatmul.mubr.f32.gmra.mrb[0].mxu0 %v1193
  %v1282 = vpop.f32.mrb[0].mxu0
  %v1283 = vadd.f32 %v1190, %v1282
  %v1284 = vpop.f32.mrb[0].mxu0
  %1285 = vmatprep.mubr.f32.mxu0 0.0
  %1286 = vmatmul.mubr.f32.gmra.mrb[0].mxu0 %v1196
  %v1287 = vpop.f32.mrb[0].mxu0
  %v1288 = vadd.f32 %v1190, %v1287
  %v1289 = vpop.f32.mrb[0].mxu0
  %1290 = vmatprep.mubr.f32.mxu0 0.0
  %1291 = vmatmul.mubr.f32.gmra.mrb[0].mxu0 %v1199
  %v1292 = vpop.f32.mrb[0].mxu0
  %v1293 = vadd.f32 %v1190, %v1292
  %v1294 = vpop.f32.mrb[0].mxu0
  %1295 = vmatprep.mubr.f32.mxu0 0.0
  %1296 = vmatmul.mubr.f32.gmra.mrb[0].mxu0 %v1202
  %v1297 = vpop.f32.mrb[0].mxu0
  %v1298 = vadd.f32 %v1190, %v1297
  %v1299 = vpop.f32.mrb[0].mxu0
  %1300 = vmatprep.mubr.f32.mxu0 0.0
  %1301 = vmatmul.mubr.f32.gmra.mrb[0].mxu0 %v1205
  %v1302 = vpop.f32.mrb[0].mxu0
  %v1303 = vadd.f32 %v1190, %v1302
  %v1304 = vpop.f32.mrb[0].mxu0
  %1305 = vmatprep.mubr.f32.mxu0 0.0
  %1306 = vmatmul.mubr.f32.gmra.mrb[0].mxu0 %v1208
  %v1307 = vpop.f32.mrb[0].mxu0
  %v1308 = vadd.f32 %v1190, %v1307
  %v1309 = vpop.f32.mrb[0].mxu0
  %1310 = vmatprep.mubr.f32.mxu0 0.0
  %1311 = vmatmul.mubr.f32.gmra.mrb[0].mxu0 %v1211
  %v1312 = vpop.f32.mrb[0].mxu0
  %v1313 = vadd.f32 %v1190, %v1312
  %v1314 = vpop.f32.mrb[0].mxu0
  %1315 = vmatprep.mubr.f32.mxu0 0.0
  %1316 = vmatmul.mubr.f32.gmra.mrb[0].mxu0 %v1214
  %v1317 = vpop.f32.mrb[0].mxu0
  %v1318 = vadd.f32 %v1190, %v1317
  %v1319 = vpop.f32.mrb[0].mxu0
  %1320 = vdwg.mxu0
  %1321 = vst [vmem:[#allocation4] sm:$0xff] %v1283
  %1322 = vst [vmem:[#allocation4 + $0x8] sm:$0xff] %v1288
  %1323 = vst [vmem:[#allocation4 + $0x10] sm:$0xff] %v1293
  %1324 = vst [vmem:[#allocation4 + $0x18] sm:$0xff] %v1298
  %1325 = vst [vmem:[#allocation4 + $0x20] sm:$0xff] %v1303
  %1326 = vst [vmem:[#allocation4 + $0x28] sm:$0xff] %v1308
  %1327 = vst [vmem:[#allocation4 + $0x30] sm:$0xff] %v1313
  %1328 = vst [vmem:[#allocation4 + $0x38] sm:$0xff] %v1318
  %v1329 = vld [vmem:[#allocation4 + $0x38] sm:$0xff]
  %s1330 = scalar_lea.vmem [#allocation2], 8
  %v1331 = vld [vmem:[%s1330] sm:$0xff]
  %s1332 = scalar_lea.vmem %s3, 32
  %v1333 = vld [vmem:[%s1332] sm:$0xff]
  %v1334 = vld [vmem:[%s1332 + $0x8] sm:$0xff]
  %v1335 = vld [vmem:[%s1332 + $0x10] sm:$0xff]
  %v1336 = vld [vmem:[%s1332 + $0x18] sm:$0xff]
  %v1338 = vsel %vm227, %v1331, 0
  %1340 = vmatprep.subr.mxu0 0.0
  %1341 = vmatpush1.msra.mxu0 %v1333
  %1342 = vmatprep.subr.mxu0 0.0
  %1343 = vmatpush1.msra.mxu0 %v1334
  %1344 = vmatprep.subr.mxu0 0.0
  %1345 = vmatpush1.msra.mxu0 %v1335
  %1346 = vmatprep.subr.mxu0 0.0
  %1347 = vmatpush1.msra.mxu0 %v1336
  %1348 = vmatprep.subr.mxu0 0.0
  %1349 = vmatpush1.msra.mxu0 0.0
  %1350 = vmatprep.subr.mxu0 0.0
  %1351 = vmatpush1.msra.mxu0 0.0
  %1352 = vmatprep.subr.mxu0 0.0
  %1353 = vmatpush1.msra.mxu0 0.0
  %1354 = vmatprep.subr.mxu0 0.0
  %1355 = vmatpush1.msra.mxu0 0.0
  %1356 = vmatprep.subr.mxu0 0.0
  %1357 = vmatpush1.msra.mxu0 0.0
  %1358 = vmatprep.subr.mxu0 0.0
  %1359 = vmatpush1.msra.mxu0 0.0
  %1360 = vmatprep.subr.mxu0 0.0
  %1361 = vmatpush1.msra.mxu0 0.0
  %1362 = vmatprep.subr.mxu0 0.0
  %1363 = vmatpush1.msra.mxu0 0.0
  %1364 = vmatprep.subr.mxu0 0.0
  %1365 = vmatpush1.msra.mxu0 0.0
  %1366 = vmatprep.subr.mxu0 0.0
  %1367 = vmatpush1.msra.mxu0 0.0
  %1368 = vmatprep.subr.mxu0 0.0
  %1369 = vmatpush1.msra.mxu0 0.0
  %1370 = vmatprep.subr.mxu0 0.0
  %1371 = vmatpush1.msra.mxu0 0.0
  %1372 = vmatprep.subr.mxu0 0.0
  %1373 = vmatpush1.msra.mxu0 0.0
  %1374 = vmatprep.subr.mxu0 0.0
  %1375 = vmatpush1.msra.mxu0 0.0
  %1376 = vmatprep.subr.mxu0 0.0
  %1377 = vmatpush1.msra.mxu0 0.0
  %1378 = vmatprep.subr.mxu0 0.0
  %1379 = vmatpush1.msra.mxu0 0.0
  %1380 = vmatprep.subr.mxu0 0.0
  %1381 = vmatpush1.msra.mxu0 0.0
  %1382 = vmatprep.subr.mxu0 0.0
  %1383 = vmatpush1.msra.mxu0 0.0
  %1384 = vmatprep.subr.mxu0 0.0
  %1385 = vmatpush1.msra.mxu0 0.0
  %1386 = vmatprep.subr.mxu0 0.0
  %1387 = vmatpush1.msra.mxu0 0.0
  %1388 = vmatprep.subr.mxu0 0.0
  %1389 = vmatpush1.msra.mxu0 0.0
  %1390 = vmatprep.subr.mxu0 0.0
  %1391 = vmatpush1.msra.mxu0 0.0
  %1392 = vmatprep.subr.mxu0 0.0
  %1393 = vmatpush1.msra.mxu0 0.0
  %1394 = vmatprep.subr.mxu0 0.0
  %1395 = vmatpush1.msra.mxu0 0.0
  %1396 = vmatprep.subr.mxu0 0.0
  %1397 = vmatpush1.msra.mxu0 0.0
  %1398 = vmatprep.subr.mxu0 0.0
  %1399 = vmatpush1.msra.mxu0 0.0
  %1400 = vmatprep.subr.mxu0 0.0
  %1401 = vmatpush1.msra.mxu0 0.0
  %1402 = vmatprep.subr.mxu0 0.0
  %1403 = vmatpush1.msra.mxu0 0.0
  %1404 = vmatprep.mubr.f32.mxu0 0.0
  %1405 = vmatmul.mubr.f32.gmra.mrb[0].mxu0 %v1338
  %v1406 = vpop.f32.mrb[0].mxu0
  %v1407 = vadd.f32 0.0, %v1406
  %v1408 = vpop.f32.mrb[0].mxu0
  %1409 = vdwg.mxu0
  %v1410 = vadd.f32 %v1329, %v1407
  %v1411 = vsub.f32 0.0, %v1410
  %v1412 = vmul.f32 %v1411, 1.442695
  %v1413 = vpow.pop %v1412
  %v1414 = vadd.f32 %v1413, 1.0
  %v1415 = vrcp.pop %v1414
  %v1416 = vtanh.pop %v1410
  %s1417 = scalar_lea.vmem [#allocation3], 8
  %v1418 = vld [vmem:[%s1417] sm:$0xff]
  %1420 = vrot.lane.b32.xlu0 %v1418, 32
  %v1421 = vpop.permute.xlu0 %1420
  %v1423 = vmul.f32 %v1415, %v1421
  %1425 = vrot.lane.b32.xlu0 %v1416, 32
  %v1426 = vpop.permute.xlu0 %1425
  %v1428 = vmul.f32 %v1415, %v1426
  %1430 = vrot.lane.b32.xlu0 %v1428, 32
  %v1431 = vpop.permute.xlu0 %1430
  %v1433 = vadd.f32 %v1423, %v1431
  %v1434 = vtanh.pop %v1433
  %1436 = vrot.lane.b32.xlu0 %v1434, 32
  %v1437 = vpop.permute.xlu0 %1436
  %v1439 = vmul.f32 %v1415, %v1437
  %1441 = vrot.lane.b32.xlu0 %v1433, 96
  %v1442 = vpop.permute.xlu0 %1441
  %1444 = vst.msk [vmem:[%s1417] sm:$0xff] %vm227, %v1442
  %1446 = vrot.lane.b32.xlu0 %v1439, 64
  %v1447 = vpop.permute.xlu0 %1446
  %1449 = vst.msk [vmem:[%s1330] sm:$0xff] %vm227, %v1447
  %1450 = vst.msk [vmem:[%s55 + $0x38] sm:$0xff] %vm227, %v1447
  %v1451 = vld [vmem:[#allocation4 + $0x30] sm:$0xff]
  %v1452 = vld [vmem:[%s1330] sm:$0xff]
  %v1453 = vld [vmem:[%s1332] sm:$0xff]
  %v1454 = vld [vmem:[%s1332 + $0x8] sm:$0xff]
  %v1455 = vld [vmem:[%s1332 + $0x10] sm:$0xff]
  %v1456 = vld [vmem:[%s1332 + $0x18] sm:$0xff]
  %v1458 = vsel %vm227, %v1452, 0
  %1460 = vmatprep.subr.mxu0 0.0
  %1461 = vmatpush1.msra.mxu0 %v1453
  %1462 = vmatprep.subr.mxu0 0.0
  %1463 = vmatpush1.msra.mxu0 %v1454
  %1464 = vmatprep.subr.mxu0 0.0
  %1465 = vmatpush1.msra.mxu0 %v1455
  %1466 = vmatprep.subr.mxu0 0.0
  %1467 = vmatpush1.msra.mxu0 %v1456
  %1468 = vmatprep.subr.mxu0 0.0
  %1469 = vmatpush1.msra.mxu0 0.0
  %1470 = vmatprep.subr.mxu0 0.0
  %1471 = vmatpush1.msra.mxu0 0.0
  %1472 = vmatprep.subr.mxu0 0.0
  %1473 = vmatpush1.msra.mxu0 0.0
  %1474 = vmatprep.subr.mxu0 0.0
  %1475 = vmatpush1.msra.mxu0 0.0
  %1476 = vmatprep.subr.mxu0 0.0
  %1477 = vmatpush1.msra.mxu0 0.0
  %1478 = vmatprep.subr.mxu0 0.0
  %1479 = vmatpush1.msra.mxu0 0.0
  %1480 = vmatprep.subr.mxu0 0.0
  %1481 = vmatpush1.msra.mxu0 0.0
  %1482 = vmatprep.subr.mxu0 0.0
  %1483 = vmatpush1.msra.mxu0 0.0
  %1484 = vmatprep.subr.mxu0 0.0
  %1485 = vmatpush1.msra.mxu0 0.0
  %1486 = vmatprep.subr.mxu0 0.0
  %1487 = vmatpush1.msra.mxu0 0.0
  %1488 = vmatprep.subr.mxu0 0.0
  %1489 = vmatpush1.msra.mxu0 0.0
  %1490 = vmatprep.subr.mxu0 0.0
  %1491 = vmatpush1.msra.mxu0 0.0
  %1492 = vmatprep.subr.mxu0 0.0
  %1493 = vmatpush1.msra.mxu0 0.0
  %1494 = vmatprep.subr.mxu0 0.0
  %1495 = vmatpush1.msra.mxu0 0.0
  %1496 = vmatprep.subr.mxu0 0.0
  %1497 = vmatpush1.msra.mxu0 0.0
  %1498 = vmatprep.subr.mxu0 0.0
  %1499 = vmatpush1.msra.mxu0 0.0
  %1500 = vmatprep.subr.mxu0 0.0
  %1501 = vmatpush1.msra.mxu0 0.0
  %1502 = vmatprep.subr.mxu0 0.0
  %1503 = vmatpush1.msra.mxu0 0.0
  %1504 = vmatprep.subr.mxu0 0.0
  %1505 = vmatpush1.msra.mxu0 0.0
  %1506 = vmatprep.subr.mxu0 0.0
  %1507 = vmatpush1.msra.mxu0 0.0
  %1508 = vmatprep.subr.mxu0 0.0
  %1509 = vmatpush1.msra.mxu0 0.0
  %1510 = vmatprep.subr.mxu0 0.0
  %1511 = vmatpush1.msra.mxu0 0.0
  %1512 = vmatprep.subr.mxu0 0.0
  %1513 = vmatpush1.msra.mxu0 0.0
  %1514 = vmatprep.subr.mxu0 0.0
  %1515 = vmatpush1.msra.mxu0 0.0
  %1516 = vmatprep.subr.mxu0 0.0
  %1517 = vmatpush1.msra.mxu0 0.0
  %1518 = vmatprep.subr.mxu0 0.0
  %1519 = vmatpush1.msra.mxu0 0.0
  %1520 = vmatprep.subr.mxu0 0.0
  %1521 = vmatpush1.msra.mxu0 0.0
  %1522 = vmatprep.subr.mxu0 0.0
  %1523 = vmatpush1.msra.mxu0 0.0
  %1524 = vmatprep.mubr.f32.mxu0 0.0
  %1525 = vmatmul.mubr.f32.gmra.mrb[0].mxu0 %v1458
  %v1526 = vpop.f32.mrb[0].mxu0
  %v1527 = vadd.f32 0.0, %v1526
  %v1528 = vpop.f32.mrb[0].mxu0
  %1529 = vdwg.mxu0
  %v1530 = vadd.f32 %v1451, %v1527
  %v1531 = vsub.f32 0.0, %v1530
  %v1532 = vmul.f32 %v1531, 1.442695
  %v1533 = vpow.pop %v1532
  %v1534 = vadd.f32 %v1533, 1.0
  %v1535 = vrcp.pop %v1534
  %v1536 = vtanh.pop %v1530
  %v1537 = vld [vmem:[%s1417] sm:$0xff]
  %1539 = vrot.lane.b32.xlu0 %v1537, 32
  %v1540 = vpop.permute.xlu0 %1539
  %v1542 = vmul.f32 %v1535, %v1540
  %1544 = vrot.lane.b32.xlu0 %v1536, 32
  %v1545 = vpop.permute.xlu0 %1544
  %v1547 = vmul.f32 %v1535, %v1545
  %1549 = vrot.lane.b32.xlu0 %v1547, 32
  %v1550 = vpop.permute.xlu0 %1549
  %v1552 = vadd.f32 %v1542, %v1550
  %v1553 = vtanh.pop %v1552
  %1555 = vrot.lane.b32.xlu0 %v1553, 32
  %v1556 = vpop.permute.xlu0 %1555
  %v1558 = vmul.f32 %v1535, %v1556
  %1560 = vrot.lane.b32.xlu0 %v1552, 96
  %v1561 = vpop.permute.xlu0 %1560
  %1563 = vst.msk [vmem:[%s1417] sm:$0xff] %vm227, %v1561
  %1565 = vrot.lane.b32.xlu0 %v1558, 64
  %v1566 = vpop.permute.xlu0 %1565
  %1568 = vst.msk [vmem:[%s1330] sm:$0xff] %vm227, %v1566
  %1569 = vst.msk [vmem:[%s55 + $0x30] sm:$0xff] %vm227, %v1566
  %v1570 = vld [vmem:[#allocation4 + $0x28] sm:$0xff]
  %v1571 = vld [vmem:[%s1330] sm:$0xff]
  %v1572 = vld [vmem:[%s1332] sm:$0xff]
  %v1573 = vld [vmem:[%s1332 + $0x8] sm:$0xff]
  %v1574 = vld [vmem:[%s1332 + $0x10] sm:$0xff]
  %v1575 = vld [vmem:[%s1332 + $0x18] sm:$0xff]
  %v1577 = vsel %vm227, %v1571, 0
  %1579 = vmatprep.subr.mxu0 0.0
  %1580 = vmatpush1.msra.mxu0 %v1572
  %1581 = vmatprep.subr.mxu0 0.0
  %1582 = vmatpush1.msra.mxu0 %v1573
  %1583 = vmatprep.subr.mxu0 0.0
  %1584 = vmatpush1.msra.mxu0 %v1574
  %1585 = vmatprep.subr.mxu0 0.0
  %1586 = vmatpush1.msra.mxu0 %v1575
  %1587 = vmatprep.subr.mxu0 0.0
  %1588 = vmatpush1.msra.mxu0 0.0
  %1589 = vmatprep.subr.mxu0 0.0
  %1590 = vmatpush1.msra.mxu0 0.0
  %1591 = vmatprep.subr.mxu0 0.0
  %1592 = vmatpush1.msra.mxu0 0.0
  %1593 = vmatprep.subr.mxu0 0.0
  %1594 = vmatpush1.msra.mxu0 0.0
  %1595 = vmatprep.subr.mxu0 0.0
  %1596 = vmatpush1.msra.mxu0 0.0
  %1597 = vmatprep.subr.mxu0 0.0
  %1598 = vmatpush1.msra.mxu0 0.0
  %1599 = vmatprep.subr.mxu0 0.0
  %1600 = vmatpush1.msra.mxu0 0.0
  %1601 = vmatprep.subr.mxu0 0.0
  %1602 = vmatpush1.msra.mxu0 0.0
  %1603 = vmatprep.subr.mxu0 0.0
  %1604 = vmatpush1.msra.mxu0 0.0
  %1605 = vmatprep.subr.mxu0 0.0
  %1606 = vmatpush1.msra.mxu0 0.0
  %1607 = vmatprep.subr.mxu0 0.0
  %1608 = vmatpush1.msra.mxu0 0.0
  %1609 = vmatprep.subr.mxu0 0.0
  %1610 = vmatpush1.msra.mxu0 0.0
  %1611 = vmatprep.subr.mxu0 0.0
  %1612 = vmatpush1.msra.mxu0 0.0
  %1613 = vmatprep.subr.mxu0 0.0
  %1614 = vmatpush1.msra.mxu0 0.0
  %1615 = vmatprep.subr.mxu0 0.0
  %1616 = vmatpush1.msra.mxu0 0.0
  %1617 = vmatprep.subr.mxu0 0.0
  %1618 = vmatpush1.msra.mxu0 0.0
  %1619 = vmatprep.subr.mxu0 0.0
  %1620 = vmatpush1.msra.mxu0 0.0
  %1621 = vmatprep.subr.mxu0 0.0
  %1622 = vmatpush1.msra.mxu0 0.0
  %1623 = vmatprep.subr.mxu0 0.0
  %1624 = vmatpush1.msra.mxu0 0.0
  %1625 = vmatprep.subr.mxu0 0.0
  %1626 = vmatpush1.msra.mxu0 0.0
  %1627 = vmatprep.subr.mxu0 0.0
  %1628 = vmatpush1.msra.mxu0 0.0
  %1629 = vmatprep.subr.mxu0 0.0
  %1630 = vmatpush1.msra.mxu0 0.0
  %1631 = vmatprep.subr.mxu0 0.0
  %1632 = vmatpush1.msra.mxu0 0.0
  %1633 = vmatprep.subr.mxu0 0.0
  %1634 = vmatpush1.msra.mxu0 0.0
  %1635 = vmatprep.subr.mxu0 0.0
  %1636 = vmatpush1.msra.mxu0 0.0
  %1637 = vmatprep.subr.mxu0 0.0
  %1638 = vmatpush1.msra.mxu0 0.0
  %1639 = vmatprep.subr.mxu0 0.0
  %1640 = vmatpush1.msra.mxu0 0.0
  %1641 = vmatprep.subr.mxu0 0.0
  %1642 = vmatpush1.msra.mxu0 0.0
  %1643 = vmatprep.mubr.f32.mxu0 0.0
  %1644 = vmatmul.mubr.f32.gmra.mrb[0].mxu0 %v1577
  %v1645 = vpop.f32.mrb[0].mxu0
  %v1646 = vadd.f32 0.0, %v1645
  %v1647 = vpop.f32.mrb[0].mxu0
  %1648 = vdwg.mxu0
  %v1649 = vadd.f32 %v1570, %v1646
  %v1650 = vsub.f32 0.0, %v1649
  %v1651 = vmul.f32 %v1650, 1.442695
  %v1652 = vpow.pop %v1651
  %v1653 = vadd.f32 %v1652, 1.0
  %v1654 = vrcp.pop %v1653
  %v1655 = vtanh.pop %v1649
  %v1656 = vld [vmem:[%s1417] sm:$0xff]
  %1658 = vrot.lane.b32.xlu0 %v1656, 32
  %v1659 = vpop.permute.xlu0 %1658
  %v1661 = vmul.f32 %v1654, %v1659
  %1663 = vrot.lane.b32.xlu0 %v1655, 32
  %v1664 = vpop.permute.xlu0 %1663
  %v1666 = vmul.f32 %v1654, %v1664
  %1668 = vrot.lane.b32.xlu0 %v1666, 32
  %v1669 = vpop.permute.xlu0 %1668
  %v1671 = vadd.f32 %v1661, %v1669
  %v1672 = vtanh.pop %v1671
  %1674 = vrot.lane.b32.xlu0 %v1672, 32
  %v1675 = vpop.permute.xlu0 %1674
  %v1677 = vmul.f32 %v1654, %v1675
  %1679 = vrot.lane.b32.xlu0 %v1671, 96
  %v1680 = vpop.permute.xlu0 %1679
  %1682 = vst.msk [vmem:[%s1417] sm:$0xff] %vm227, %v1680
  %1684 = vrot.lane.b32.xlu0 %v1677, 64
  %v1685 = vpop.permute.xlu0 %1684
  %1687 = vst.msk [vmem:[%s1330] sm:$0xff] %vm227, %v1685
  %1688 = vst.msk [vmem:[%s55 + $0x28] sm:$0xff] %vm227, %v1685
  %v1689 = vld [vmem:[#allocation4 + $0x20] sm:$0xff]
  %v1690 = vld [vmem:[%s1330] sm:$0xff]
  %v1691 = vld [vmem:[%s1332] sm:$0xff]
  %v1692 = vld [vmem:[%s1332 + $0x8] sm:$0xff]
  %v1693 = vld [vmem:[%s1332 + $0x10] sm:$0xff]
  %v1694 = vld [vmem:[%s1332 + $0x18] sm:$0xff]
  %v1696 = vsel %vm227, %v1690, 0
  %1698 = vmatprep.subr.mxu0 0.0
  %1699 = vmatpush1.msra.mxu0 %v1691
  %1700 = vmatprep.subr.mxu0 0.0
  %1701 = vmatpush1.msra.mxu0 %v1692
  %1702 = vmatprep.subr.mxu0 0.0
  %1703 = vmatpush1.msra.mxu0 %v1693
  %1704 = vmatprep.subr.mxu0 0.0
  %1705 = vmatpush1.msra.mxu0 %v1694
  %1706 = vmatprep.subr.mxu0 0.0
  %1707 = vmatpush1.msra.mxu0 0.0
  %1708 = vmatprep.subr.mxu0 0.0
  %1709 = vmatpush1.msra.mxu0 0.0
  %1710 = vmatprep.subr.mxu0 0.0
  %1711 = vmatpush1.msra.mxu0 0.0
  %1712 = vmatprep.subr.mxu0 0.0
  %1713 = vmatpush1.msra.mxu0 0.0
  %1714 = vmatprep.subr.mxu0 0.0
  %1715 = vmatpush1.msra.mxu0 0.0
  %1716 = vmatprep.subr.mxu0 0.0
  %1717 = vmatpush1.msra.mxu0 0.0
  %1718 = vmatprep.subr.mxu0 0.0
  %1719 = vmatpush1.msra.mxu0 0.0
  %1720 = vmatprep.subr.mxu0 0.0
  %1721 = vmatpush1.msra.mxu0 0.0
  %1722 = vmatprep.subr.mxu0 0.0
  %1723 = vmatpush1.msra.mxu0 0.0
  %1724 = vmatprep.subr.mxu0 0.0
  %1725 = vmatpush1.msra.mxu0 0.0
  %1726 = vmatprep.subr.mxu0 0.0
  %1727 = vmatpush1.msra.mxu0 0.0
  %1728 = vmatprep.subr.mxu0 0.0
  %1729 = vmatpush1.msra.mxu0 0.0
  %1730 = vmatprep.subr.mxu0 0.0
  %1731 = vmatpush1.msra.mxu0 0.0
  %1732 = vmatprep.subr.mxu0 0.0
  %1733 = vmatpush1.msra.mxu0 0.0
  %1734 = vmatprep.subr.mxu0 0.0
  %1735 = vmatpush1.msra.mxu0 0.0
  %1736 = vmatprep.subr.mxu0 0.0
  %1737 = vmatpush1.msra.mxu0 0.0
  %1738 = vmatprep.subr.mxu0 0.0
  %1739 = vmatpush1.msra.mxu0 0.0
  %1740 = vmatprep.subr.mxu0 0.0
  %1741 = vmatpush1.msra.mxu0 0.0
  %1742 = vmatprep.subr.mxu0 0.0
  %1743 = vmatpush1.msra.mxu0 0.0
  %1744 = vmatprep.subr.mxu0 0.0
  %1745 = vmatpush1.msra.mxu0 0.0
  %1746 = vmatprep.subr.mxu0 0.0
  %1747 = vmatpush1.msra.mxu0 0.0
  %1748 = vmatprep.subr.mxu0 0.0
  %1749 = vmatpush1.msra.mxu0 0.0
  %1750 = vmatprep.subr.mxu0 0.0
  %1751 = vmatpush1.msra.mxu0 0.0
  %1752 = vmatprep.subr.mxu0 0.0
  %1753 = vmatpush1.msra.mxu0 0.0
  %1754 = vmatprep.subr.mxu0 0.0
  %1755 = vmatpush1.msra.mxu0 0.0
  %1756 = vmatprep.subr.mxu0 0.0
  %1757 = vmatpush1.msra.mxu0 0.0
  %1758 = vmatprep.subr.mxu0 0.0
  %1759 = vmatpush1.msra.mxu0 0.0
  %1760 = vmatprep.subr.mxu0 0.0
  %1761 = vmatpush1.msra.mxu0 0.0
  %1762 = vmatprep.mubr.f32.mxu0 0.0
  %1763 = vmatmul.mubr.f32.gmra.mrb[0].mxu0 %v1696
  %v1764 = vpop.f32.mrb[0].mxu0
  %v1765 = vadd.f32 0.0, %v1764
  %v1766 = vpop.f32.mrb[0].mxu0
  %1767 = vdwg.mxu0
  %v1768 = vadd.f32 %v1689, %v1765
  %v1769 = vsub.f32 0.0, %v1768
  %v1770 = vmul.f32 %v1769, 1.442695
  %v1771 = vpow.pop %v1770
  %v1772 = vadd.f32 %v1771, 1.0
  %v1773 = vrcp.pop %v1772
  %v1774 = vtanh.pop %v1768
  %v1775 = vld [vmem:[%s1417] sm:$0xff]
  %1777 = vrot.lane.b32.xlu0 %v1775, 32
  %v1778 = vpop.permute.xlu0 %1777
  %v1780 = vmul.f32 %v1773, %v1778
  %1782 = vrot.lane.b32.xlu0 %v1774, 32
  %v1783 = vpop.permute.xlu0 %1782
  %v1785 = vmul.f32 %v1773, %v1783
  %1787 = vrot.lane.b32.xlu0 %v1785, 32
  %v1788 = vpop.permute.xlu0 %1787
  %v1790 = vadd.f32 %v1780, %v1788
  %v1791 = vtanh.pop %v1790
  %1793 = vrot.lane.b32.xlu0 %v1791, 32
  %v1794 = vpop.permute.xlu0 %1793
  %v1796 = vmul.f32 %v1773, %v1794
  %1798 = vrot.lane.b32.xlu0 %v1790, 96
  %v1799 = vpop.permute.xlu0 %1798
  %1801 = vst.msk [vmem:[%s1417] sm:$0xff] %vm227, %v1799
  %1803 = vrot.lane.b32.xlu0 %v1796, 64
  %v1804 = vpop.permute.xlu0 %1803
  %1806 = vst.msk [vmem:[%s1330] sm:$0xff] %vm227, %v1804
  %1807 = vst.msk [vmem:[%s55 + $0x20] sm:$0xff] %vm227, %v1804
  %v1808 = vld [vmem:[#allocation4 + $0x18] sm:$0xff]
  %v1809 = vld [vmem:[%s1330] sm:$0xff]
  %v1810 = vld [vmem:[%s1332] sm:$0xff]
  %v1811 = vld [vmem:[%s1332 + $0x8] sm:$0xff]
  %v1812 = vld [vmem:[%s1332 + $0x10] sm:$0xff]
  %v1813 = vld [vmem:[%s1332 + $0x18] sm:$0xff]
  %v1815 = vsel %vm227, %v1809, 0
  %1817 = vmatprep.subr.mxu0 0.0
  %1818 = vmatpush1.msra.mxu0 %v1810
  %1819 = vmatprep.subr.mxu0 0.0
  %1820 = vmatpush1.msra.mxu0 %v1811
  %1821 = vmatprep.subr.mxu0 0.0
  %1822 = vmatpush1.msra.mxu0 %v1812
  %1823 = vmatprep.subr.mxu0 0.0
  %1824 = vmatpush1.msra.mxu0 %v1813
  %1825 = vmatprep.subr.mxu0 0.0
  %1826 = vmatpush1.msra.mxu0 0.0
  %1827 = vmatprep.subr.mxu0 0.0
  %1828 = vmatpush1.msra.mxu0 0.0
  %1829 = vmatprep.subr.mxu0 0.0
  %1830 = vmatpush1.msra.mxu0 0.0
  %1831 = vmatprep.subr.mxu0 0.0
  %1832 = vmatpush1.msra.mxu0 0.0
  %1833 = vmatprep.subr.mxu0 0.0
  %1834 = vmatpush1.msra.mxu0 0.0
  %1835 = vmatprep.subr.mxu0 0.0
  %1836 = vmatpush1.msra.mxu0 0.0
  %1837 = vmatprep.subr.mxu0 0.0
  %1838 = vmatpush1.msra.mxu0 0.0
  %1839 = vmatprep.subr.mxu0 0.0
  %1840 = vmatpush1.msra.mxu0 0.0
  %1841 = vmatprep.subr.mxu0 0.0
  %1842 = vmatpush1.msra.mxu0 0.0
  %1843 = vmatprep.subr.mxu0 0.0
  %1844 = vmatpush1.msra.mxu0 0.0
  %1845 = vmatprep.subr.mxu0 0.0
  %1846 = vmatpush1.msra.mxu0 0.0
  %1847 = vmatprep.subr.mxu0 0.0
  %1848 = vmatpush1.msra.mxu0 0.0
  %1849 = vmatprep.subr.mxu0 0.0
  %1850 = vmatpush1.msra.mxu0 0.0
  %1851 = vmatprep.subr.mxu0 0.0
  %1852 = vmatpush1.msra.mxu0 0.0
  %1853 = vmatprep.subr.mxu0 0.0
  %1854 = vmatpush1.msra.mxu0 0.0
  %1855 = vmatprep.subr.mxu0 0.0
  %1856 = vmatpush1.msra.mxu0 0.0
  %1857 = vmatprep.subr.mxu0 0.0
  %1858 = vmatpush1.msra.mxu0 0.0
  %1859 = vmatprep.subr.mxu0 0.0
  %1860 = vmatpush1.msra.mxu0 0.0
  %1861 = vmatprep.subr.mxu0 0.0
  %1862 = vmatpush1.msra.mxu0 0.0
  %1863 = vmatprep.subr.mxu0 0.0
  %1864 = vmatpush1.msra.mxu0 0.0
  %1865 = vmatprep.subr.mxu0 0.0
  %1866 = vmatpush1.msra.mxu0 0.0
  %1867 = vmatprep.subr.mxu0 0.0
  %1868 = vmatpush1.msra.mxu0 0.0
  %1869 = vmatprep.subr.mxu0 0.0
  %1870 = vmatpush1.msra.mxu0 0.0
  %1871 = vmatprep.subr.mxu0 0.0
  %1872 = vmatpush1.msra.mxu0 0.0
  %1873 = vmatprep.subr.mxu0 0.0
  %1874 = vmatpush1.msra.mxu0 0.0
  %1875 = vmatprep.subr.mxu0 0.0
  %1876 = vmatpush1.msra.mxu0 0.0
  %1877 = vmatprep.subr.mxu0 0.0
  %1878 = vmatpush1.msra.mxu0 0.0
  %1879 = vmatprep.subr.mxu0 0.0
  %1880 = vmatpush1.msra.mxu0 0.0
  %1881 = vmatprep.mubr.f32.mxu0 0.0
  %1882 = vmatmul.mubr.f32.gmra.mrb[0].mxu0 %v1815
  %v1883 = vpop.f32.mrb[0].mxu0
  %v1884 = vadd.f32 0.0, %v1883
  %v1885 = vpop.f32.mrb[0].mxu0
  %1886 = vdwg.mxu0
  %v1887 = vadd.f32 %v1808, %v1884
  %v1888 = vsub.f32 0.0, %v1887
  %v1889 = vmul.f32 %v1888, 1.442695
  %v1890 = vpow.pop %v1889
  %v1891 = vadd.f32 %v1890, 1.0
  %v1892 = vrcp.pop %v1891
  %v1893 = vtanh.pop %v1887
  %v1894 = vld [vmem:[%s1417] sm:$0xff]
  %1896 = vrot.lane.b32.xlu0 %v1894, 32
  %v1897 = vpop.permute.xlu0 %1896
  %v1899 = vmul.f32 %v1892, %v1897
  %1901 = vrot.lane.b32.xlu0 %v1893, 32
  %v1902 = vpop.permute.xlu0 %1901
  %v1904 = vmul.f32 %v1892, %v1902
  %1906 = vrot.lane.b32.xlu0 %v1904, 32
  %v1907 = vpop.permute.xlu0 %1906
  %v1909 = vadd.f32 %v1899, %v1907
  %v1910 = vtanh.pop %v1909
  %1912 = vrot.lane.b32.xlu0 %v1910, 32
  %v1913 = vpop.permute.xlu0 %1912
  %v1915 = vmul.f32 %v1892, %v1913
  %1917 = vrot.lane.b32.xlu0 %v1909, 96
  %v1918 = vpop.permute.xlu0 %1917
  %1920 = vst.msk [vmem:[%s1417] sm:$0xff] %vm227, %v1918
  %1922 = vrot.lane.b32.xlu0 %v1915, 64
  %v1923 = vpop.permute.xlu0 %1922
  %1925 = vst.msk [vmem:[%s1330] sm:$0xff] %vm227, %v1923
  %1926 = vst.msk [vmem:[%s55 + $0x18] sm:$0xff] %vm227, %v1923
  %v1927 = vld [vmem:[#allocation4 + $0x10] sm:$0xff]
  %v1928 = vld [vmem:[%s1330] sm:$0xff]
  %v1929 = vld [vmem:[%s1332] sm:$0xff]
  %v1930 = vld [vmem:[%s1332 + $0x8] sm:$0xff]
  %v1931 = vld [vmem:[%s1332 + $0x10] sm:$0xff]
  %v1932 = vld [vmem:[%s1332 + $0x18] sm:$0xff]
  %v1934 = vsel %vm227, %v1928, 0
  %1936 = vmatprep.subr.mxu0 0.0
  %1937 = vmatpush1.msra.mxu0 %v1929
  %1938 = vmatprep.subr.mxu0 0.0
  %1939 = vmatpush1.msra.mxu0 %v1930
  %1940 = vmatprep.subr.mxu0 0.0
  %1941 = vmatpush1.msra.mxu0 %v1931
  %1942 = vmatprep.subr.mxu0 0.0
  %1943 = vmatpush1.msra.mxu0 %v1932
  %1944 = vmatprep.subr.mxu0 0.0
  %1945 = vmatpush1.msra.mxu0 0.0
  %1946 = vmatprep.subr.mxu0 0.0
  %1947 = vmatpush1.msra.mxu0 0.0
  %1948 = vmatprep.subr.mxu0 0.0
  %1949 = vmatpush1.msra.mxu0 0.0
  %1950 = vmatprep.subr.mxu0 0.0
  %1951 = vmatpush1.msra.mxu0 0.0
  %1952 = vmatprep.subr.mxu0 0.0
  %1953 = vmatpush1.msra.mxu0 0.0
  %1954 = vmatprep.subr.mxu0 0.0
  %1955 = vmatpush1.msra.mxu0 0.0
  %1956 = vmatprep.subr.mxu0 0.0
  %1957 = vmatpush1.msra.mxu0 0.0
  %1958 = vmatprep.subr.mxu0 0.0
  %1959 = vmatpush1.msra.mxu0 0.0
  %1960 = vmatprep.subr.mxu0 0.0
  %1961 = vmatpush1.msra.mxu0 0.0
  %1962 = vmatprep.subr.mxu0 0.0
  %1963 = vmatpush1.msra.mxu0 0.0
  %1964 = vmatprep.subr.mxu0 0.0
  %1965 = vmatpush1.msra.mxu0 0.0
  %1966 = vmatprep.subr.mxu0 0.0
  %1967 = vmatpush1.msra.mxu0 0.0
  %1968 = vmatprep.subr.mxu0 0.0
  %1969 = vmatpush1.msra.mxu0 0.0
  %1970 = vmatprep.subr.mxu0 0.0
  %1971 = vmatpush1.msra.mxu0 0.0
  %1972 = vmatprep.subr.mxu0 0.0
  %1973 = vmatpush1.msra.mxu0 0.0
  %1974 = vmatprep.subr.mxu0 0.0
  %1975 = vmatpush1.msra.mxu0 0.0
  %1976 = vmatprep.subr.mxu0 0.0
  %1977 = vmatpush1.msra.mxu0 0.0
  %1978 = vmatprep.subr.mxu0 0.0
  %1979 = vmatpush1.msra.mxu0 0.0
  %1980 = vmatprep.subr.mxu0 0.0
  %1981 = vmatpush1.msra.mxu0 0.0
  %1982 = vmatprep.subr.mxu0 0.0
  %1983 = vmatpush1.msra.mxu0 0.0
  %1984 = vmatprep.subr.mxu0 0.0
  %1985 = vmatpush1.msra.mxu0 0.0
  %1986 = vmatprep.subr.mxu0 0.0
  %1987 = vmatpush1.msra.mxu0 0.0
  %1988 = vmatprep.subr.mxu0 0.0
  %1989 = vmatpush1.msra.mxu0 0.0
  %1990 = vmatprep.subr.mxu0 0.0
  %1991 = vmatpush1.msra.mxu0 0.0
  %1992 = vmatprep.subr.mxu0 0.0
  %1993 = vmatpush1.msra.mxu0 0.0
  %1994 = vmatprep.subr.mxu0 0.0
  %1995 = vmatpush1.msra.mxu0 0.0
  %1996 = vmatprep.subr.mxu0 0.0
  %1997 = vmatpush1.msra.mxu0 0.0
  %1998 = vmatprep.subr.mxu0 0.0
  %1999 = vmatpush1.msra.mxu0 0.0
  %2000 = vmatprep.mubr.f32.mxu0 0.0
  %2001 = vmatmul.mubr.f32.gmra.mrb[0].mxu0 %v1934
  %v2002 = vpop.f32.mrb[0].mxu0
  %v2003 = vadd.f32 0.0, %v2002
  %v2004 = vpop.f32.mrb[0].mxu0
  %2005 = vdwg.mxu0
  %v2006 = vadd.f32 %v1927, %v2003
  %v2007 = vsub.f32 0.0, %v2006
  %v2008 = vmul.f32 %v2007, 1.442695
  %v2009 = vpow.pop %v2008
  %v2010 = vadd.f32 %v2009, 1.0
  %v2011 = vrcp.pop %v2010
  %v2012 = vtanh.pop %v2006
  %v2013 = vld [vmem:[%s1417] sm:$0xff]
  %2015 = vrot.lane.b32.xlu0 %v2013, 32
  %v2016 = vpop.permute.xlu0 %2015
  %v2018 = vmul.f32 %v2011, %v2016
  %2020 = vrot.lane.b32.xlu0 %v2012, 32
  %v2021 = vpop.permute.xlu0 %2020
  %v2023 = vmul.f32 %v2011, %v2021
  %2025 = vrot.lane.b32.xlu0 %v2023, 32
  %v2026 = vpop.permute.xlu0 %2025
  %v2028 = vadd.f32 %v2018, %v2026
  %v2029 = vtanh.pop %v2028
  %2031 = vrot.lane.b32.xlu0 %v2029, 32
  %v2032 = vpop.permute.xlu0 %2031
  %v2034 = vmul.f32 %v2011, %v2032
  %2036 = vrot.lane.b32.xlu0 %v2028, 96
  %v2037 = vpop.permute.xlu0 %2036
  %2039 = vst.msk [vmem:[%s1417] sm:$0xff] %vm227, %v2037
  %2041 = vrot.lane.b32.xlu0 %v2034, 64
  %v2042 = vpop.permute.xlu0 %2041
  %2044 = vst.msk [vmem:[%s1330] sm:$0xff] %vm227, %v2042
  %2045 = vst.msk [vmem:[%s55 + $0x10] sm:$0xff] %vm227, %v2042
  %v2046 = vld [vmem:[#allocation4 + $0x8] sm:$0xff]
  %v2047 = vld [vmem:[%s1330] sm:$0xff]
  %v2048 = vld [vmem:[%s1332] sm:$0xff]
  %v2049 = vld [vmem:[%s1332 + $0x8] sm:$0xff]
  %v2050 = vld [vmem:[%s1332 + $0x10] sm:$0xff]
  %v2051 = vld [vmem:[%s1332 + $0x18] sm:$0xff]
  %v2053 = vsel %vm227, %v2047, 0
  %2055 = vmatprep.subr.mxu0 0.0
  %2056 = vmatpush1.msra.mxu0 %v2048
  %2057 = vmatprep.subr.mxu0 0.0
  %2058 = vmatpush1.msra.mxu0 %v2049
  %2059 = vmatprep.subr.mxu0 0.0
  %2060 = vmatpush1.msra.mxu0 %v2050
  %2061 = vmatprep.subr.mxu0 0.0
  %2062 = vmatpush1.msra.mxu0 %v2051
  %2063 = vmatprep.subr.mxu0 0.0
  %2064 = vmatpush1.msra.mxu0 0.0
  %2065 = vmatprep.subr.mxu0 0.0
  %2066 = vmatpush1.msra.mxu0 0.0
  %2067 = vmatprep.subr.mxu0 0.0
  %2068 = vmatpush1.msra.mxu0 0.0
  %2069 = vmatprep.subr.mxu0 0.0
  %2070 = vmatpush1.msra.mxu0 0.0
  %2071 = vmatprep.subr.mxu0 0.0
  %2072 = vmatpush1.msra.mxu0 0.0
  %2073 = vmatprep.subr.mxu0 0.0
  %2074 = vmatpush1.msra.mxu0 0.0
  %2075 = vmatprep.subr.mxu0 0.0
  %2076 = vmatpush1.msra.mxu0 0.0
  %2077 = vmatprep.subr.mxu0 0.0
  %2078 = vmatpush1.msra.mxu0 0.0
  %2079 = vmatprep.subr.mxu0 0.0
  %2080 = vmatpush1.msra.mxu0 0.0
  %2081 = vmatprep.subr.mxu0 0.0
  %2082 = vmatpush1.msra.mxu0 0.0
  %2083 = vmatprep.subr.mxu0 0.0
  %2084 = vmatpush1.msra.mxu0 0.0
  %2085 = vmatprep.subr.mxu0 0.0
  %2086 = vmatpush1.msra.mxu0 0.0
  %2087 = vmatprep.subr.mxu0 0.0
  %2088 = vmatpush1.msra.mxu0 0.0
  %2089 = vmatprep.subr.mxu0 0.0
  %2090 = vmatpush1.msra.mxu0 0.0
  %2091 = vmatprep.subr.mxu0 0.0
  %2092 = vmatpush1.msra.mxu0 0.0
  %2093 = vmatprep.subr.mxu0 0.0
  %2094 = vmatpush1.msra.mxu0 0.0
  %2095 = vmatprep.subr.mxu0 0.0
  %2096 = vmatpush1.msra.mxu0 0.0
  %2097 = vmatprep.subr.mxu0 0.0
  %2098 = vmatpush1.msra.mxu0 0.0
  %2099 = vmatprep.subr.mxu0 0.0
  %2100 = vmatpush1.msra.mxu0 0.0
  %2101 = vmatprep.subr.mxu0 0.0
  %2102 = vmatpush1.msra.mxu0 0.0
  %2103 = vmatprep.subr.mxu0 0.0
  %2104 = vmatpush1.msra.mxu0 0.0
  %2105 = vmatprep.subr.mxu0 0.0
  %2106 = vmatpush1.msra.mxu0 0.0
  %2107 = vmatprep.subr.mxu0 0.0
  %2108 = vmatpush1.msra.mxu0 0.0
  %2109 = vmatprep.subr.mxu0 0.0
  %2110 = vmatpush1.msra.mxu0 0.0
  %2111 = vmatprep.subr.mxu0 0.0
  %2112 = vmatpush1.msra.mxu0 0.0
  %2113 = vmatprep.subr.mxu0 0.0
  %2114 = vmatpush1.msra.mxu0 0.0
  %2115 = vmatprep.subr.mxu0 0.0
  %2116 = vmatpush1.msra.mxu0 0.0
  %2117 = vmatprep.subr.mxu0 0.0
  %2118 = vmatpush1.msra.mxu0 0.0
  %2119 = vmatprep.mubr.f32.mxu0 0.0
  %2120 = vmatmul.mubr.f32.gmra.mrb[0].mxu0 %v2053
  %v2121 = vpop.f32.mrb[0].mxu0
  %v2122 = vadd.f32 0.0, %v2121
  %v2123 = vpop.f32.mrb[0].mxu0
  %2124 = vdwg.mxu0
  %v2125 = vadd.f32 %v2046, %v2122
  %v2126 = vsub.f32 0.0, %v2125
  %v2127 = vmul.f32 %v2126, 1.442695
  %v2128 = vpow.pop %v2127
  %v2129 = vadd.f32 %v2128, 1.0
  %v2130 = vrcp.pop %v2129
  %v2131 = vtanh.pop %v2125
  %v2132 = vld [vmem:[%s1417] sm:$0xff]
  %2134 = vrot.lane.b32.xlu0 %v2132, 32
  %v2135 = vpop.permute.xlu0 %2134
  %v2137 = vmul.f32 %v2130, %v2135
  %2139 = vrot.lane.b32.xlu0 %v2131, 32
  %v2140 = vpop.permute.xlu0 %2139
  %v2142 = vmul.f32 %v2130, %v2140
  %2144 = vrot.lane.b32.xlu0 %v2142, 32
  %v2145 = vpop.permute.xlu0 %2144
  %v2147 = vadd.f32 %v2137, %v2145
  %v2148 = vtanh.pop %v2147
  %2150 = vrot.lane.b32.xlu0 %v2148, 32
  %v2151 = vpop.permute.xlu0 %2150
  %v2153 = vmul.f32 %v2130, %v2151
  %2155 = vrot.lane.b32.xlu0 %v2147, 96
  %v2156 = vpop.permute.xlu0 %2155
  %2158 = vst.msk [vmem:[%s1417] sm:$0xff] %vm227, %v2156
  %2160 = vrot.lane.b32.xlu0 %v2153, 64
  %v2161 = vpop.permute.xlu0 %2160
  %2163 = vst.msk [vmem:[%s1330] sm:$0xff] %vm227, %v2161
  %2164 = vst.msk [vmem:[%s55 + $0x8] sm:$0xff] %vm227, %v2161
  %v2165 = vld [vmem:[#allocation4] sm:$0xff]
  %v2166 = vld [vmem:[%s1330] sm:$0xff]
  %v2167 = vld [vmem:[%s1332] sm:$0xff]
  %v2168 = vld [vmem:[%s1332 + $0x8] sm:$0xff]
  %v2169 = vld [vmem:[%s1332 + $0x10] sm:$0xff]
  %v2170 = vld [vmem:[%s1332 + $0x18] sm:$0xff]
  %v2172 = vsel %vm227, %v2166, 0
  %2174 = vmatprep.subr.mxu0 0.0
  %2175 = vmatpush1.msra.mxu0 %v2167
  %2176 = vmatprep.subr.mxu0 0.0
  %2177 = vmatpush1.msra.mxu0 %v2168
  %2178 = vmatprep.subr.mxu0 0.0
  %2179 = vmatpush1.msra.mxu0 %v2169
  %2180 = vmatprep.subr.mxu0 0.0
  %2181 = vmatpush1.msra.mxu0 %v2170
  %2182 = vmatprep.subr.mxu0 0.0
  %2183 = vmatpush1.msra.mxu0 0.0
  %2184 = vmatprep.subr.mxu0 0.0
  %2185 = vmatpush1.msra.mxu0 0.0
  %2186 = vmatprep.subr.mxu0 0.0
  %2187 = vmatpush1.msra.mxu0 0.0
  %2188 = vmatprep.subr.mxu0 0.0
  %2189 = vmatpush1.msra.mxu0 0.0
  %2190 = vmatprep.subr.mxu0 0.0
  %2191 = vmatpush1.msra.mxu0 0.0
  %2192 = vmatprep.subr.mxu0 0.0
  %2193 = vmatpush1.msra.mxu0 0.0
  %2194 = vmatprep.subr.mxu0 0.0
  %2195 = vmatpush1.msra.mxu0 0.0
  %2196 = vmatprep.subr.mxu0 0.0
  %2197 = vmatpush1.msra.mxu0 0.0
  %2198 = vmatprep.subr.mxu0 0.0
  %2199 = vmatpush1.msra.mxu0 0.0
  %2200 = vmatprep.subr.mxu0 0.0
  %2201 = vmatpush1.msra.mxu0 0.0
  %2202 = vmatprep.subr.mxu0 0.0
  %2203 = vmatpush1.msra.mxu0 0.0
  %2204 = vmatprep.subr.mxu0 0.0
  %2205 = vmatpush1.msra.mxu0 0.0
  %2206 = vmatprep.subr.mxu0 0.0
  %2207 = vmatpush1.msra.mxu0 0.0
  %2208 = vmatprep.subr.mxu0 0.0
  %2209 = vmatpush1.msra.mxu0 0.0
  %2210 = vmatprep.subr.mxu0 0.0
  %2211 = vmatpush1.msra.mxu0 0.0
  %2212 = vmatprep.subr.mxu0 0.0
  %2213 = vmatpush1.msra.mxu0 0.0
  %2214 = vmatprep.subr.mxu0 0.0
  %2215 = vmatpush1.msra.mxu0 0.0
  %2216 = vmatprep.subr.mxu0 0.0
  %2217 = vmatpush1.msra.mxu0 0.0
  %2218 = vmatprep.subr.mxu0 0.0
  %2219 = vmatpush1.msra.mxu0 0.0
  %2220 = vmatprep.subr.mxu0 0.0
  %2221 = vmatpush1.msra.mxu0 0.0
  %2222 = vmatprep.subr.mxu0 0.0
  %2223 = vmatpush1.msra.mxu0 0.0
  %2224 = vmatprep.subr.mxu0 0.0
  %2225 = vmatpush1.msra.mxu0 0.0
  %2226 = vmatprep.subr.mxu0 0.0
  %2227 = vmatpush1.msra.mxu0 0.0
  %2228 = vmatprep.subr.mxu0 0.0
  %2229 = vmatpush1.msra.mxu0 0.0
  %2230 = vmatprep.subr.mxu0 0.0
  %2231 = vmatpush1.msra.mxu0 0.0
  %2232 = vmatprep.subr.mxu0 0.0
  %2233 = vmatpush1.msra.mxu0 0.0
  %2234 = vmatprep.subr.mxu0 0.0
  %2235 = vmatpush1.msra.mxu0 0.0
  %2236 = vmatprep.subr.mxu0 0.0
  %2237 = vmatpush1.msra.mxu0 0.0
  %2238 = vmatprep.mubr.f32.mxu0 0.0
  %2239 = vmatmul.mubr.f32.gmra.mrb[0].mxu0 %v2172
  %v2240 = vpop.f32.mrb[0].mxu0
  %v2241 = vadd.f32 0.0, %v2240
  %v2242 = vpop.f32.mrb[0].mxu0
  %2243 = vdwg.mxu0
  %v2244 = vadd.f32 %v2165, %v2241
  %v2245 = vsub.f32 0.0, %v2244
  %v2246 = vmul.f32 %v2245, 1.442695
  %v2247 = vpow.pop %v2246
  %v2248 = vadd.f32 %v2247, 1.0
  %v2249 = vrcp.pop %v2248
  %v2250 = vtanh.pop %v2244
  %v2251 = vld [vmem:[%s1417] sm:$0xff]
  %2253 = vrot.lane.b32.xlu0 %v2251, 32
  %v2254 = vpop.permute.xlu0 %2253
  %v2256 = vmul.f32 %v2249, %v2254
  %2258 = vrot.lane.b32.xlu0 %v2250, 32
  %v2259 = vpop.permute.xlu0 %2258
  %v2261 = vmul.f32 %v2249, %v2259
  %2263 = vrot.lane.b32.xlu0 %v2261, 32
  %v2264 = vpop.permute.xlu0 %2263
  %v2266 = vadd.f32 %v2256, %v2264
  %v2267 = vtanh.pop %v2266
  %2269 = vrot.lane.b32.xlu0 %v2267, 32
  %v2270 = vpop.permute.xlu0 %2269
  %v2272 = vmul.f32 %v2249, %v2270
  %2274 = vrot.lane.b32.xlu0 %v2266, 96
  %v2275 = vpop.permute.xlu0 %2274
  %2277 = vst.msk [vmem:[%s1417] sm:$0xff] %vm227, %v2275
  %2279 = vrot.lane.b32.xlu0 %v2272, 64
  %v2280 = vpop.permute.xlu0 %2279
  %2282 = vst.msk [vmem:[%s1330] sm:$0xff] %vm227, %v2280
  %2283 = vst.msk [vmem:[%s55] sm:$0xff] %vm227, %v2280
  %s2284 = ssub.s32 0, 0
  %s2285 = smul.u32 8, %s2284
  %p2286 = scmp.lt.s32.totalorder %s2285, 7
  %s2287 = scalar_select %p2286, %s2285, 7
  %s2288 = smul.addr %s2287, 8
  %s2289 = scalar_lea.vmem %s6, %s2288
  // Predicated region
  $region26: #{tpu_custom_call.1} parent=0 // pred_check
    _
  $region27: #{tpu_custom_call.1} parent=0 // pred_check_branch
    %2291 = sbr.rel (0) target = $region29
  $region28: #{tpu_custom_call.1} parent=0 // pred_region
    _
  $region29: #{tpu_custom_call.1} parent=0 // pred_fallthru
    _
  // Predicated region
  $region30: #{tpu_custom_call.1} parent=0 // pred_check
    _
  $region31: #{tpu_custom_call.1} parent=0 // pred_check_branch
    %2293 = sbr.rel (0) target = $region33
  $region32: #{tpu_custom_call.1} parent=0 // pred_region
    %s2294 = ssub.s32 0, 0
    %s2295 = smul.u32 8, %s2294
  $region33: #{tpu_custom_call.1} parent=0 // pred_fallthru
    _
  // Predicated region
  $region34: #{tpu_custom_call.1} parent=0 // pred_check
    _
  $region35: #{tpu_custom_call.1} parent=0 // pred_check_branch
    %2297 = sbr.rel (0) target = $region37
  $region36: #{tpu_custom_call.1} parent=0 // pred_region
    _
  $region37: #{tpu_custom_call.1} parent=0 // pred_fallthru
    _
  // Predicated region
  $region38: #{tpu_custom_call.1} parent=0 // pred_check
    _
  $region39: #{tpu_custom_call.1} parent=0 // pred_check_branch
    %2299 = sbr.rel (0) target = $region41
  $region40: #{tpu_custom_call.1} parent=0 // pred_region
    %s2300 = ssub.s32 0, 0
    %s2301 = smul.u32 8, %s2300
    %p2302 = scmp.lt.s32.totalorder %s2301, 7
    %s2303 = scalar_select %p2302, %s2301, 7
    %s2304 = smul.addr %s2303, 8
    %s2305 = scalar_lea.vmem %s6, %s2304
  $region41: #{tpu_custom_call.1} parent=0 // pred_fallthru
    _

</llo_original>
